<compile_context>
chip_gen: v6e
topology: v6e:2x2x1
jax: 0.10.0
libtpu: 0.0.40
codegen_flags: <defaults>
</compile_context>

<pallas_src>
import functools

import numpy as np
import jax
import jax.numpy as jnp
from jax.experimental import pallas as pl
from jax.experimental.pallas import tpu as pltpu


# --------------------------------------------------------------------------- #
# Fused per-sample kernel (grid over batch).
#   x_ref     : (1, C, S)    input features (S = D*H*W, row-major d,h,w)
#   mask_ref  : (27, S)      precomputed per-tap boundary masks (constant index)
#   w1_ref    : (C, 27*C)    conv3x3x3 weights packed [c_out, tap*C + c_in]
#   b1_ref    : (C, 1)       conv3x3x3 bias
#   w2_ref    : (C, 1)       conv1x1x1 weight as a column
#   scal_ref  : (3,) SMEM    [conv2 bias, GroupNorm(1,1) gamma, beta]
#   fc1_ref   : (L, M)       classifier Linear1 weight^T  (L = C*S)
#   fc1b_ref  : (1, M)
#   gnw_ref   : (1, M)       GroupNorm(32, M) gamma
#   gnb_ref   : (1, M)       GroupNorm(32, M) beta
#   A_ref     : (M, G)       group indicator / G-size    (precomputed, constant index)
#   AT_ref    : (G, M)       group indicator transpose   (precomputed, constant index)
#   fc2_ref   : (M, K)       classifier Linear2 weight^T
#   fc2b_ref  : (1, K)
# outputs:
#   score_ref    : (1, 1, S)   pred_score (flattened spatial)
#   weighted_ref : (1, 1, L)   img_feat_weighted, C-major flattened (lane dense)
#   prob_ref     : (1, 1, K)   class_prob
# scratch:
#   taps_ref     : (27*C, S)   stacked masked conv taps
# --------------------------------------------------------------------------- #
def fused_forward_kernel(x_ref, mask_ref, w1_ref, b1_ref, w2_ref, scal_ref,
                         fc1_ref, fc1b_ref, gnw_ref, gnb_ref, A_ref, AT_ref,
                         fc2_ref, fc2b_ref,
                         score_ref, weighted_ref, prob_ref,
                         taps_ref,
                         *, tap_offsets):
    C, S = x_ref.shape[1], x_ref.shape[2]

    x = x_ref[0]                                                  # (C, S)

    # ---- LayerNorm([C, D, H, W], elementwise_affine=False), eps=1e-5.
    #      Shared by score_pred_net's first layer and self.norm_feature.
    mu = jnp.mean(x, keepdims=True)                               # (1, 1)
    var = jnp.mean(jnp.square(x - mu), keepdims=True)
    xn = (x - mu) * jax.lax.rsqrt(var + 1e-5)                     # (C, S)

    # ---- Conv3d(C->C, k=3, pad=1) as ONE 27*C-deep MXU contraction.
    # tap t = xn rolled by -off_t along the flattened spatial axis (XLU), with
    # circularly-wrapped / out-of-box positions zeroed by the precomputed mask.
    for t, off in enumerate(tap_offsets):
        if off == 0:
            tap = xn                                              # center tap, mask == 1
        else:
            tap = pltpu.roll(xn, shift=(-off) % S, axis=1) * mask_ref[t:t + 1, :]
        taps_ref[pl.ds(t * C, C), :] = tap
    h1 = jnp.dot(w1_ref[...], taps_ref[...],
                 preferred_element_type=jnp.float32)              # (C, S), depth 27*C
    h1 = jnp.maximum(h1 + b1_ref[...], 0.0)                       # ReLU

    # ---- Conv3d(C->1, k=1) on VPU+XLU (no MXU round-trip)
    #      + GroupNorm(1 group, 1 ch, eps=1e-6) + Sigmoid.
    s = jnp.sum(h1 * w2_ref[...], axis=0, keepdims=True) + scal_ref[0]   # (1, S)
    smu = jnp.mean(s, keepdims=True)
    svar = jnp.mean(jnp.square(s - smu), keepdims=True)
    s = (s - smu) * jax.lax.rsqrt(svar + 1e-6)
    score = jax.nn.sigmoid(s * scal_ref[1] + scal_ref[2])         # (1, S)
    score_ref[0] = score

    # ---- img_feat_weighted = img_feat_norm * pred_score (broadcast over C).
    # Flatten C-major (matches PyTorch .view(B, -1) on NCDHW) once; the lane-dense
    # (1, C*S) slab is reused both as the output store and as the fc1 operand.
    weighted = xn * score                                         # (C, S)
    wflat = jnp.concatenate([weighted[c:c + 1, :] for c in range(C)], axis=1)  # (1, L)
    weighted_ref[0] = wflat

    # ---- classifier: Linear(L->M) -> GroupNorm(32, M, eps=1e-6) -> ReLU
    #                  -> Dropout(eval identity) -> Linear(M->K) -> softmax
    h = jnp.dot(wflat, fc1_ref[...],
                preferred_element_type=jnp.float32) + fc1b_ref[...]          # (1, M)

    # GroupNorm(num_groups, M) via precomputed group-indicator matmuls
    # (A is pre-scaled by 1/group_size, so h @ A gives group means directly).
    gmean = jnp.dot(h, A_ref[...], preferred_element_type=jnp.float32)       # (1, G)
    mean = jnp.dot(gmean, AT_ref[...], preferred_element_type=jnp.float32)   # (1, M)
    gvar = jnp.dot(jnp.square(h - mean), A_ref[...],
                   preferred_element_type=jnp.float32)
    varg = jnp.dot(gvar, AT_ref[...], preferred_element_type=jnp.float32)
    h = (h - mean) * jax.lax.rsqrt(varg + 1e-6)
    h = jnp.maximum(h * gnw_ref[...] + gnb_ref[...], 0.0)
    # TODO(synk): nn.Dropout(0.2) treated as identity (eval mode); train-mode RNG mask omitted.

    logits = jnp.dot(h, fc2_ref[...],
                     preferred_element_type=jnp.float32) + fc2b_ref[...]     # (1, K)
    lmax = jnp.max(logits, axis=-1, keepdims=True)
    e = jnp.exp(logits - lmax)
    prob_ref[0] = e / jnp.sum(e, axis=-1, keepdims=True)


# --------------------------------------------------------------------------- #
# Static tables (built once at trace time): conv tap offsets, the (27, S) per-tap
# boundary mask, and the GroupNorm(32) indicator matrices.
# --------------------------------------------------------------------------- #
def _build_static_tables(D, H, W, interm, num_groups):
    S = D * H * W
    HW = H * W
    d = np.arange(S) // HW
    h = (np.arange(S) // W) % H
    w = np.arange(S) % W
    offsets, masks = [], []
    for kd in range(3):
        for kh in range(3):
            for kw in range(3):
                dd, dh, dw = kd - 1, kh - 1, kw - 1
                offsets.append(dd * HW + dh * W + dw)
                valid = ((d + dd >= 0) & (d + dd < D) &
                         (h + dh >= 0) & (h + dh < H) &
                         (w + dw >= 0) & (w + dw < W))
                masks.append(valid.astype(np.float32))
    mask27 = jnp.asarray(np.stack(masks, axis=0))                 # (27, S)

    gsz = interm // num_groups
    ch = np.arange(interm)
    A = (ch[:, None] // gsz == np.arange(num_groups)[None, :]).astype(np.float32) / gsz
    AT = (np.arange(num_groups)[:, None] == (ch[None, :] // gsz)).astype(np.float32)
    return tuple(offsets), mask27, jnp.asarray(A), jnp.asarray(AT)


# --------------------------------------------------------------------------- #
# Forward wrapper: one fused pallas_call + a single broadcast for pred_vis.
# --------------------------------------------------------------------------- #
def socre_net_forward(x, params, *, num_groups, patch_size, vis_dtype=jnp.float32):
    B, C, D, H, W = x.shape
    S = D * H * W
    L, M = params["fc1_wt"].shape
    K = params["fc2_wt"].shape[1]
    assert L == C * S and M % num_groups == 0

    tap_offsets, mask27, A, AT = _build_static_tables(D, H, W, M, num_groups)
    x_flat = x.reshape(B, C, S)

    kernel = functools.partial(fused_forward_kernel, tap_offsets=tap_offsets)

    score, wflat, prob = pl.pallas_call(
        kernel,
        out_shape=(
            jax.ShapeDtypeStruct((B, 1, S), jnp.float32),   # pred_score (flat spatial)
            jax.ShapeDtypeStruct((B, 1, L), jnp.float32),   # img_feat_weighted (lane dense)
            jax.ShapeDtypeStruct((B, 1, K), jnp.float32),   # class_prob
        ),
        grid=(B,),
        in_specs=[
            pl.BlockSpec((1, C, S), lambda b: (b, 0, 0)),            # x (per-sample block)
            pl.BlockSpec((27, S), lambda b: (0, 0)),                 # tap boundary masks
            pl.BlockSpec((C, 27 * C), lambda b: (0, 0)),             # conv3x3x3 packed W
            pl.BlockSpec((C, 1), lambda b: (0, 0)),                  # conv3x3x3 bias
            pl.BlockSpec((C, 1), lambda b: (0, 0)),                  # conv1x1x1 weight col
            pl.BlockSpec(memory_space=pltpu.MemorySpace.SMEM),       # scalars in SMEM
            pl.BlockSpec((L, M), lambda b: (0, 0)),                  # fc1 weight^T
            pl.BlockSpec((1, M), lambda b: (0, 0)),                  # fc1 bias
            pl.BlockSpec((1, M), lambda b: (0, 0)),                  # GN(32,M) gamma
            pl.BlockSpec((1, M), lambda b: (0, 0)),                  # GN(32,M) beta
            pl.BlockSpec((M, num_groups), lambda b: (0, 0)),         # GN indicator A/gsz
            pl.BlockSpec((num_groups, M), lambda b: (0, 0)),         # GN indicator A^T
            pl.BlockSpec((M, K), lambda b: (0, 0)),                  # fc2 weight^T
            pl.BlockSpec((1, K), lambda b: (0, 0)),                  # fc2 bias
        ],
        out_specs=(
            pl.BlockSpec((1, 1, S), lambda b: (b, 0, 0)),
            pl.BlockSpec((1, 1, L), lambda b: (b, 0, 0)),
            pl.BlockSpec((1, 1, K), lambda b: (b, 0, 0)),
        ),
        scratch_shapes=[pltpu.VMEM((27 * C, S), jnp.float32)],       # stacked conv taps
        compiler_params=pltpu.CompilerParams(
            dimension_semantics=("parallel",)),                      # v7x: one sample / TC
    )(x_flat, mask27, params["conv1_wt"], params["conv1_b"], params["conv2_wt"],
      params["scalars"], params["fc1_wt"], params["fc1_b"],
      params["gn_w"], params["gn_b"], A, AT, params["fc2_wt"], params["fc2_b"])

    pred_score = score.reshape(B, 1, D, H, W)
    img_feat_weighted = wflat.reshape(B, C, D, H, W)    # lane-dense slab -> NCDHW for free
    class_prob = prob.reshape(B, K)

    # pred_vis = F.interpolate(pred_score, scale_factor=patch_size, mode='nearest'):
    # one broadcast + reshape -> one fused HBM write. This write dominates total HBM
    # traffic; pass vis_dtype=jnp.bfloat16 to halve it (default f32 matches PyTorch).
    P = patch_size
    pred_vis = jnp.broadcast_to(
        pred_score.astype(vis_dtype)[:, :, :, None, :, None, :, None],
        (B, 1, D, P, H, P, W, P)).reshape(B, 1, D * P, H * P, W * P)

    # PyTorch returns (pred_score, pred_vis, img_feat_weighted) when label is None;
    # class_prob is computed in the forward so we also expose it.
    return pred_score, pred_vis, img_feat_weighted, class_prob


# --------------------------------------------------------------------------- #
# Deterministic parameter init in PyTorch layouts + packing into kernel layouts.
# --------------------------------------------------------------------------- #
def init_raw_params(key, C, interm, n_classes, hwd=8):
    S = hwd ** 3
    L = C * S
    ks = jax.random.split(key, 8)
    return dict(
        conv1_w=jax.random.normal(ks[0], (C, C, 3, 3, 3), jnp.float32) * 0.05,
        conv1_b=jax.random.normal(ks[1], (C,), jnp.float32) * 0.05,
        conv2_w=jax.random.normal(ks[2], (1, C, 1, 1, 1), jnp.float32) * 0.05,
        conv2_b=jax.random.normal(ks[3], (1,), jnp.float32) * 0.05,
        gn1_w=jnp.ones((1,), jnp.float32),            # GroupNorm(1,1) affine init
        gn1_b=jnp.zeros((1,), jnp.float32),
        fc1_w=jax.random.normal(ks[4], (interm, L), jnp.float32) * 0.02,
        fc1_b=jax.random.normal(ks[5], (interm,), jnp.float32) * 0.02,
        gn_w=jnp.ones((interm,), jnp.float32),        # GroupNorm(32, interm) affine init
        gn_b=jnp.zeros((interm,), jnp.float32),
        fc2_w=jax.random.normal(ks[6], (n_classes, interm), jnp.float32) * 0.02,
        fc2_b=jax.random.normal(ks[7], (n_classes,), jnp.float32) * 0.02,
    )


def pack_params(raw):
    C = raw["conv1_w"].shape[0]
    interm = raw["fc1_w"].shape[0]
    n_classes = raw["fc2_w"].shape[0]
    return dict(
        # conv1 packed (c_out, tap*C + c_in), tap = kd*9 + kh*3 + kw
        conv1_wt=jnp.transpose(raw["conv1_w"], (0, 2, 3, 4, 1)).reshape(C, 27 * C),
        conv1_b=raw["conv1_b"].reshape(C, 1),
        conv2_wt=raw["conv2_w"].reshape(C, 1),
        # SMEM scalars: [conv2 bias, GroupNorm(1,1) gamma, GroupNorm(1,1) beta]
        scalars=jnp.concatenate([raw["conv2_b"].reshape(1),
                                 raw["gn1_w"].reshape(1),
                                 raw["gn1_b"].reshape(1)]),
        fc1_wt=raw["fc1_w"].T,                              # (L, M)
        fc1_b=raw["fc1_b"].reshape(1, interm),
        gn_w=raw["gn_w"].reshape(1, interm),
        gn_b=raw["gn_b"].reshape(1, interm),
        fc2_wt=raw["fc2_w"].T,                              # (M, K)
        fc2_b=raw["fc2_b"].reshape(1, n_classes),
    )


# --------------------------------------------------------------------------- #
# Pure-JAX reference of the PyTorch forward (for numerical validation).
# --------------------------------------------------------------------------- #
def reference_forward(x, raw, num_groups):
    B, C, D, H, W = x.shape
    hp = jax.lax.Precision.HIGHEST
    mu = jnp.mean(x, axis=(1, 2, 3, 4), keepdims=True)
    var = jnp.mean(jnp.square(x - mu), axis=(1, 2, 3, 4), keepdims=True)
    xn = (x - mu) / jnp.sqrt(var + 1e-5)
    y = jax.lax.conv_general_dilated(
        xn, raw["conv1_w"], window_strides=(1, 1, 1),
        padding=((1, 1), (1, 1), (1, 1)),
        dimension_numbers=("NCDHW", "OIDHW", "NCDHW"), precision=hp)
    y = jax.nn.relu(y + raw["conv1_b"].reshape(1, C, 1, 1, 1))
    s = jnp.einsum("oc,bcdhw->bodhw", raw["conv2_w"].reshape(1, C), y, precision=hp)
    s = s + raw["conv2_b"].reshape(1, 1, 1, 1, 1)
    smu = jnp.mean(s, axis=(1, 2, 3, 4), keepdims=True)
    svar = jnp.mean(jnp.square(s - smu), axis=(1, 2, 3, 4), keepdims=True)
    s = (s - smu) / jnp.sqrt(svar + 1e-6)
    s = s * raw["gn1_w"].reshape(1, 1, 1, 1, 1) + raw["gn1_b"].reshape(1, 1, 1, 1, 1)
    pred_score = jax.nn.sigmoid(s)
    img_feat_weighted = xn * pred_score
    flat = img_feat_weighted.reshape(B, -1)
    h = jnp.dot(flat, raw["fc1_w"].T, precision=hp) + raw["fc1_b"]
    M = h.shape[1]
    gsz = M // num_groups
    hg = h.reshape(B, num_groups, gsz)
    gm = jnp.mean(hg, axis=-1, keepdims=True)
    gv = jnp.mean(jnp.square(hg - gm), axis=-1, keepdims=True)
    h = ((hg - gm) / jnp.sqrt(gv + 1e-6)).reshape(B, M) * raw["gn_w"] + raw["gn_b"]
    h = jax.nn.relu(h)
    logits = jnp.dot(h, raw["fc2_w"].T, precision=hp) + raw["fc2_b"]
    class_prob = jax.nn.softmax(logits, axis=-1)
    return pred_score, img_feat_weighted, class_prob


if __name__ == "__main__":
    B, C = 2, 4                  # batch, input_dim
    hwd = 8                      # fixed by module (self.hwd = 8)
    n_classes = 5
    interm = 64                  # interm_linear_dim (divisible by 32 groups)
    patch_size = 16              # patch_size * hwd == 128 assert in the module
    num_groups = 32

    key = jax.random.PRNGKey(0)
    k_in, k_par = jax.random.split(key)
    x = jax.random.normal(k_in, (B, C, hwd, hwd, hwd), jnp.float32)
    raw = init_raw_params(k_par, C, interm, n_classes, hwd=hwd)
    params = pack_params(raw)

    fwd = jax.jit(functools.partial(socre_net_forward,
                                    num_groups=num_groups, patch_size=patch_size))
    pred_score, pred_vis, img_feat_weighted, class_prob = jax.block_until_ready(
        fwd(x, params))

    # ---- shape / sanity checks
    assert pred_score.shape == (B, 1, hwd, hwd, hwd)
    assert pred_vis.shape == (B, 1, 128, 128, 128)
    assert img_feat_weighted.shape == (B, C, hwd, hwd, hwd)
    assert class_prob.shape == (B, n_classes)
    assert bool(jnp.all(jnp.isfinite(pred_score)))
    assert bool(jnp.all((pred_score > 0.0) & (pred_score < 1.0)))
    assert bool(jnp.allclose(jnp.sum(class_prob, axis=-1), 1.0, atol=1e-5))
    # nearest-neighbour upsample consistency
    assert bool(jnp.allclose(
        pred_vis[:, :, ::patch_size, ::patch_size, ::patch_size], pred_score))

    # ---- numerical check against a pure-JAX reference of the PyTorch forward
    r_score, r_weighted, r_prob = reference_forward(x, raw, num_groups)
    assert bool(jnp.allclose(pred_score, r_score, atol=2e-3, rtol=2e-3))
    assert bool(jnp.allclose(img_feat_weighted, r_weighted, atol=2e-3, rtol=2e-3))
    assert bool(jnp.allclose(class_prob, r_prob, atol=5e-2, rtol=5e-2))
    print("KERNEL_OK")
</pallas_src>

<mosaic_0001>
module attributes {stable_mosaic.version = 11 : i64} {
  func.func @fused_forward_kernel(%arg0: i32, %arg1: memref<1x4x512xf32, #tpu.memory_space<vmem>>, %arg2: memref<27x512xf32, #tpu.memory_space<vmem>>, %arg3: memref<4x108xf32, #tpu.memory_space<vmem>>, %arg4: memref<4x1xf32, #tpu.memory_space<vmem>>, %arg5: memref<4x1xf32, #tpu.memory_space<vmem>>, %arg6: memref<3xf32, #tpu.memory_space<smem>>, %arg7: memref<2048x64xf32, #tpu.memory_space<vmem>>, %arg8: memref<1x64xf32, #tpu.memory_space<vmem>>, %arg9: memref<1x64xf32, #tpu.memory_space<vmem>>, %arg10: memref<1x64xf32, #tpu.memory_space<vmem>>, %arg11: memref<64x32xf32, #tpu.memory_space<vmem>>, %arg12: memref<32x64xf32, #tpu.memory_space<vmem>>, %arg13: memref<64x5xf32, #tpu.memory_space<vmem>>, %arg14: memref<1x5xf32, #tpu.memory_space<vmem>>, %arg15: memref<1x1x512xf32, #tpu.memory_space<vmem>>, %arg16: memref<1x1x2048xf32, #tpu.memory_space<vmem>>, %arg17: memref<1x1x5xf32, #tpu.memory_space<vmem>>, %arg18: memref<108x512xf32, #tpu.memory_space<vmem>>) attributes {dimension_semantics = [#tpu.dimension_semantics<parallel>], iteration_bounds = array<i64: 2>, scalar_prefetch = 0 : i64, scratch_operands = 1 : i64, tpu.core_type = #tpu.core_type<tc>, window_params = [{transform_indices = @transform_0, window_bounds = array<i64: 1, 4, 512>}, {pipeline_mode = #tpu.pipeline_mode<synchronous>, transform_indices = @transform_1, window_bounds = array<i64: 27, 512>}, {pipeline_mode = #tpu.pipeline_mode<synchronous>, transform_indices = @transform_2, window_bounds = array<i64: 4, 108>}, {pipeline_mode = #tpu.pipeline_mode<synchronous>, transform_indices = @transform_3, window_bounds = array<i64: 4, 1>}, {pipeline_mode = #tpu.pipeline_mode<synchronous>, transform_indices = @transform_4, window_bounds = array<i64: 4, 1>}, {transform_indices = @transform_5, window_bounds = array<i64: 3>}, {pipeline_mode = #tpu.pipeline_mode<synchronous>, transform_indices = @transform_6, window_bounds = array<i64: 2048, 64>}, {pipeline_mode = #tpu.pipeline_mode<synchronous>, transform_indices = @transform_7, window_bounds = array<i64: 1, 64>}, {pipeline_mode = #tpu.pipeline_mode<synchronous>, transform_indices = @transform_8, window_bounds = array<i64: 1, 64>}, {pipeline_mode = #tpu.pipeline_mode<synchronous>, transform_indices = @transform_9, window_bounds = array<i64: 1, 64>}, {pipeline_mode = #tpu.pipeline_mode<synchronous>, transform_indices = @transform_10, window_bounds = array<i64: 64, 32>}, {pipeline_mode = #tpu.pipeline_mode<synchronous>, transform_indices = @transform_11, window_bounds = array<i64: 32, 64>}, {pipeline_mode = #tpu.pipeline_mode<synchronous>, transform_indices = @transform_12, window_bounds = array<i64: 64, 5>}, {pipeline_mode = #tpu.pipeline_mode<synchronous>, transform_indices = @transform_13, window_bounds = array<i64: 1, 5>}, {transform_indices = @transform_14, window_bounds = array<i64: 1, 1, 512>}, {transform_indices = @transform_15, window_bounds = array<i64: 1, 1, 2048>}, {transform_indices = @transform_16, window_bounds = array<i64: 1, 1, 5>}]} {
    %c0 = arith.constant 0 : index
    %c0_0 = arith.constant 0 : index
    %c0_1 = arith.constant 0 : index
    %0 = vector.load %arg1[%c0, %c0_0, %c0_1] : memref<1x4x512xf32, #tpu.memory_space<vmem>>, vector<1x4x512xf32>
    %1 = vector.shape_cast %0 : vector<1x4x512xf32> to vector<4x512xf32>
    %2 = vector.shape_cast %1 : vector<4x512xf32> to vector<1x4x512xf32>
    %cst = arith.constant dense<0.000000e+00> : vector<1xf32>
    %3 = vector.multi_reduction <add>, %2, %cst [1, 2] : vector<1x4x512xf32> to vector<1xf32>
    %4 = vector.shape_cast %3 : vector<1xf32> to vector<1x1x1xf32>
    %5 = vector.extract %4[0, 0, 0] : f32 from vector<1x1x1xf32>
    %6 = vector.broadcast %5 : f32 to vector<1x1xf32>
    %cst_2 = arith.constant 2.048000e+03 : f32
    %7 = vector.broadcast %cst_2 : f32 to vector<1x1xf32>
    %8 = arith.divf %6, %7 : vector<1x1xf32>
    %9 = vector.broadcast %8 : vector<1x1xf32> to vector<4x512xf32>
    %10 = arith.subf %1, %9 : vector<4x512xf32>
    %11 = arith.mulf %10, %10 : vector<4x512xf32>
    %12 = vector.shape_cast %11 : vector<4x512xf32> to vector<1x4x512xf32>
    %cst_3 = arith.constant dense<0.000000e+00> : vector<1xf32>
    %13 = vector.multi_reduction <add>, %12, %cst_3 [1, 2] : vector<1x4x512xf32> to vector<1xf32>
    %14 = vector.shape_cast %13 : vector<1xf32> to vector<1x1x1xf32>
    %15 = vector.extract %14[0, 0, 0] : f32 from vector<1x1x1xf32>
    %16 = vector.broadcast %15 : f32 to vector<1x1xf32>
    %cst_4 = arith.constant 2.048000e+03 : f32
    %17 = vector.broadcast %cst_4 : f32 to vector<1x1xf32>
    %18 = arith.divf %16, %17 : vector<1x1xf32>
    %19 = vector.broadcast %8 : vector<1x1xf32> to vector<4x512xf32>
    %20 = arith.subf %1, %19 : vector<4x512xf32>
    %cst_5 = arith.constant 9.99999974E-6 : f32
    %21 = vector.broadcast %cst_5 : f32 to vector<1x1xf32>
    %22 = arith.addf %18, %21 : vector<1x1xf32>
    %23 = math.rsqrt %22 : vector<1x1xf32>
    %24 = vector.broadcast %23 : vector<1x1xf32> to vector<4x512xf32>
    %25 = arith.mulf %20, %24 : vector<4x512xf32>
    %c73_i32 = arith.constant 73 : i32
    %26 = tpu.dynamic_rotate %25 by %c73_i32 dim 1 : vector<4x512xf32>, i32 -> vector<4x512xf32>
    %c0_6 = arith.constant 0 : index
    %c0_7 = arith.constant 0 : index
    %27 = vector.load %arg2[%c0_6, %c0_7] : memref<27x512xf32, #tpu.memory_space<vmem>>, vector<1x512xf32>
    %28 = vector.broadcast %27 : vector<1x512xf32> to vector<4x512xf32>
    %29 = arith.mulf %26, %28 : vector<4x512xf32>
    %c0_8 = arith.constant 0 : index
    %c0_9 = arith.constant 0 : index
    %30 = vector.load %arg18[%c0_8, %c0_9] : memref<108x512xf32, #tpu.memory_space<vmem>>, vector<4x512xf32>
    tpu.vector_store %arg18[%c0_8, %c0_9], %29 {strides = array<i32>} : memref<108x512xf32, #tpu.memory_space<vmem>>, vector<4x512xf32>,
    %c72_i32 = arith.constant 72 : i32
    %31 = tpu.dynamic_rotate %25 by %c72_i32 dim 1 : vector<4x512xf32>, i32 -> vector<4x512xf32>
    %c1 = arith.constant 1 : index
    %c0_10 = arith.constant 0 : index
    %32 = vector.load %arg2[%c1, %c0_10] : memref<27x512xf32, #tpu.memory_space<vmem>>, vector<1x512xf32>
    %33 = vector.broadcast %32 : vector<1x512xf32> to vector<4x512xf32>
    %34 = arith.mulf %31, %33 : vector<4x512xf32>
    %c4 = arith.constant 4 : index
    %c0_11 = arith.constant 0 : index
    %35 = vector.load %arg18[%c4, %c0_11] : memref<108x512xf32, #tpu.memory_space<vmem>>, vector<4x512xf32>
    tpu.vector_store %arg18[%c4, %c0_11], %34 {strides = array<i32>} : memref<108x512xf32, #tpu.memory_space<vmem>>, vector<4x512xf32>,
    %c71_i32 = arith.constant 71 : i32
    %36 = tpu.dynamic_rotate %25 by %c71_i32 dim 1 : vector<4x512xf32>, i32 -> vector<4x512xf32>
    %c2 = arith.constant 2 : index
    %c0_12 = arith.constant 0 : index
    %37 = vector.load %arg2[%c2, %c0_12] : memref<27x512xf32, #tpu.memory_space<vmem>>, vector<1x512xf32>
    %38 = vector.broadcast %37 : vector<1x512xf32> to vector<4x512xf32>
    %39 = arith.mulf %36, %38 : vector<4x512xf32>
    %c8 = arith.constant 8 : index
    %c0_13 = arith.constant 0 : index
    %40 = vector.load %arg18[%c8, %c0_13] : memref<108x512xf32, #tpu.memory_space<vmem>>, vector<4x512xf32>
    tpu.vector_store %arg18[%c8, %c0_13], %39 {strides = array<i32>} : memref<108x512xf32, #tpu.memory_space<vmem>>, vector<4x512xf32>,
    %c65_i32 = arith.constant 65 : i32
    %41 = tpu.dynamic_rotate %25 by %c65_i32 dim 1 : vector<4x512xf32>, i32 -> vector<4x512xf32>
    %c3 = arith.constant 3 : index
    %c0_14 = arith.constant 0 : index
    %42 = vector.load %arg2[%c3, %c0_14] : memref<27x512xf32, #tpu.memory_space<vmem>>, vector<1x512xf32>
    %43 = vector.broadcast %42 : vector<1x512xf32> to vector<4x512xf32>
    %44 = arith.mulf %41, %43 : vector<4x512xf32>
    %c12 = arith.constant 12 : index
    %c0_15 = arith.constant 0 : index
    %45 = vector.load %arg18[%c12, %c0_15] : memref<108x512xf32, #tpu.memory_space<vmem>>, vector<4x512xf32>
    tpu.vector_store %arg18[%c12, %c0_15], %44 {strides = array<i32>} : memref<108x512xf32, #tpu.memory_space<vmem>>, vector<4x512xf32>,
    %c64_i32 = arith.constant 64 : i32
    %46 = tpu.dynamic_rotate %25 by %c64_i32 dim 1 : vector<4x512xf32>, i32 -> vector<4x512xf32>
    %c4_16 = arith.constant 4 : index
    %c0_17 = arith.constant 0 : index
    %47 = vector.load %arg2[%c4_16, %c0_17] : memref<27x512xf32, #tpu.memory_space<vmem>>, vector<1x512xf32>
    %48 = vector.broadcast %47 : vector<1x512xf32> to vector<4x512xf32>
    %49 = arith.mulf %46, %48 : vector<4x512xf32>
    %c16 = arith.constant 16 : index
    %c0_18 = arith.constant 0 : index
    %50 = vector.load %arg18[%c16, %c0_18] : memref<108x512xf32, #tpu.memory_space<vmem>>, vector<4x512xf32>
    tpu.vector_store %arg18[%c16, %c0_18], %49 {strides = array<i32>} : memref<108x512xf32, #tpu.memory_space<vmem>>, vector<4x512xf32>,
    %c63_i32 = arith.constant 63 : i32
    %51 = tpu.dynamic_rotate %25 by %c63_i32 dim 1 : vector<4x512xf32>, i32 -> vector<4x512xf32>
    %c5 = arith.constant 5 : index
    %c0_19 = arith.constant 0 : index
    %52 = vector.load %arg2[%c5, %c0_19] : memref<27x512xf32, #tpu.memory_space<vmem>>, vector<1x512xf32>
    %53 = vector.broadcast %52 : vector<1x512xf32> to vector<4x512xf32>
    %54 = arith.mulf %51, %53 : vector<4x512xf32>
    %c20 = arith.constant 20 : index
    %c0_20 = arith.constant 0 : index
    %55 = vector.load %arg18[%c20, %c0_20] : memref<108x512xf32, #tpu.memory_space<vmem>>, vector<4x512xf32>
    tpu.vector_store %arg18[%c20, %c0_20], %54 {strides = array<i32>} : memref<108x512xf32, #tpu.memory_space<vmem>>, vector<4x512xf32>,
    %c57_i32 = arith.constant 57 : i32
    %56 = tpu.dynamic_rotate %25 by %c57_i32 dim 1 : vector<4x512xf32>, i32 -> vector<4x512xf32>
    %c6 = arith.constant 6 : index
    %c0_21 = arith.constant 0 : index
    %57 = vector.load %arg2[%c6, %c0_21] : memref<27x512xf32, #tpu.memory_space<vmem>>, vector<1x512xf32>
    %58 = vector.broadcast %57 : vector<1x512xf32> to vector<4x512xf32>
    %59 = arith.mulf %56, %58 : vector<4x512xf32>
    %c24 = arith.constant 24 : index
    %c0_22 = arith.constant 0 : index
    %60 = vector.load %arg18[%c24, %c0_22] : memref<108x512xf32, #tpu.memory_space<vmem>>, vector<4x512xf32>
    tpu.vector_store %arg18[%c24, %c0_22], %59 {strides = array<i32>} : memref<108x512xf32, #tpu.memory_space<vmem>>, vector<4x512xf32>,
    %c56_i32 = arith.constant 56 : i32
    %61 = tpu.dynamic_rotate %25 by %c56_i32 dim 1 : vector<4x512xf32>, i32 -> vector<4x512xf32>
    %c7 = arith.constant 7 : index
    %c0_23 = arith.constant 0 : index
    %62 = vector.load %arg2[%c7, %c0_23] : memref<27x512xf32, #tpu.memory_space<vmem>>, vector<1x512xf32>
    %63 = vector.broadcast %62 : vector<1x512xf32> to vector<4x512xf32>
    %64 = arith.mulf %61, %63 : vector<4x512xf32>
    %c28 = arith.constant 28 : index
    %c0_24 = arith.constant 0 : index
    %65 = vector.load %arg18[%c28, %c0_24] : memref<108x512xf32, #tpu.memory_space<vmem>>, vector<4x512xf32>
    tpu.vector_store %arg18[%c28, %c0_24], %64 {strides = array<i32>} : memref<108x512xf32, #tpu.memory_space<vmem>>, vector<4x512xf32>,
    %c55_i32 = arith.constant 55 : i32
    %66 = tpu.dynamic_rotate %25 by %c55_i32 dim 1 : vector<4x512xf32>, i32 -> vector<4x512xf32>
    %c8_25 = arith.constant 8 : index
    %c0_26 = arith.constant 0 : index
    %67 = vector.load %arg2[%c8_25, %c0_26] : memref<27x512xf32, #tpu.memory_space<vmem>>, vector<1x512xf32>
    %68 = vector.broadcast %67 : vector<1x512xf32> to vector<4x512xf32>
    %69 = arith.mulf %66, %68 : vector<4x512xf32>
    %c32 = arith.constant 32 : index
    %c0_27 = arith.constant 0 : index
    %70 = vector.load %arg18[%c32, %c0_27] : memref<108x512xf32, #tpu.memory_space<vmem>>, vector<4x512xf32>
    tpu.vector_store %arg18[%c32, %c0_27], %69 {strides = array<i32>} : memref<108x512xf32, #tpu.memory_space<vmem>>, vector<4x512xf32>,
    %c9_i32 = arith.constant 9 : i32
    %71 = tpu.dynamic_rotate %25 by %c9_i32 dim 1 : vector<4x512xf32>, i32 -> vector<4x512xf32>
    %c9 = arith.constant 9 : index
    %c0_28 = arith.constant 0 : index
    %72 = vector.load %arg2[%c9, %c0_28] : memref<27x512xf32, #tpu.memory_space<vmem>>, vector<1x512xf32>
    %73 = vector.broadcast %72 : vector<1x512xf32> to vector<4x512xf32>
    %74 = arith.mulf %71, %73 : vector<4x512xf32>
    %c36 = arith.constant 36 : index
    %c0_29 = arith.constant 0 : index
    %75 = vector.load %arg18[%c36, %c0_29] : memref<108x512xf32, #tpu.memory_space<vmem>>, vector<4x512xf32>
    tpu.vector_store %arg18[%c36, %c0_29], %74 {strides = array<i32>} : memref<108x512xf32, #tpu.memory_space<vmem>>, vector<4x512xf32>,
    %c8_i32 = arith.constant 8 : i32
    %76 = tpu.dynamic_rotate %25 by %c8_i32 dim 1 : vector<4x512xf32>, i32 -> vector<4x512xf32>
    %c10 = arith.constant 10 : index
    %c0_30 = arith.constant 0 : index
    %77 = vector.load %arg2[%c10, %c0_30] : memref<27x512xf32, #tpu.memory_space<vmem>>, vector<1x512xf32>
    %78 = vector.broadcast %77 : vector<1x512xf32> to vector<4x512xf32>
    %79 = arith.mulf %76, %78 : vector<4x512xf32>
    %c40 = arith.constant 40 : index
    %c0_31 = arith.constant 0 : index
    %80 = vector.load %arg18[%c40, %c0_31] : memref<108x512xf32, #tpu.memory_space<vmem>>, vector<4x512xf32>
    tpu.vector_store %arg18[%c40, %c0_31], %79 {strides = array<i32>} : memref<108x512xf32, #tpu.memory_space<vmem>>, vector<4x512xf32>,
    %c7_i32 = arith.constant 7 : i32
    %81 = tpu.dynamic_rotate %25 by %c7_i32 dim 1 : vector<4x512xf32>, i32 -> vector<4x512xf32>
    %c11 = arith.constant 11 : index
    %c0_32 = arith.constant 0 : index
    %82 = vector.load %arg2[%c11, %c0_32] : memref<27x512xf32, #tpu.memory_space<vmem>>, vector<1x512xf32>
    %83 = vector.broadcast %82 : vector<1x512xf32> to vector<4x512xf32>
    %84 = arith.mulf %81, %83 : vector<4x512xf32>
    %c44 = arith.constant 44 : index
    %c0_33 = arith.constant 0 : index
    %85 = vector.load %arg18[%c44, %c0_33] : memref<108x512xf32, #tpu.memory_space<vmem>>, vector<4x512xf32>
    tpu.vector_store %arg18[%c44, %c0_33], %84 {strides = array<i32>} : memref<108x512xf32, #tpu.memory_space<vmem>>, vector<4x512xf32>,
    %c1_i32 = arith.constant 1 : i32
    %86 = tpu.dynamic_rotate %25 by %c1_i32 dim 1 : vector<4x512xf32>, i32 -> vector<4x512xf32>
    %c12_34 = arith.constant 12 : index
    %c0_35 = arith.constant 0 : index
    %87 = vector.load %arg2[%c12_34, %c0_35] : memref<27x512xf32, #tpu.memory_space<vmem>>, vector<1x512xf32>
    %88 = vector.broadcast %87 : vector<1x512xf32> to vector<4x512xf32>
    %89 = arith.mulf %86, %88 : vector<4x512xf32>
    %c48 = arith.constant 48 : index
    %c0_36 = arith.constant 0 : index
    %90 = vector.load %arg18[%c48, %c0_36] : memref<108x512xf32, #tpu.memory_space<vmem>>, vector<4x512xf32>
    tpu.vector_store %arg18[%c48, %c0_36], %89 {strides = array<i32>} : memref<108x512xf32, #tpu.memory_space<vmem>>, vector<4x512xf32>,
    %c52 = arith.constant 52 : index
    %c0_37 = arith.constant 0 : index
    %91 = vector.load %arg18[%c52, %c0_37] : memref<108x512xf32, #tpu.memory_space<vmem>>, vector<4x512xf32>
    tpu.vector_store %arg18[%c52, %c0_37], %25 {strides = array<i32>} : memref<108x512xf32, #tpu.memory_space<vmem>>, vector<4x512xf32>,
    %c511_i32 = arith.constant 511 : i32
    %92 = tpu.dynamic_rotate %25 by %c511_i32 dim 1 : vector<4x512xf32>, i32 -> vector<4x512xf32>
    %c14 = arith.constant 14 : index
    %c0_38 = arith.constant 0 : index
    %93 = vector.load %arg2[%c14, %c0_38] : memref<27x512xf32, #tpu.memory_space<vmem>>, vector<1x512xf32>
    %94 = vector.broadcast %93 : vector<1x512xf32> to vector<4x512xf32>
    %95 = arith.mulf %92, %94 : vector<4x512xf32>
    %c56 = arith.constant 56 : index
    %c0_39 = arith.constant 0 : index
    %96 = vector.load %arg18[%c56, %c0_39] : memref<108x512xf32, #tpu.memory_space<vmem>>, vector<4x512xf32>
    tpu.vector_store %arg18[%c56, %c0_39], %95 {strides = array<i32>} : memref<108x512xf32, #tpu.memory_space<vmem>>, vector<4x512xf32>,
    %c505_i32 = arith.constant 505 : i32
    %97 = tpu.dynamic_rotate %25 by %c505_i32 dim 1 : vector<4x512xf32>, i32 -> vector<4x512xf32>
    %c15 = arith.constant 15 : index
    %c0_40 = arith.constant 0 : index
    %98 = vector.load %arg2[%c15, %c0_40] : memref<27x512xf32, #tpu.memory_space<vmem>>, vector<1x512xf32>
    %99 = vector.broadcast %98 : vector<1x512xf32> to vector<4x512xf32>
    %100 = arith.mulf %97, %99 : vector<4x512xf32>
    %c60 = arith.constant 60 : index
    %c0_41 = arith.constant 0 : index
    %101 = vector.load %arg18[%c60, %c0_41] : memref<108x512xf32, #tpu.memory_space<vmem>>, vector<4x512xf32>
    tpu.vector_store %arg18[%c60, %c0_41], %100 {strides = array<i32>} : memref<108x512xf32, #tpu.memory_space<vmem>>, vector<4x512xf32>,
    %c504_i32 = arith.constant 504 : i32
    %102 = tpu.dynamic_rotate %25 by %c504_i32 dim 1 : vector<4x512xf32>, i32 -> vector<4x512xf32>
    %c16_42 = arith.constant 16 : index
    %c0_43 = arith.constant 0 : index
    %103 = vector.load %arg2[%c16_42, %c0_43] : memref<27x512xf32, #tpu.memory_space<vmem>>, vector<1x512xf32>
    %104 = vector.broadcast %103 : vector<1x512xf32> to vector<4x512xf32>
    %105 = arith.mulf %102, %104 : vector<4x512xf32>
    %c64 = arith.constant 64 : index
    %c0_44 = arith.constant 0 : index
    %106 = vector.load %arg18[%c64, %c0_44] : memref<108x512xf32, #tpu.memory_space<vmem>>, vector<4x512xf32>
    tpu.vector_store %arg18[%c64, %c0_44], %105 {strides = array<i32>} : memref<108x512xf32, #tpu.memory_space<vmem>>, vector<4x512xf32>,
    %c503_i32 = arith.constant 503 : i32
    %107 = tpu.dynamic_rotate %25 by %c503_i32 dim 1 : vector<4x512xf32>, i32 -> vector<4x512xf32>
    %c17 = arith.constant 17 : index
    %c0_45 = arith.constant 0 : index
    %108 = vector.load %arg2[%c17, %c0_45] : memref<27x512xf32, #tpu.memory_space<vmem>>, vector<1x512xf32>
    %109 = vector.broadcast %108 : vector<1x512xf32> to vector<4x512xf32>
    %110 = arith.mulf %107, %109 : vector<4x512xf32>
    %c68 = arith.constant 68 : index
    %c0_46 = arith.constant 0 : index
    %111 = vector.load %arg18[%c68, %c0_46] : memref<108x512xf32, #tpu.memory_space<vmem>>, vector<4x512xf32>
    tpu.vector_store %arg18[%c68, %c0_46], %110 {strides = array<i32>} : memref<108x512xf32, #tpu.memory_space<vmem>>, vector<4x512xf32>,
    %c457_i32 = arith.constant 457 : i32
    %112 = tpu.dynamic_rotate %25 by %c457_i32 dim 1 : vector<4x512xf32>, i32 -> vector<4x512xf32>
    %c18 = arith.constant 18 : index
    %c0_47 = arith.constant 0 : index
    %113 = vector.load %arg2[%c18, %c0_47] : memref<27x512xf32, #tpu.memory_space<vmem>>, vector<1x512xf32>
    %114 = vector.broadcast %113 : vector<1x512xf32> to vector<4x512xf32>
    %115 = arith.mulf %112, %114 : vector<4x512xf32>
    %c72 = arith.constant 72 : index
    %c0_48 = arith.constant 0 : index
    %116 = vector.load %arg18[%c72, %c0_48] : memref<108x512xf32, #tpu.memory_space<vmem>>, vector<4x512xf32>
    tpu.vector_store %arg18[%c72, %c0_48], %115 {strides = array<i32>} : memref<108x512xf32, #tpu.memory_space<vmem>>, vector<4x512xf32>,
    %c456_i32 = arith.constant 456 : i32
    %117 = tpu.dynamic_rotate %25 by %c456_i32 dim 1 : vector<4x512xf32>, i32 -> vector<4x512xf32>
    %c19 = arith.constant 19 : index
    %c0_49 = arith.constant 0 : index
    %118 = vector.load %arg2[%c19, %c0_49] : memref<27x512xf32, #tpu.memory_space<vmem>>, vector<1x512xf32>
    %119 = vector.broadcast %118 : vector<1x512xf32> to vector<4x512xf32>
    %120 = arith.mulf %117, %119 : vector<4x512xf32>
    %c76 = arith.constant 76 : index
    %c0_50 = arith.constant 0 : index
    %121 = vector.load %arg18[%c76, %c0_50] : memref<108x512xf32, #tpu.memory_space<vmem>>, vector<4x512xf32>
    tpu.vector_store %arg18[%c76, %c0_50], %120 {strides = array<i32>} : memref<108x512xf32, #tpu.memory_space<vmem>>, vector<4x512xf32>,
    %c455_i32 = arith.constant 455 : i32
    %122 = tpu.dynamic_rotate %25 by %c455_i32 dim 1 : vector<4x512xf32>, i32 -> vector<4x512xf32>
    %c20_51 = arith.constant 20 : index
    %c0_52 = arith.constant 0 : index
    %123 = vector.load %arg2[%c20_51, %c0_52] : memref<27x512xf32, #tpu.memory_space<vmem>>, vector<1x512xf32>
    %124 = vector.broadcast %123 : vector<1x512xf32> to vector<4x512xf32>
    %125 = arith.mulf %122, %124 : vector<4x512xf32>
    %c80 = arith.constant 80 : index
    %c0_53 = arith.constant 0 : index
    %126 = vector.load %arg18[%c80, %c0_53] : memref<108x512xf32, #tpu.memory_space<vmem>>, vector<4x512xf32>
    tpu.vector_store %arg18[%c80, %c0_53], %125 {strides = array<i32>} : memref<108x512xf32, #tpu.memory_space<vmem>>, vector<4x512xf32>,
    %c449_i32 = arith.constant 449 : i32
    %127 = tpu.dynamic_rotate %25 by %c449_i32 dim 1 : vector<4x512xf32>, i32 -> vector<4x512xf32>
    %c21 = arith.constant 21 : index
    %c0_54 = arith.constant 0 : index
    %128 = vector.load %arg2[%c21, %c0_54] : memref<27x512xf32, #tpu.memory_space<vmem>>, vector<1x512xf32>
    %129 = vector.broadcast %128 : vector<1x512xf32> to vector<4x512xf32>
    %130 = arith.mulf %127, %129 : vector<4x512xf32>
    %c84 = arith.constant 84 : index
    %c0_55 = arith.constant 0 : index
    %131 = vector.load %arg18[%c84, %c0_55] : memref<108x512xf32, #tpu.memory_space<vmem>>, vector<4x512xf32>
    tpu.vector_store %arg18[%c84, %c0_55], %130 {strides = array<i32>} : memref<108x512xf32, #tpu.memory_space<vmem>>, vector<4x512xf32>,
    %c448_i32 = arith.constant 448 : i32
    %132 = tpu.dynamic_rotate %25 by %c448_i32 dim 1 : vector<4x512xf32>, i32 -> vector<4x512xf32>
    %c22 = arith.constant 22 : index
    %c0_56 = arith.constant 0 : index
    %133 = vector.load %arg2[%c22, %c0_56] : memref<27x512xf32, #tpu.memory_space<vmem>>, vector<1x512xf32>
    %134 = vector.broadcast %133 : vector<1x512xf32> to vector<4x512xf32>
    %135 = arith.mulf %132, %134 : vector<4x512xf32>
    %c88 = arith.constant 88 : index
    %c0_57 = arith.constant 0 : index
    %136 = vector.load %arg18[%c88, %c0_57] : memref<108x512xf32, #tpu.memory_space<vmem>>, vector<4x512xf32>
    tpu.vector_store %arg18[%c88, %c0_57], %135 {strides = array<i32>} : memref<108x512xf32, #tpu.memory_space<vmem>>, vector<4x512xf32>,
    %c447_i32 = arith.constant 447 : i32
    %137 = tpu.dynamic_rotate %25 by %c447_i32 dim 1 : vector<4x512xf32>, i32 -> vector<4x512xf32>
    %c23 = arith.constant 23 : index
    %c0_58 = arith.constant 0 : index
    %138 = vector.load %arg2[%c23, %c0_58] : memref<27x512xf32, #tpu.memory_space<vmem>>, vector<1x512xf32>
    %139 = vector.broadcast %138 : vector<1x512xf32> to vector<4x512xf32>
    %140 = arith.mulf %137, %139 : vector<4x512xf32>
    %c92 = arith.constant 92 : index
    %c0_59 = arith.constant 0 : index
    %141 = vector.load %arg18[%c92, %c0_59] : memref<108x512xf32, #tpu.memory_space<vmem>>, vector<4x512xf32>
    tpu.vector_store %arg18[%c92, %c0_59], %140 {strides = array<i32>} : memref<108x512xf32, #tpu.memory_space<vmem>>, vector<4x512xf32>,
    %c441_i32 = arith.constant 441 : i32
    %142 = tpu.dynamic_rotate %25 by %c441_i32 dim 1 : vector<4x512xf32>, i32 -> vector<4x512xf32>
    %c24_60 = arith.constant 24 : index
    %c0_61 = arith.constant 0 : index
    %143 = vector.load %arg2[%c24_60, %c0_61] : memref<27x512xf32, #tpu.memory_space<vmem>>, vector<1x512xf32>
    %144 = vector.broadcast %143 : vector<1x512xf32> to vector<4x512xf32>
    %145 = arith.mulf %142, %144 : vector<4x512xf32>
    %c96 = arith.constant 96 : index
    %c0_62 = arith.constant 0 : index
    %146 = vector.load %arg18[%c96, %c0_62] : memref<108x512xf32, #tpu.memory_space<vmem>>, vector<4x512xf32>
    tpu.vector_store %arg18[%c96, %c0_62], %145 {strides = array<i32>} : memref<108x512xf32, #tpu.memory_space<vmem>>, vector<4x512xf32>,
    %c440_i32 = arith.constant 440 : i32
    %147 = tpu.dynamic_rotate %25 by %c440_i32 dim 1 : vector<4x512xf32>, i32 -> vector<4x512xf32>
    %c25 = arith.constant 25 : index
    %c0_63 = arith.constant 0 : index
    %148 = vector.load %arg2[%c25, %c0_63] : memref<27x512xf32, #tpu.memory_space<vmem>>, vector<1x512xf32>
    %149 = vector.broadcast %148 : vector<1x512xf32> to vector<4x512xf32>
    %150 = arith.mulf %147, %149 : vector<4x512xf32>
    %c100 = arith.constant 100 : index
    %c0_64 = arith.constant 0 : index
    %151 = vector.load %arg18[%c100, %c0_64] : memref<108x512xf32, #tpu.memory_space<vmem>>, vector<4x512xf32>
    tpu.vector_store %arg18[%c100, %c0_64], %150 {strides = array<i32>} : memref<108x512xf32, #tpu.memory_space<vmem>>, vector<4x512xf32>,
    %c439_i32 = arith.constant 439 : i32
    %152 = tpu.dynamic_rotate %25 by %c439_i32 dim 1 : vector<4x512xf32>, i32 -> vector<4x512xf32>
    %c26 = arith.constant 26 : index
    %c0_65 = arith.constant 0 : index
    %153 = vector.load %arg2[%c26, %c0_65] : memref<27x512xf32, #tpu.memory_space<vmem>>, vector<1x512xf32>
    %154 = vector.broadcast %153 : vector<1x512xf32> to vector<4x512xf32>
    %155 = arith.mulf %152, %154 : vector<4x512xf32>
    %c104 = arith.constant 104 : index
    %c0_66 = arith.constant 0 : index
    %156 = vector.load %arg18[%c104, %c0_66] : memref<108x512xf32, #tpu.memory_space<vmem>>, vector<4x512xf32>
    tpu.vector_store %arg18[%c104, %c0_66], %155 {strides = array<i32>} : memref<108x512xf32, #tpu.memory_space<vmem>>, vector<4x512xf32>,
    %c0_67 = arith.constant 0 : index
    %c0_68 = arith.constant 0 : index
    %157 = vector.load %arg3[%c0_67, %c0_68] : memref<4x108xf32, #tpu.memory_space<vmem>>, vector<4x108xf32>
    %c0_69 = arith.constant 0 : index
    %c0_70 = arith.constant 0 : index
    %158 = vector.load %arg18[%c0_69, %c0_70] : memref<108x512xf32, #tpu.memory_space<vmem>>, vector<108x512xf32>
    %cst_71 = arith.constant dense<0.000000e+00> : vector<4x512xf32>
    %159 = tpu.matmul %157, %158, %cst_71 {dimension_numbers = #tpu.dot_dimension_numbers<[1], [0], [0], [1], [0, 0, 1, 1], [], []>} : vector<4x108xf32>, vector<108x512xf32>, vector<4x512xf32> -> vector<4x512xf32>
    %c0_72 = arith.constant 0 : index
    %c0_73 = arith.constant 0 : index
    %160 = vector.load %arg4[%c0_72, %c0_73] : memref<4x1xf32, #tpu.memory_space<vmem>>, vector<4x1xf32>
    %161 = vector.broadcast %160 : vector<4x1xf32> to vector<4x512xf32>
    %162 = arith.addf %159, %161 : vector<4x512xf32>
    %cst_74 = arith.constant 0.000000e+00 : f32
    %163 = vector.broadcast %cst_74 : f32 to vector<4x512xf32>
    %164 = arith.maximumf %162, %163 : vector<4x512xf32>
    %c0_75 = arith.constant 0 : index
    %c0_76 = arith.constant 0 : index
    %165 = vector.load %arg5[%c0_75, %c0_76] : memref<4x1xf32, #tpu.memory_space<vmem>>, vector<4x1xf32>
    %166 = vector.broadcast %165 : vector<4x1xf32> to vector<4x512xf32>
    %167 = arith.mulf %164, %166 : vector<4x512xf32>
    %cst_77 = arith.constant dense<0.000000e+00> : vector<512xf32>
    %168 = vector.multi_reduction <add>, %167, %cst_77 [0] : vector<4x512xf32> to vector<512xf32>
    %169 = vector.shape_cast %168 : vector<512xf32> to vector<1x512xf32>
    %c0_78 = arith.constant 0 : index
    %170 = memref.load %arg6[%c0_78] : memref<3xf32, #tpu.memory_space<smem>>
    %171 = vector.broadcast %170 : f32 to vector<1x512xf32>
    %172 = arith.addf %169, %171 : vector<1x512xf32>
    %173 = vector.shape_cast %172 : vector<1x512xf32> to vector<1x1x512xf32>
    %cst_79 = arith.constant dense<0.000000e+00> : vector<1xf32>
    %174 = vector.multi_reduction <add>, %173, %cst_79 [1, 2] : vector<1x1x512xf32> to vector<1xf32>
    %175 = vector.shape_cast %174 : vector<1xf32> to vector<1x1x1xf32>
    %176 = vector.extract %175[0, 0, 0] : f32 from vector<1x1x1xf32>
    %177 = vector.broadcast %176 : f32 to vector<1x1xf32>
    %cst_80 = arith.constant 5.120000e+02 : f32
    %178 = vector.broadcast %cst_80 : f32 to vector<1x1xf32>
    %179 = arith.divf %177, %178 : vector<1x1xf32>
    %180 = vector.broadcast %179 : vector<1x1xf32> to vector<1x512xf32>
    %181 = arith.subf %172, %180 : vector<1x512xf32>
    %182 = arith.mulf %181, %181 : vector<1x512xf32>
    %183 = vector.shape_cast %182 : vector<1x512xf32> to vector<1x1x512xf32>
    %cst_81 = arith.constant dense<0.000000e+00> : vector<1xf32>
    %184 = vector.multi_reduction <add>, %183, %cst_81 [1, 2] : vector<1x1x512xf32> to vector<1xf32>
    %185 = vector.shape_cast %184 : vector<1xf32> to vector<1x1x1xf32>
    %186 = vector.extract %185[0, 0, 0] : f32 from vector<1x1x1xf32>
    %187 = vector.broadcast %186 : f32 to vector<1x1xf32>
    %cst_82 = arith.constant 5.120000e+02 : f32
    %188 = vector.broadcast %cst_82 : f32 to vector<1x1xf32>
    %189 = arith.divf %187, %188 : vector<1x1xf32>
    %190 = vector.broadcast %179 : vector<1x1xf32> to vector<1x512xf32>
    %191 = arith.subf %172, %190 : vector<1x512xf32>
    %cst_83 = arith.constant 9.99999997E-7 : f32
    %192 = vector.broadcast %cst_83 : f32 to vector<1x1xf32>
    %193 = arith.addf %189, %192 : vector<1x1xf32>
    %194 = math.rsqrt %193 : vector<1x1xf32>
    %195 = vector.broadcast %194 : vector<1x1xf32> to vector<1x512xf32>
    %196 = arith.mulf %191, %195 : vector<1x512xf32>
    %c1_84 = arith.constant 1 : index
    %197 = memref.load %arg6[%c1_84] : memref<3xf32, #tpu.memory_space<smem>>
    %198 = vector.broadcast %197 : f32 to vector<1x512xf32>
    %199 = arith.mulf %196, %198 : vector<1x512xf32>
    %c2_85 = arith.constant 2 : index
    %200 = memref.load %arg6[%c2_85] : memref<3xf32, #tpu.memory_space<smem>>
    %201 = vector.broadcast %200 : f32 to vector<1x512xf32>
    %202 = arith.addf %199, %201 : vector<1x512xf32>
    %203 = arith.negf %202 : vector<1x512xf32>
    %204 = math.exp %203 : vector<1x512xf32>
    %cst_86 = arith.constant 1.000000e+00 : f32
    %205 = vector.broadcast %cst_86 : f32 to vector<1x512xf32>
    %206 = arith.addf %205, %204 : vector<1x512xf32>
    %207 = arith.divf %205, %206 : vector<1x512xf32>
    %c0_87 = arith.constant 0 : index
    %c0_88 = arith.constant 0 : index
    %c0_89 = arith.constant 0 : index
    %208 = vector.load %arg15[%c0_87, %c0_88, %c0_89] : memref<1x1x512xf32, #tpu.memory_space<vmem>>, vector<1x1x512xf32>
    %209 = vector.shape_cast %208 : vector<1x1x512xf32> to vector<1x512xf32>
    %210 = vector.shape_cast %207 : vector<1x512xf32> to vector<1x1x512xf32>
    tpu.vector_store %arg15[%c0_87, %c0_88, %c0_89], %210 {strides = array<i32>} : memref<1x1x512xf32, #tpu.memory_space<vmem>>, vector<1x1x512xf32>,
    %211 = vector.broadcast %207 : vector<1x512xf32> to vector<4x512xf32>
    %212 = arith.mulf %25, %211 : vector<4x512xf32>
    %213 = vector.extract_strided_slice %212 {offsets = [0, 0], sizes = [1, 512], strides = [1, 1]} : vector<4x512xf32> to vector<1x512xf32>
    %214 = vector.extract_strided_slice %212 {offsets = [1, 0], sizes = [1, 512], strides = [1, 1]} : vector<4x512xf32> to vector<1x512xf32>
    %215 = vector.extract_strided_slice %212 {offsets = [2, 0], sizes = [1, 512], strides = [1, 1]} : vector<4x512xf32> to vector<1x512xf32>
    %216 = vector.extract_strided_slice %212 {offsets = [3, 0], sizes = [1, 512], strides = [1, 1]} : vector<4x512xf32> to vector<1x512xf32>
    %217 = tpu.concatenate %213, %214, %215, %216 in 1 : vector<1x512xf32>, vector<1x512xf32>, vector<1x512xf32>, vector<1x512xf32> -> vector<1x2048xf32>
    %c0_90 = arith.constant 0 : index
    %c0_91 = arith.constant 0 : index
    %c0_92 = arith.constant 0 : index
    %218 = vector.load %arg16[%c0_90, %c0_91, %c0_92] : memref<1x1x2048xf32, #tpu.memory_space<vmem>>, vector<1x1x2048xf32>
    %219 = vector.shape_cast %218 : vector<1x1x2048xf32> to vector<1x2048xf32>
    %220 = vector.shape_cast %217 : vector<1x2048xf32> to vector<1x1x2048xf32>
    tpu.vector_store %arg16[%c0_90, %c0_91, %c0_92], %220 {strides = array<i32>} : memref<1x1x2048xf32, #tpu.memory_space<vmem>>, vector<1x1x2048xf32>,
    %c0_93 = arith.constant 0 : index
    %c0_94 = arith.constant 0 : index
    %221 = vector.load %arg7[%c0_93, %c0_94] : memref<2048x64xf32, #tpu.memory_space<vmem>>, vector<2048x64xf32>
    %cst_95 = arith.constant dense<0.000000e+00> : vector<1x64xf32>
    %222 = tpu.matmul %217, %221, %cst_95 {dimension_numbers = #tpu.dot_dimension_numbers<[1], [0], [0], [1], [0, 0, 1, 1], [], []>} : vector<1x2048xf32>, vector<2048x64xf32>, vector<1x64xf32> -> vector<1x64xf32>
    %c0_96 = arith.constant 0 : index
    %c0_97 = arith.constant 0 : index
    %223 = vector.load %arg8[%c0_96, %c0_97] : memref<1x64xf32, #tpu.memory_space<vmem>>, vector<1x64xf32>
    %224 = arith.addf %222, %223 : vector<1x64xf32>
    %c0_98 = arith.constant 0 : index
    %c0_99 = arith.constant 0 : index
    %225 = vector.load %arg11[%c0_98, %c0_99] : memref<64x32xf32, #tpu.memory_space<vmem>>, vector<64x32xf32>
    %cst_100 = arith.constant dense<0.000000e+00> : vector<1x32xf32>
    %226 = tpu.matmul %224, %225, %cst_100 {dimension_numbers = #tpu.dot_dimension_numbers<[1], [0], [0], [1], [0, 0, 1, 1], [], []>} : vector<1x64xf32>, vector<64x32xf32>, vector<1x32xf32> -> vector<1x32xf32>
    %c0_101 = arith.constant 0 : index
    %c0_102 = arith.constant 0 : index
    %227 = vector.load %arg12[%c0_101, %c0_102] : memref<32x64xf32, #tpu.memory_space<vmem>>, vector<32x64xf32>
    %cst_103 = arith.constant dense<0.000000e+00> : vector<1x64xf32>
    %228 = tpu.matmul %226, %227, %cst_103 {dimension_numbers = #tpu.dot_dimension_numbers<[1], [0], [0], [1], [0, 0, 1, 1], [], []>} : vector<1x32xf32>, vector<32x64xf32>, vector<1x64xf32> -> vector<1x64xf32>
    %229 = arith.subf %224, %228 : vector<1x64xf32>
    %230 = arith.mulf %229, %229 : vector<1x64xf32>
    %c0_104 = arith.constant 0 : index
    %c0_105 = arith.constant 0 : index
    %231 = vector.load %arg11[%c0_104, %c0_105] : memref<64x32xf32, #tpu.memory_space<vmem>>, vector<64x32xf32>
    %cst_106 = arith.constant dense<0.000000e+00> : vector<1x32xf32>
    %232 = tpu.matmul %230, %231, %cst_106 {dimension_numbers = #tpu.dot_dimension_numbers<[1], [0], [0], [1], [0, 0, 1, 1], [], []>} : vector<1x64xf32>, vector<64x32xf32>, vector<1x32xf32> -> vector<1x32xf32>
    %c0_107 = arith.constant 0 : index
    %c0_108 = arith.constant 0 : index
    %233 = vector.load %arg12[%c0_107, %c0_108] : memref<32x64xf32, #tpu.memory_space<vmem>>, vector<32x64xf32>
    %cst_109 = arith.constant dense<0.000000e+00> : vector<1x64xf32>
    %234 = tpu.matmul %232, %233, %cst_109 {dimension_numbers = #tpu.dot_dimension_numbers<[1], [0], [0], [1], [0, 0, 1, 1], [], []>} : vector<1x32xf32>, vector<32x64xf32>, vector<1x64xf32> -> vector<1x64xf32>
    %235 = arith.subf %224, %228 : vector<1x64xf32>
    %cst_110 = arith.constant 9.99999997E-7 : f32
    %236 = vector.broadcast %cst_110 : f32 to vector<1x64xf32>
    %237 = arith.addf %234, %236 : vector<1x64xf32>
    %238 = math.rsqrt %237 : vector<1x64xf32>
    %239 = arith.mulf %235, %238 : vector<1x64xf32>
    %c0_111 = arith.constant 0 : index
    %c0_112 = arith.constant 0 : index
    %240 = vector.load %arg9[%c0_111, %c0_112] : memref<1x64xf32, #tpu.memory_space<vmem>>, vector<1x64xf32>
    %241 = arith.mulf %239, %240 : vector<1x64xf32>
    %c0_113 = arith.constant 0 : index
    %c0_114 = arith.constant 0 : index
    %242 = vector.load %arg10[%c0_113, %c0_114] : memref<1x64xf32, #tpu.memory_space<vmem>>, vector<1x64xf32>
    %243 = arith.addf %241, %242 : vector<1x64xf32>
    %cst_115 = arith.constant 0.000000e+00 : f32
    %244 = vector.broadcast %cst_115 : f32 to vector<1x64xf32>
    %245 = arith.maximumf %243, %244 : vector<1x64xf32>
    %c0_116 = arith.constant 0 : index
    %c0_117 = arith.constant 0 : index
    %246 = vector.load %arg13[%c0_116, %c0_117] : memref<64x5xf32, #tpu.memory_space<vmem>>, vector<64x5xf32>
    %cst_118 = arith.constant dense<0.000000e+00> : vector<1x5xf32>
    %247 = tpu.matmul %245, %246, %cst_118 {dimension_numbers = #tpu.dot_dimension_numbers<[1], [0], [0], [1], [0, 0, 1, 1], [], []>} : vector<1x64xf32>, vector<64x5xf32>, vector<1x5xf32> -> vector<1x5xf32>
    %c0_119 = arith.constant 0 : index
    %c0_120 = arith.constant 0 : index
    %248 = vector.load %arg14[%c0_119, %c0_120] : memref<1x5xf32, #tpu.memory_space<vmem>>, vector<1x5xf32>
    %249 = arith.addf %247, %248 : vector<1x5xf32>
    %cst_121 = arith.constant dense<0xFF800000> : vector<1xf32>
    %250 = vector.multi_reduction <maximumf>, %249, %cst_121 [1] : vector<1x5xf32> to vector<1xf32>
    %251 = vector.shape_cast %250 : vector<1xf32> to vector<1x1xf32>
    %252 = vector.broadcast %251 : vector<1x1xf32> to vector<1x5xf32>
    %253 = arith.subf %249, %252 : vector<1x5xf32>
    %254 = math.exp %253 : vector<1x5xf32>
    %cst_122 = arith.constant dense<0.000000e+00> : vector<1xf32>
    %255 = vector.multi_reduction <add>, %254, %cst_122 [1] : vector<1x5xf32> to vector<1xf32>
    %256 = vector.shape_cast %255 : vector<1xf32> to vector<1x1xf32>
    %257 = vector.broadcast %256 : vector<1x1xf32> to vector<1x5xf32>
    %258 = arith.divf %254, %257 : vector<1x5xf32>
    %c0_123 = arith.constant 0 : index
    %c0_124 = arith.constant 0 : index
    %c0_125 = arith.constant 0 : index
    %259 = vector.load %arg17[%c0_123, %c0_124, %c0_125] : memref<1x1x5xf32, #tpu.memory_space<vmem>>, vector<1x1x5xf32>
    %260 = vector.shape_cast %259 : vector<1x1x5xf32> to vector<1x5xf32>
    %261 = vector.shape_cast %258 : vector<1x5xf32> to vector<1x1x5xf32>
    tpu.vector_store %arg17[%c0_123, %c0_124, %c0_125], %261 {strides = array<i32>} : memref<1x1x5xf32, #tpu.memory_space<vmem>>, vector<1x1x5xf32>,
    return
  }
  func.func @transform_0(%arg0: i32) -> (i32, i32, i32) {
    %c0_i32 = arith.constant 0 : i32
    %c0_i32_0 = arith.constant 0 : i32
    %c0_i32_1 = arith.constant 0 : i32
    return %arg0, %c0_i32, %c0_i32_0 : i32, i32, i32
  }
  func.func @transform_1(%arg0: i32) -> (i32, i32) {
    %c0_i32 = arith.constant 0 : i32
    %c0_i32_0 = arith.constant 0 : i32
    %c0_i32_1 = arith.constant 0 : i32
    return %c0_i32, %c0_i32_0 : i32, i32
  }
  func.func @transform_2(%arg0: i32) -> (i32, i32) {
    %c0_i32 = arith.constant 0 : i32
    %c0_i32_0 = arith.constant 0 : i32
    %c0_i32_1 = arith.constant 0 : i32
    return %c0_i32, %c0_i32_0 : i32, i32
  }
  func.func @transform_3(%arg0: i32) -> (i32, i32) {
    %c0_i32 = arith.constant 0 : i32
    %c0_i32_0 = arith.constant 0 : i32
    %c0_i32_1 = arith.constant 0 : i32
    return %c0_i32, %c0_i32_0 : i32, i32
  }
  func.func @transform_4(%arg0: i32) -> (i32, i32) {
    %c0_i32 = arith.constant 0 : i32
    %c0_i32_0 = arith.constant 0 : i32
    %c0_i32_1 = arith.constant 0 : i32
    return %c0_i32, %c0_i32_0 : i32, i32
  }
  func.func @transform_5(%arg0: i32) -> i32 {
    %c0_i32 = arith.constant 0 : i32
    %c0_i32_0 = arith.constant 0 : i32
    return %c0_i32 : i32
  }
  func.func @transform_6(%arg0: i32) -> (i32, i32) {
    %c0_i32 = arith.constant 0 : i32
    %c0_i32_0 = arith.constant 0 : i32
    %c0_i32_1 = arith.constant 0 : i32
    return %c0_i32, %c0_i32_0 : i32, i32
  }
  func.func @transform_7(%arg0: i32) -> (i32, i32) {
    %c0_i32 = arith.constant 0 : i32
    %c0_i32_0 = arith.constant 0 : i32
    %c0_i32_1 = arith.constant 0 : i32
    return %c0_i32, %c0_i32_0 : i32, i32
  }
  func.func @transform_8(%arg0: i32) -> (i32, i32) {
    %c0_i32 = arith.constant 0 : i32
    %c0_i32_0 = arith.constant 0 : i32
    %c0_i32_1 = arith.constant 0 : i32
    return %c0_i32, %c0_i32_0 : i32, i32
  }
  func.func @transform_9(%arg0: i32) -> (i32, i32) {
    %c0_i32 = arith.constant 0 : i32
    %c0_i32_0 = arith.constant 0 : i32
    %c0_i32_1 = arith.constant 0 : i32
    return %c0_i32, %c0_i32_0 : i32, i32
  }
  func.func @transform_10(%arg0: i32) -> (i32, i32) {
    %c0_i32 = arith.constant 0 : i32
    %c0_i32_0 = arith.constant 0 : i32
    %c0_i32_1 = arith.constant 0 : i32
    return %c0_i32, %c0_i32_0 : i32, i32
  }
  func.func @transform_11(%arg0: i32) -> (i32, i32) {
    %c0_i32 = arith.constant 0 : i32
    %c0_i32_0 = arith.constant 0 : i32
    %c0_i32_1 = arith.constant 0 : i32
    return %c0_i32, %c0_i32_0 : i32, i32
  }
  func.func @transform_12(%arg0: i32) -> (i32, i32) {
    %c0_i32 = arith.constant 0 : i32
    %c0_i32_0 = arith.constant 0 : i32
    %c0_i32_1 = arith.constant 0 : i32
    return %c0_i32, %c0_i32_0 : i32, i32
  }
  func.func @transform_13(%arg0: i32) -> (i32, i32) {
    %c0_i32 = arith.constant 0 : i32
    %c0_i32_0 = arith.constant 0 : i32
    %c0_i32_1 = arith.constant 0 : i32
    return %c0_i32, %c0_i32_0 : i32, i32
  }
  func.func @transform_14(%arg0: i32) -> (i32, i32, i32) {
    %c0_i32 = arith.constant 0 : i32
    %c0_i32_0 = arith.constant 0 : i32
    %c0_i32_1 = arith.constant 0 : i32
    return %arg0, %c0_i32, %c0_i32_0 : i32, i32, i32
  }
  func.func @transform_15(%arg0: i32) -> (i32, i32, i32) {
    %c0_i32 = arith.constant 0 : i32
    %c0_i32_0 = arith.constant 0 : i32
    %c0_i32_1 = arith.constant 0 : i32
    return %arg0, %c0_i32, %c0_i32_0 : i32, i32, i32
  }
  func.func @transform_16(%arg0: i32) -> (i32, i32, i32) {
    %c0_i32 = arith.constant 0 : i32
    %c0_i32_0 = arith.constant 0 : i32
    %c0_i32_1 = arith.constant 0 : i32
    return %arg0, %c0_i32, %c0_i32_0 : i32, i32, i32
  }
}

</mosaic_0001>

<llo_original>
// kernel: socre_net_forward.1
$region0: #{socre_net_forward.1}
  #allocation0 [shape = 'u32[]', space=smem, size = 0x4, offset = 0x4, fixed_abs, tag = 'smem constant byte address 0x4 - core index']
  #allocation1 [shape = 'u32[144,128]{1,0:T(1,128)}', space=vmem, size = 0x12000, scoped, tag = 'internal scratch']
  #allocation2 [shape = 'f32[108,512]{1,0:T(8,128)}', space=vmem, size = 0x38000, scoped, tag = 'scratch operand']
  %s0 = inlined_call_operand.vmem [shape: f32[2,4,512], index: 0, kind: input, shape index: {}]
  %s1 = inlined_call_operand.hbm [shape: f32[27,512], index: 1, kind: input, shape index: {}]
  %s2 = inlined_call_operand.hbm [shape: f32[4,108], index: 2, kind: input, shape index: {}]
  %s3 = inlined_call_operand.vmem [shape: f32[4,1], index: 3, kind: input, shape index: {}]
  %s4 = inlined_call_operand.vmem [shape: f32[4,1], index: 4, kind: input, shape index: {}]
  %s5 = inlined_call_operand.hbm [shape: f32[3], index: 5, kind: input, shape index: {}]
  %s6 = inlined_call_operand.vmem [shape: f32[2048,64], index: 6, kind: input, shape index: {}]
  %s7 = inlined_call_operand.hbm [shape: f32[1,64], index: 7, kind: input, shape index: {}]
  %s8 = inlined_call_operand.hbm [shape: f32[1,64], index: 8, kind: input, shape index: {}]
  %s9 = inlined_call_operand.hbm [shape: f32[1,64], index: 9, kind: input, shape index: {}]
  %s10 = inlined_call_operand.hbm [shape: f32[64,32], index: 10, kind: input, shape index: {}]
  %s11 = inlined_call_operand.hbm [shape: f32[32,64], index: 11, kind: input, shape index: {}]
  %s12 = inlined_call_operand.vmem [shape: f32[64,5], index: 12, kind: input, shape index: {}]
  %s13 = inlined_call_operand.hbm [shape: f32[1,5], index: 13, kind: input, shape index: {}]
  %s14 = inlined_call_operand.vmem [shape: f32[2,1,512], index: 14, kind: output, shape index: {0}]
  %s15 = inlined_call_operand.vmem [shape: f32[2,1,2048], index: 15, kind: output, shape index: {1}]
  %s16 = inlined_call_operand.hbm [shape: f32[2,1,5], index: 16, kind: output, shape index: {2}]
  %17 = xla_tuple %s14, %s15, %s16
  %s18 = sld [smem:[#allocation0]]
  $region141: #{socre_net_forward.1} parent=0
    _
  %s20 = ssub.s32 1, %s18
  %s21 = scalar_select 0, %s20, %s18
  $region1: #{socre_net_forward.1} parent=0
    #allocation3 [shape = 'u8[65536]{0}', space=vmem, size = 0x10000, scoped, tag = 'input window, operand 1, single buffered']
    #allocation4 [shape = 's32[2]{0}', space=sflag, size = 0x8, scoped, tag = 'scoped memory for socre_net_forward.1']
    #allocation5 [shape = 's32[2]{0}', space=sflag, size = 0x8, scoped, tag = 'scoped memory for socre_net_forward.1']
    #allocation6 [shape = 's32[2]{0}', space=sflag, size = 0x8, scoped, tag = 'scoped memory for socre_net_forward.1']
    #allocation7 [shape = 'u8[2048]{0}', space=vmem, size = 0x800, scoped, tag = 'input window, operand 2, single buffered']
    #allocation8 [shape = 's32[1]{0}', space=sflag, size = 0x4, scoped, tag = 'scoped memory for socre_net_forward.1']
    #allocation9 [shape = 'u8[512]{0}', space=smem, size = 0x200, scoped, tag = 'input window, operand 5, single buffered']
    #allocation10 [shape = 'u8[512]{0}', space=vmem, size = 0x400, scoped, tag = 'input window, operand 7, single buffered']
    #allocation11 [shape = 'u8[512]{0}', space=vmem, size = 0x400, scoped, tag = 'input window, operand 8, single buffered']
    #allocation12 [shape = 's32[1]{0}', space=sflag, size = 0x4, scoped, tag = 'scoped memory for socre_net_forward.1']
    #allocation13 [shape = 'u8[512]{0}', space=vmem, size = 0x400, scoped, tag = 'input window, operand 9, single buffered']
    #allocation14 [shape = 'u8[32768]{0}', space=vmem, size = 0x8000, scoped, tag = 'input window, operand 10, single buffered']
    #allocation15 [shape = 's32[1]{0}', space=sflag, size = 0x4, scoped, tag = 'scoped memory for socre_net_forward.1']
    #allocation16 [shape = 'u8[16384]{0}', space=vmem, size = 0x4000, scoped, tag = 'input window, operand 11, single buffered']
    #allocation17 [shape = 'u8[512]{0}', space=vmem, size = 0x400, scoped, tag = 'input window, operand 13, single buffered']
    #allocation18 [shape = 's32[1]{0}', space=sflag, size = 0x4, scoped, tag = 'scoped memory for socre_net_forward.1']
    #allocation19 [shape = 'u8[1024]{0}', space=vmem, size = 0x400, scoped, tag = 'output window, operand 2']
    %22 = vsyncpa [#allocation4], 0
    %23 = vsyncpa [#allocation8], 0
    %24 = vsyncpa [#allocation6], 0
    %25 = vsyncpa [#allocation12], 0
    %26 = vsyncpa [#allocation15], 0
    %27 = vsyncpa [#allocation18], 0
    %28 = vsyncpa [#allocation5], 0
    %s29 = scalar_lea.sflag [#allocation5], 1
    %30 = vsyncpa %s29, 0
    loop: start=0, step=1, limit=4
    $region2: #{socre_net_forward.1} parent=1 // loop_pre_header
      _
    $region3: #{socre_net_forward.1} parent=1 // loop_header
      %s32 = sphi 0, %s36
      %p33 = scmp.ge.s32.totalorder %s32, 4
      %s42 = sphi 0, %s44
      %s45 = sphi 0, %s42
      %s46 = sphi 0, %s45
      %s62 = sphi 0, %s46
      %s66 = sphi 0, %s66
      %s68 = sphi 0, %s66
      %s69 = sphi 0, %s68
      %s83 = sphi 0, %s69
      %s87 = sphi 0, %s87
      %s89 = sphi 0, %s87
      %s90 = sphi 0, %s89
      %s104 = sphi 0, %s90
      %s108 = sphi 0, %s108
      %s110 = sphi 0, %s108
      %s111 = sphi 0, %s110
      %s125 = sphi 0, %s111
      %s129 = sphi 0, %s129
      %s131 = sphi 0, %s129
      %s132 = sphi 0, %s131
      %s146 = sphi 0, %s132
      %s150 = sphi 0, %s150
      %s152 = sphi 0, %s150
      %s153 = sphi 0, %s152
      %s167 = sphi 0, %s153
      %s171 = sphi 0, %s171
      %s173 = sphi 0, %s171
      %s174 = sphi 0, %s173
      %s188 = sphi 0, %s174
      %s192 = sphi 0, %s192
      %s194 = sphi 0, %s192
      %s195 = sphi 0, %s194
      %s209 = sphi 0, %s195
      %s213 = sphi 0, %s213
      %s215 = sphi 0, %s213
      %s216 = sphi 0, %s215
      %s230 = sphi 0, %s216
      %s234 = sphi 0, %s234
      %s236 = sphi 0, %s234
      %s237 = sphi 0, %s236
      %s251 = sphi 0, %s237
      %s255 = sphi 0, %s255
      %s257 = sphi 0, %s255
      %s258 = sphi 0, %s257
      %s272 = sphi 0, %s258
      %s276 = sphi 0, %s276
      %s278 = sphi 0, %s276
      %s279 = sphi 0, %s278
      %s293 = sphi 0, %s279
      %s297 = sphi 0, %s297
      %s299 = sphi 0, %s297
      %s300 = sphi 0, %s299
      %s314 = sphi 0, %s300
      %s318 = sphi 0, %s318
      %s320 = sphi 0, %s318
      %s321 = sphi 0, %s320
      %s335 = sphi 0, %s321
      %s341 = sphi 0, %s343
      %s344 = sphi 0, %s341
      %s345 = sphi 0, %s344
      %s361 = sphi 0, %s345
      %s367 = sphi 0, %s369
      %s370 = sphi 0, %s367
      %s371 = sphi 0, %s370
      %s387 = sphi 0, %s371
      %s393 = sphi 0, %s395
      %s396 = sphi 0, %s393
      %s397 = sphi 0, %s396
      %s413 = sphi 0, %s397
    $region4: #{socre_net_forward.1} parent=1 // loop_header_branch
      %35 = sbr.rel (%p33) target = $region8
    $region5: #{socre_net_forward.1} parent=1 // loop_body
      %s37 = ssub.s32 %s32, 1
      %s38 = ssub.s32 %s32, 2
      %s39 = sadd.s32 %s32, 1
      %s40 = ssub.s32 %s32, %s39
      %p41 = scmp.eq.s32.totalorder %s40, 0
      %s43 = sadd.s32 %s42, 1
      %s44 = scalar_select %p41, %s42, %s43
      %p47 = pneg %p41
      %p48 = scmp.eq.s32.totalorder %s32, 1
      %p49 = por %p47, %p48
      %p50 = scmp.ne.s32.totalorder %s42, %s45
      %p51 = scmp.eq.s32.totalorder %s32, 0
      %p52 = por %p50, %p51
      %p53 = scmp.ne.s32.totalorder %s42, %s45
      %p54 = scmp.eq.s32.totalorder %s37, 1
      %p55 = por %p53, %p54
      %p56 = scmp.ne.s32.totalorder %s45, %s46
      %p57 = scmp.eq.s32.totalorder %s37, 0
      %p58 = por %p56, %p57
      %p59 = scmp.ne.s32.totalorder %s45, %s46
      %p60 = scmp.eq.s32.totalorder %s38, 1
      %p61 = por %p59, %p60
      %p63 = scmp.ne.s32.totalorder %s46, %s62
      %p64 = scmp.eq.s32.totalorder %s38, 0
      %p65 = por %p63, %p64
      %s67 = sadd.s32 %s66, 1
      %p70 = scmp.eq.s32.totalorder %s32, 1
      %p71 = scmp.ne.s32.totalorder %s66, %s68
      %p72 = scmp.eq.s32.totalorder %s32, 0
      %p73 = por %p71, %p72
      %p74 = scmp.ne.s32.totalorder %s66, %s68
      %p75 = scmp.eq.s32.totalorder %s37, 1
      %p76 = por %p74, %p75
      %p77 = scmp.ne.s32.totalorder %s68, %s69
      %p78 = scmp.eq.s32.totalorder %s37, 0
      %p79 = por %p77, %p78
      %p80 = scmp.ne.s32.totalorder %s68, %s69
      %p81 = scmp.eq.s32.totalorder %s38, 1
      %p82 = por %p80, %p81
      %p84 = scmp.ne.s32.totalorder %s69, %s83
      %p85 = scmp.eq.s32.totalorder %s38, 0
      %p86 = por %p84, %p85
      %s88 = sadd.s32 %s87, 1
      %p91 = scmp.eq.s32.totalorder %s32, 1
      %p92 = scmp.ne.s32.totalorder %s87, %s89
      %p93 = scmp.eq.s32.totalorder %s32, 0
      %p94 = por %p92, %p93
      %p95 = scmp.ne.s32.totalorder %s87, %s89
      %p96 = scmp.eq.s32.totalorder %s37, 1
      %p97 = por %p95, %p96
      %p98 = scmp.ne.s32.totalorder %s89, %s90
      %p99 = scmp.eq.s32.totalorder %s37, 0
      %p100 = por %p98, %p99
      %p101 = scmp.ne.s32.totalorder %s89, %s90
      %p102 = scmp.eq.s32.totalorder %s38, 1
      %p103 = por %p101, %p102
      %p105 = scmp.ne.s32.totalorder %s90, %s104
      %p106 = scmp.eq.s32.totalorder %s38, 0
      %p107 = por %p105, %p106
      %s109 = sadd.s32 %s108, 1
      %p112 = scmp.eq.s32.totalorder %s32, 1
      %p113 = scmp.ne.s32.totalorder %s108, %s110
      %p114 = scmp.eq.s32.totalorder %s32, 0
      %p115 = por %p113, %p114
      %p116 = scmp.ne.s32.totalorder %s108, %s110
      %p117 = scmp.eq.s32.totalorder %s37, 1
      %p118 = por %p116, %p117
      %p119 = scmp.ne.s32.totalorder %s110, %s111
      %p120 = scmp.eq.s32.totalorder %s37, 0
      %p121 = por %p119, %p120
      %p122 = scmp.ne.s32.totalorder %s110, %s111
      %p123 = scmp.eq.s32.totalorder %s38, 1
      %p124 = por %p122, %p123
      %p126 = scmp.ne.s32.totalorder %s111, %s125
      %p127 = scmp.eq.s32.totalorder %s38, 0
      %p128 = por %p126, %p127
      %s130 = sadd.s32 %s129, 1
      %p133 = scmp.eq.s32.totalorder %s32, 1
      %p134 = scmp.ne.s32.totalorder %s129, %s131
      %p135 = scmp.eq.s32.totalorder %s32, 0
      %p136 = por %p134, %p135
      %p137 = scmp.ne.s32.totalorder %s129, %s131
      %p138 = scmp.eq.s32.totalorder %s37, 1
      %p139 = por %p137, %p138
      %p140 = scmp.ne.s32.totalorder %s131, %s132
      %p141 = scmp.eq.s32.totalorder %s37, 0
      %p142 = por %p140, %p141
      %p143 = scmp.ne.s32.totalorder %s131, %s132
      %p144 = scmp.eq.s32.totalorder %s38, 1
      %p145 = por %p143, %p144
      %p147 = scmp.ne.s32.totalorder %s132, %s146
      %p148 = scmp.eq.s32.totalorder %s38, 0
      %p149 = por %p147, %p148
      %s151 = sadd.s32 %s150, 1
      %p154 = scmp.eq.s32.totalorder %s32, 1
      %p155 = scmp.ne.s32.totalorder %s150, %s152
      %p156 = scmp.eq.s32.totalorder %s32, 0
      %p157 = por %p155, %p156
      %p158 = scmp.ne.s32.totalorder %s150, %s152
      %p159 = scmp.eq.s32.totalorder %s37, 1
      %p160 = por %p158, %p159
      %p161 = scmp.ne.s32.totalorder %s152, %s153
      %p162 = scmp.eq.s32.totalorder %s37, 0
      %p163 = por %p161, %p162
      %p164 = scmp.ne.s32.totalorder %s152, %s153
      %p165 = scmp.eq.s32.totalorder %s38, 1
      %p166 = por %p164, %p165
      %p168 = scmp.ne.s32.totalorder %s153, %s167
      %p169 = scmp.eq.s32.totalorder %s38, 0
      %p170 = por %p168, %p169
      %s172 = sadd.s32 %s171, 1
      %p175 = scmp.eq.s32.totalorder %s32, 1
      %p176 = scmp.ne.s32.totalorder %s171, %s173
      %p177 = scmp.eq.s32.totalorder %s32, 0
      %p178 = por %p176, %p177
      %p179 = scmp.ne.s32.totalorder %s171, %s173
      %p180 = scmp.eq.s32.totalorder %s37, 1
      %p181 = por %p179, %p180
      %p182 = scmp.ne.s32.totalorder %s173, %s174
      %p183 = scmp.eq.s32.totalorder %s37, 0
      %p184 = por %p182, %p183
      %p185 = scmp.ne.s32.totalorder %s173, %s174
      %p186 = scmp.eq.s32.totalorder %s38, 1
      %p187 = por %p185, %p186
      %p189 = scmp.ne.s32.totalorder %s174, %s188
      %p190 = scmp.eq.s32.totalorder %s38, 0
      %p191 = por %p189, %p190
      %s193 = sadd.s32 %s192, 1
      %p196 = scmp.eq.s32.totalorder %s32, 1
      %p197 = scmp.ne.s32.totalorder %s192, %s194
      %p198 = scmp.eq.s32.totalorder %s32, 0
      %p199 = por %p197, %p198
      %p200 = scmp.ne.s32.totalorder %s192, %s194
      %p201 = scmp.eq.s32.totalorder %s37, 1
      %p202 = por %p200, %p201
      %p203 = scmp.ne.s32.totalorder %s194, %s195
      %p204 = scmp.eq.s32.totalorder %s37, 0
      %p205 = por %p203, %p204
      %p206 = scmp.ne.s32.totalorder %s194, %s195
      %p207 = scmp.eq.s32.totalorder %s38, 1
      %p208 = por %p206, %p207
      %p210 = scmp.ne.s32.totalorder %s195, %s209
      %p211 = scmp.eq.s32.totalorder %s38, 0
      %p212 = por %p210, %p211
      %s214 = sadd.s32 %s213, 1
      %p217 = scmp.eq.s32.totalorder %s32, 1
      %p218 = scmp.ne.s32.totalorder %s213, %s215
      %p219 = scmp.eq.s32.totalorder %s32, 0
      %p220 = por %p218, %p219
      %p221 = scmp.ne.s32.totalorder %s213, %s215
      %p222 = scmp.eq.s32.totalorder %s37, 1
      %p223 = por %p221, %p222
      %p224 = scmp.ne.s32.totalorder %s215, %s216
      %p225 = scmp.eq.s32.totalorder %s37, 0
      %p226 = por %p224, %p225
      %p227 = scmp.ne.s32.totalorder %s215, %s216
      %p228 = scmp.eq.s32.totalorder %s38, 1
      %p229 = por %p227, %p228
      %p231 = scmp.ne.s32.totalorder %s216, %s230
      %p232 = scmp.eq.s32.totalorder %s38, 0
      %p233 = por %p231, %p232
      %s235 = sadd.s32 %s234, 1
      %p238 = scmp.eq.s32.totalorder %s32, 1
      %p239 = scmp.ne.s32.totalorder %s234, %s236
      %p240 = scmp.eq.s32.totalorder %s32, 0
      %p241 = por %p239, %p240
      %p242 = scmp.ne.s32.totalorder %s234, %s236
      %p243 = scmp.eq.s32.totalorder %s37, 1
      %p244 = por %p242, %p243
      %p245 = scmp.ne.s32.totalorder %s236, %s237
      %p246 = scmp.eq.s32.totalorder %s37, 0
      %p247 = por %p245, %p246
      %p248 = scmp.ne.s32.totalorder %s236, %s237
      %p249 = scmp.eq.s32.totalorder %s38, 1
      %p250 = por %p248, %p249
      %p252 = scmp.ne.s32.totalorder %s237, %s251
      %p253 = scmp.eq.s32.totalorder %s38, 0
      %p254 = por %p252, %p253
      %s256 = sadd.s32 %s255, 1
      %p259 = scmp.eq.s32.totalorder %s32, 1
      %p260 = scmp.ne.s32.totalorder %s255, %s257
      %p261 = scmp.eq.s32.totalorder %s32, 0
      %p262 = por %p260, %p261
      %p263 = scmp.ne.s32.totalorder %s255, %s257
      %p264 = scmp.eq.s32.totalorder %s37, 1
      %p265 = por %p263, %p264
      %p266 = scmp.ne.s32.totalorder %s257, %s258
      %p267 = scmp.eq.s32.totalorder %s37, 0
      %p268 = por %p266, %p267
      %p269 = scmp.ne.s32.totalorder %s257, %s258
      %p270 = scmp.eq.s32.totalorder %s38, 1
      %p271 = por %p269, %p270
      %p273 = scmp.ne.s32.totalorder %s258, %s272
      %p274 = scmp.eq.s32.totalorder %s38, 0
      %p275 = por %p273, %p274
      %s277 = sadd.s32 %s276, 1
      %p280 = scmp.eq.s32.totalorder %s32, 1
      %p281 = scmp.ne.s32.totalorder %s276, %s278
      %p282 = scmp.eq.s32.totalorder %s32, 0
      %p283 = por %p281, %p282
      %p284 = scmp.ne.s32.totalorder %s276, %s278
      %p285 = scmp.eq.s32.totalorder %s37, 1
      %p286 = por %p284, %p285
      %p287 = scmp.ne.s32.totalorder %s278, %s279
      %p288 = scmp.eq.s32.totalorder %s37, 0
      %p289 = por %p287, %p288
      %p290 = scmp.ne.s32.totalorder %s278, %s279
      %p291 = scmp.eq.s32.totalorder %s38, 1
      %p292 = por %p290, %p291
      %p294 = scmp.ne.s32.totalorder %s279, %s293
      %p295 = scmp.eq.s32.totalorder %s38, 0
      %p296 = por %p294, %p295
      %s298 = sadd.s32 %s297, 1
      %p301 = scmp.eq.s32.totalorder %s32, 1
      %p302 = scmp.ne.s32.totalorder %s297, %s299
      %p303 = scmp.eq.s32.totalorder %s32, 0
      %p304 = por %p302, %p303
      %p305 = scmp.ne.s32.totalorder %s297, %s299
      %p306 = scmp.eq.s32.totalorder %s37, 1
      %p307 = por %p305, %p306
      %p308 = scmp.ne.s32.totalorder %s299, %s300
      %p309 = scmp.eq.s32.totalorder %s37, 0
      %p310 = por %p308, %p309
      %p311 = scmp.ne.s32.totalorder %s299, %s300
      %p312 = scmp.eq.s32.totalorder %s38, 1
      %p313 = por %p311, %p312
      %p315 = scmp.ne.s32.totalorder %s300, %s314
      %p316 = scmp.eq.s32.totalorder %s38, 0
      %p317 = por %p315, %p316
      %s319 = sadd.s32 %s318, 1
      %p322 = scmp.eq.s32.totalorder %s32, 1
      %p323 = scmp.ne.s32.totalorder %s318, %s320
      %p324 = scmp.eq.s32.totalorder %s32, 0
      %p325 = por %p323, %p324
      %p326 = scmp.ne.s32.totalorder %s318, %s320
      %p327 = scmp.eq.s32.totalorder %s37, 1
      %p328 = por %p326, %p327
      %p329 = scmp.ne.s32.totalorder %s320, %s321
      %p330 = scmp.eq.s32.totalorder %s37, 0
      %p331 = por %p329, %p330
      %p332 = scmp.ne.s32.totalorder %s320, %s321
      %p333 = scmp.eq.s32.totalorder %s38, 1
      %p334 = por %p332, %p333
      %p336 = scmp.ne.s32.totalorder %s321, %s335
      %p337 = scmp.eq.s32.totalorder %s38, 0
      %p338 = por %p336, %p337
      %s339 = ssub.s32 %s32, %s39
      %p340 = scmp.eq.s32.totalorder %s339, 0
      %s342 = sadd.s32 %s341, 1
      %s343 = scalar_select %p340, %s341, %s342
      %p346 = pneg %p340
      %p347 = scmp.eq.s32.totalorder %s32, 1
      %p348 = por %p346, %p347
      %p349 = scmp.ne.s32.totalorder %s341, %s344
      %p350 = scmp.eq.s32.totalorder %s32, 0
      %p351 = por %p349, %p350
      %p352 = scmp.ne.s32.totalorder %s341, %s344
      %p353 = scmp.eq.s32.totalorder %s37, 1
      %p354 = por %p352, %p353
      %p355 = scmp.ne.s32.totalorder %s344, %s345
      %p356 = scmp.eq.s32.totalorder %s37, 0
      %p357 = por %p355, %p356
      %p358 = scmp.ne.s32.totalorder %s344, %s345
      %p359 = scmp.eq.s32.totalorder %s38, 1
      %p360 = por %p358, %p359
      %p362 = scmp.ne.s32.totalorder %s345, %s361
      %p363 = scmp.eq.s32.totalorder %s38, 0
      %p364 = por %p362, %p363
      %s365 = ssub.s32 %s32, %s39
      %p366 = scmp.eq.s32.totalorder %s365, 0
      %s368 = sadd.s32 %s367, 1
      %s369 = scalar_select %p366, %s367, %s368
      %p372 = pneg %p366
      %p373 = scmp.eq.s32.totalorder %s32, 1
      %p374 = por %p372, %p373
      %p375 = scmp.ne.s32.totalorder %s367, %s370
      %p376 = scmp.eq.s32.totalorder %s32, 0
      %p377 = por %p375, %p376
      %p378 = scmp.ne.s32.totalorder %s367, %s370
      %p379 = scmp.eq.s32.totalorder %s37, 1
      %p380 = por %p378, %p379
      %p381 = scmp.ne.s32.totalorder %s370, %s371
      %p382 = scmp.eq.s32.totalorder %s37, 0
      %p383 = por %p381, %p382
      %p384 = scmp.ne.s32.totalorder %s370, %s371
      %p385 = scmp.eq.s32.totalorder %s38, 1
      %p386 = por %p384, %p385
      %p388 = scmp.ne.s32.totalorder %s371, %s387
      %p389 = scmp.eq.s32.totalorder %s38, 0
      %p390 = por %p388, %p389
      %s391 = ssub.s32 %s32, %s39
      %p392 = scmp.eq.s32.totalorder %s391, 0
      %s394 = sadd.s32 %s393, 1
      %s395 = scalar_select %p392, %s393, %s394
      %p398 = pneg %p392
      %p399 = scmp.eq.s32.totalorder %s32, 1
      %p400 = por %p398, %p399
      %p401 = scmp.ne.s32.totalorder %s393, %s396
      %p402 = scmp.eq.s32.totalorder %s32, 0
      %p403 = por %p401, %p402
      %p404 = scmp.ne.s32.totalorder %s393, %s396
      %p405 = scmp.eq.s32.totalorder %s37, 1
      %p406 = por %p404, %p405
      %p407 = scmp.ne.s32.totalorder %s396, %s397
      %p408 = scmp.eq.s32.totalorder %s37, 0
      %p409 = por %p407, %p408
      %p410 = scmp.ne.s32.totalorder %s396, %s397
      %p411 = scmp.eq.s32.totalorder %s38, 1
      %p412 = por %p410, %p411
      %p414 = scmp.ne.s32.totalorder %s397, %s413
      %p415 = scmp.eq.s32.totalorder %s38, 0
      %p416 = por %p414, %p415
      %p417 = scmp.le.s32.totalorder 1, %s32
      %p418 = scmp.lt.s32.totalorder %s32, 3
      %p419 = pnand %p417, %p418
      %p420 = pneg %p419
      // Predicated region
      $region9: #{socre_net_forward.1} parent=5 // pred_check
        _
      $region10: #{socre_net_forward.1} parent=5 // pred_check_branch
        %422 = sbr.rel (%p419) target = $region12
      $region11: #{socre_net_forward.1} parent=5 // pred_region
        %s423 = ssub.s32 %s32, 1
        // Predicated region
        $region13: #{socre_net_forward.1} parent=11 // pred_check
          %p424 = pneg %p79
        $region14: #{socre_net_forward.1} parent=11 // pred_check_branch
          %426 = sbr.rel (%p424) target = $region16
        $region15: #{socre_net_forward.1} parent=11 // pred_region
          %s428 = ssub.s32 2048, 2048
          %429 = vsyncadd [#allocation4], %s428
          %s430 = sshll.u32 [#allocation3], 4
          %s431 = int_to_ptr.vmem [resolvable:$true] %s430
          %436 = dma.hbm_to_vmem [thread:$0]  %s1, 2048, %s431, [#allocation4], 512, 512, 32
        $region16: #{socre_net_forward.1} parent=11 // pred_fallthru
          _
        // Predicated region
        $region17: #{socre_net_forward.1} parent=11 // pred_check
          %p437 = pneg %p100
        $region18: #{socre_net_forward.1} parent=11 // pred_check_branch
          %439 = sbr.rel (%p437) target = $region20
        $region19: #{socre_net_forward.1} parent=11 // pred_region
          %s441 = ssub.s32 64, 64
          %442 = vsyncadd [#allocation8], %s441
          %s444 = sshll.u32 [#allocation7], 4
          %s445 = int_to_ptr.vmem [resolvable:$true] %s444
          %447 = dma.hbm_to_vmem [thread:$0]  %s2, 64, %s445, [#allocation8]
        $region20: #{socre_net_forward.1} parent=11 // pred_fallthru
          _
        // Predicated region
        $region21: #{socre_net_forward.1} parent=11 // pred_check
          %p448 = pneg %p121
        $region22: #{socre_net_forward.1} parent=11 // pred_check_branch
          %450 = sbr.rel (%p448) target = $region24
        $region23: #{socre_net_forward.1} parent=11 // pred_region
          _
        $region24: #{socre_net_forward.1} parent=11 // pred_fallthru
          _
        // Predicated region
        $region25: #{socre_net_forward.1} parent=11 // pred_check
          %p451 = pneg %p142
        $region26: #{socre_net_forward.1} parent=11 // pred_check_branch
          %453 = sbr.rel (%p451) target = $region28
        $region27: #{socre_net_forward.1} parent=11 // pred_region
          _
        $region28: #{socre_net_forward.1} parent=11 // pred_fallthru
          _
        // Predicated region
        $region29: #{socre_net_forward.1} parent=11 // pred_check
          %p454 = pneg %p163
        $region30: #{socre_net_forward.1} parent=11 // pred_check_branch
          %456 = sbr.rel (%p454) target = $region32
        $region31: #{socre_net_forward.1} parent=11 // pred_region
          %s458 = ssub.s32 16, 16
          %459 = vsyncadd [#allocation6], %s458
          %462 = dma.hbm_to_smem %s5, 16, [#allocation9], [#allocation6]
        $region32: #{socre_net_forward.1} parent=11 // pred_fallthru
          _
        // Predicated region
        $region33: #{socre_net_forward.1} parent=11 // pred_check
          %p463 = pneg %p184
        $region34: #{socre_net_forward.1} parent=11 // pred_check_branch
          %465 = sbr.rel (%p463) target = $region36
        $region35: #{socre_net_forward.1} parent=11 // pred_region
          _
        $region36: #{socre_net_forward.1} parent=11 // pred_fallthru
          _
        // Predicated region
        $region37: #{socre_net_forward.1} parent=11 // pred_check
          %p466 = pneg %p205
        $region38: #{socre_net_forward.1} parent=11 // pred_check_branch
          %468 = sbr.rel (%p466) target = $region40
        $region39: #{socre_net_forward.1} parent=11 // pred_region
          %s470 = ssub.s32 16, 16
          %471 = vsyncadd [#allocation8], %s470
          %s473 = sshll.u32 [#allocation10], 4
          %s474 = int_to_ptr.vmem [resolvable:$true] %s473
          %476 = dma.hbm_to_vmem [thread:$0]  %s7, 16, %s474, [#allocation8]
        $region40: #{socre_net_forward.1} parent=11 // pred_fallthru
          _
        // Predicated region
        $region41: #{socre_net_forward.1} parent=11 // pred_check
          %p477 = pneg %p226
        $region42: #{socre_net_forward.1} parent=11 // pred_check_branch
          %479 = sbr.rel (%p477) target = $region44
        $region43: #{socre_net_forward.1} parent=11 // pred_region
          %s481 = ssub.s32 16, 16
          %482 = vsyncadd [#allocation12], %s481
          %s484 = sshll.u32 [#allocation11], 4
          %s485 = int_to_ptr.vmem [resolvable:$true] %s484
          %487 = dma.hbm_to_vmem [thread:$0]  %s8, 16, %s485, [#allocation12]
        $region44: #{socre_net_forward.1} parent=11 // pred_fallthru
          _
        // Predicated region
        $region45: #{socre_net_forward.1} parent=11 // pred_check
          %p488 = pneg %p247
        $region46: #{socre_net_forward.1} parent=11 // pred_check_branch
          %490 = sbr.rel (%p488) target = $region48
        $region47: #{socre_net_forward.1} parent=11 // pred_region
          %s492 = ssub.s32 16, 16
          %493 = vsyncadd [#allocation12], %s492
          %s495 = sshll.u32 [#allocation13], 4
          %s496 = int_to_ptr.vmem [resolvable:$true] %s495
          %498 = dma.hbm_to_vmem [thread:$0]  %s9, 16, %s496, [#allocation12]
        $region48: #{socre_net_forward.1} parent=11 // pred_fallthru
          _
        // Predicated region
        $region49: #{socre_net_forward.1} parent=11 // pred_check
          %p499 = pneg %p268
        $region50: #{socre_net_forward.1} parent=11 // pred_check_branch
          %501 = sbr.rel (%p499) target = $region52
        $region51: #{socre_net_forward.1} parent=11 // pred_region
          %s503 = ssub.s32 1024, 1024
          %504 = vsyncadd [#allocation15], %s503
          %s505 = sshll.u32 [#allocation14], 4
          %s506 = int_to_ptr.vmem [resolvable:$true] %s505
          %511 = dma.hbm_to_vmem [thread:$0]  %s10, 1024, %s506, [#allocation15], 128, 128, 8
        $region52: #{socre_net_forward.1} parent=11 // pred_fallthru
          _
        // Predicated region
        $region53: #{socre_net_forward.1} parent=11 // pred_check
          %p512 = pneg %p289
        $region54: #{socre_net_forward.1} parent=11 // pred_check_branch
          %514 = sbr.rel (%p512) target = $region56
        $region55: #{socre_net_forward.1} parent=11 // pred_region
          %s516 = ssub.s32 512, 512
          %517 = vsyncadd [#allocation15], %s516
          %s518 = sshll.u32 [#allocation16], 4
          %s519 = int_to_ptr.vmem [resolvable:$true] %s518
          %524 = dma.hbm_to_vmem [thread:$0]  %s11, 512, %s519, [#allocation15], 128, 128, 8
        $region56: #{socre_net_forward.1} parent=11 // pred_fallthru
          _
        // Predicated region
        $region57: #{socre_net_forward.1} parent=11 // pred_check
          %p525 = pneg %p310
        $region58: #{socre_net_forward.1} parent=11 // pred_check_branch
          %527 = sbr.rel (%p525) target = $region60
        $region59: #{socre_net_forward.1} parent=11 // pred_region
          _
        $region60: #{socre_net_forward.1} parent=11 // pred_fallthru
          _
        // Predicated region
        $region61: #{socre_net_forward.1} parent=11 // pred_check
          %p528 = pneg %p331
        $region62: #{socre_net_forward.1} parent=11 // pred_check_branch
          %530 = sbr.rel (%p528) target = $region64
        $region63: #{socre_net_forward.1} parent=11 // pred_region
          %s532 = ssub.s32 16, 16
          %533 = vsyncadd [#allocation18], %s532
          %s535 = sshll.u32 [#allocation17], 4
          %s536 = int_to_ptr.vmem [resolvable:$true] %s535
          %538 = dma.hbm_to_vmem [thread:$0]  %s13, 16, %s536, [#allocation18]
        $region64: #{socre_net_forward.1} parent=11 // pred_fallthru
          _
      $region12: #{socre_net_forward.1} parent=5 // pred_fallthru
        _
      %p539 = scmp.lt.s32.totalorder %s32, 2
      // Predicated region
      $region65: #{socre_net_forward.1} parent=5 // pred_check
        %p540 = pneg %p539
      $region66: #{socre_net_forward.1} parent=5 // pred_check_branch
        %542 = sbr.rel (%p540) target = $region68
      $region67: #{socre_net_forward.1} parent=5 // pred_region
        // Predicated region
        $region69: #{socre_net_forward.1} parent=67 // pred_check
          %p543 = pneg %p52
        $region70: #{socre_net_forward.1} parent=67 // pred_check_branch
          %545 = sbr.rel (%p543) target = $region72
        $region71: #{socre_net_forward.1} parent=67 // pred_region
          %p546 = scmp.lt.s32.totalorder %s32, 1
          %s547 = scalar_select %p546, %s32, 1
          %s548 = smul.addr %s547, 4
          %s549 = smul.addr %s548, 4
          %s550 = scalar_lea.vmem %s0, %s549
        $region72: #{socre_net_forward.1} parent=67 // pred_fallthru
          _
      $region68: #{socre_net_forward.1} parent=5 // pred_fallthru
        _
      %p551 = scmp.le.s32.totalorder 1, %s32
      %p552 = scmp.lt.s32.totalorder %s32, 3
      %p553 = pnand %p551, %p552
      %p554 = pneg %p553
      // Predicated region
      $region73: #{socre_net_forward.1} parent=5 // pred_check
        _
      $region74: #{socre_net_forward.1} parent=5 // pred_check_branch
        %556 = sbr.rel (%p553) target = $region76
      $region75: #{socre_net_forward.1} parent=5 // pred_region
        %s557 = ssub.s32 %s32, 1
        // Predicated region
        $region77: #{socre_net_forward.1} parent=75 // pred_check
          %p558 = pneg %p79
        $region78: #{socre_net_forward.1} parent=75 // pred_check_branch
          %560 = sbr.rel (%p558) target = $region80
        $region79: #{socre_net_forward.1} parent=75 // pred_region
          %561 = dma.done [#allocation4], 2048
        $region80: #{socre_net_forward.1} parent=75 // pred_fallthru
          _
        // Predicated region
        $region81: #{socre_net_forward.1} parent=75 // pred_check
          %p562 = pneg %p100
        $region82: #{socre_net_forward.1} parent=75 // pred_check_branch
          %564 = sbr.rel (%p562) target = $region84
        $region83: #{socre_net_forward.1} parent=75 // pred_region
          %565 = dma.done [#allocation8], 64
        $region84: #{socre_net_forward.1} parent=75 // pred_fallthru
          _
        // Predicated region
        $region85: #{socre_net_forward.1} parent=75 // pred_check
          %p566 = pneg %p163
        $region86: #{socre_net_forward.1} parent=75 // pred_check_branch
          %568 = sbr.rel (%p566) target = $region88
        $region87: #{socre_net_forward.1} parent=75 // pred_region
          %569 = dma.done [#allocation6], 16
        $region88: #{socre_net_forward.1} parent=75 // pred_fallthru
          _
        // Predicated region
        $region89: #{socre_net_forward.1} parent=75 // pred_check
          %p570 = pneg %p205
        $region90: #{socre_net_forward.1} parent=75 // pred_check_branch
          %572 = sbr.rel (%p570) target = $region92
        $region91: #{socre_net_forward.1} parent=75 // pred_region
          %573 = dma.done [#allocation8], 16
        $region92: #{socre_net_forward.1} parent=75 // pred_fallthru
          _
        // Predicated region
        $region93: #{socre_net_forward.1} parent=75 // pred_check
          %p574 = pneg %p226
        $region94: #{socre_net_forward.1} parent=75 // pred_check_branch
          %576 = sbr.rel (%p574) target = $region96
        $region95: #{socre_net_forward.1} parent=75 // pred_region
          %577 = dma.done [#allocation12], 16
        $region96: #{socre_net_forward.1} parent=75 // pred_fallthru
          _
        // Predicated region
        $region97: #{socre_net_forward.1} parent=75 // pred_check
          %p578 = pneg %p247
        $region98: #{socre_net_forward.1} parent=75 // pred_check_branch
          %580 = sbr.rel (%p578) target = $region100
        $region99: #{socre_net_forward.1} parent=75 // pred_region
          %581 = dma.done [#allocation12], 16
        $region100: #{socre_net_forward.1} parent=75 // pred_fallthru
          _
        // Predicated region
        $region101: #{socre_net_forward.1} parent=75 // pred_check
          %p582 = pneg %p268
        $region102: #{socre_net_forward.1} parent=75 // pred_check_branch
          %584 = sbr.rel (%p582) target = $region104
        $region103: #{socre_net_forward.1} parent=75 // pred_region
          %585 = dma.done [#allocation15], 1024
        $region104: #{socre_net_forward.1} parent=75 // pred_fallthru
          _
        // Predicated region
        $region105: #{socre_net_forward.1} parent=75 // pred_check
          %p586 = pneg %p289
        $region106: #{socre_net_forward.1} parent=75 // pred_check_branch
          %588 = sbr.rel (%p586) target = $region108
        $region107: #{socre_net_forward.1} parent=75 // pred_region
          %589 = dma.done [#allocation15], 512
        $region108: #{socre_net_forward.1} parent=75 // pred_fallthru
          _
        // Predicated region
        $region109: #{socre_net_forward.1} parent=75 // pred_check
          %p590 = pneg %p331
        $region110: #{socre_net_forward.1} parent=75 // pred_check_branch
          %592 = sbr.rel (%p590) target = $region112
        $region111: #{socre_net_forward.1} parent=75 // pred_region
          %593 = dma.done [#allocation18], 16
        $region112: #{socre_net_forward.1} parent=75 // pred_fallthru
          _
        %594 = sfence
        %p595 = scmp.lt.s32.totalorder %s37, 1
        %s596 = scalar_select %p595, %s37, 1
        %s597 = smul.addr %s596, 4
        %s598 = smul.addr %s597, 4
        %s599 = scalar_lea.vmem %s0, %s598
        %p600 = pneg %p58
        %p601 = pneg %p55
        %p602 = pneg %p79
        %p603 = pneg %p76
        %p604 = pneg %p100
        %p605 = pneg %p97
        %p606 = pneg %p121
        %p607 = pneg %p118
        %p608 = pneg %p142
        %p609 = pneg %p139
        %p610 = pneg %p163
        %p611 = pneg %p160
        %p612 = pneg %p184
        %p613 = pneg %p181
        %p614 = pneg %p205
        %p615 = pneg %p202
        %p616 = pneg %p226
        %p617 = pneg %p223
        %p618 = pneg %p247
        %p619 = pneg %p244
        %p620 = pneg %p268
        %p621 = pneg %p265
        %p622 = pneg %p289
        %p623 = pneg %p286
        %p624 = pneg %p310
        %p625 = pneg %p307
        %p626 = pneg %p331
        %p627 = pneg %p328
        %p628 = pneg %p357
        %p629 = pneg %p354
        %p630 = scmp.lt.s32.totalorder %s37, 1
        %s631 = scalar_select %p630, %s37, 1
        %s632 = smul.addr %s631, 4
        %s633 = scalar_lea.vmem %s14, %s632
        %p634 = pneg %p383
        %p635 = pneg %p380
        %p636 = scmp.lt.s32.totalorder %s37, 1
        %s637 = scalar_select %p636, %s37, 1
        %s638 = smul.addr %s637, 16
        %s639 = scalar_lea.vmem %s15, %s638
        %p640 = pneg %p409
        %p641 = pneg %p406
        %s642 = sand.u32 %s396, 1
        %s643 = scalar_lea.sflag [#allocation5], %s642
        %s644 = sand.u32 %s396, 1
        %s645 = scalar_lea.vmem [#allocation19], %s644
        %p646 = scmp.lt.s32.totalorder %s37, 1
        %s647 = scalar_select %p646, %s37, 1
        %s648 = smul.addr %s647, 4
        %s649 = smul.addr %s648, 4
        %s650 = scalar_lea.vmem %s0, %s649
        %p651 = scmp.lt.s32.totalorder %s37, 1
        %s652 = scalar_select %p651, %s37, 1
        %s653 = smul.addr %s652, 4
        %s654 = scalar_lea.vmem %s14, %s653
        %p655 = scmp.lt.s32.totalorder %s37, 1
        %s656 = scalar_select %p655, %s37, 1
        %s657 = smul.addr %s656, 16
        %s658 = scalar_lea.vmem %s15, %s657
        %v659 = vld [vmem:[%s650] sm:$0xff]
        %v660 = vld [vmem:[%s650 + $0x8] sm:$0xff]
        %v663 = vcombine.high %v659, %v659
        %v664 = vcombine.high %v660, %v660
        %vm667 = vcmask 1043456
        %v668 = vsel %vm667, %v659, 0.0
        %v669 = vsel %vm667, %v663, 0.0
        %v670 = vadd.f32 %v668, %v669
        %v671 = vsel %vm667, %v660, 0.0
        %v672 = vadd.f32 %v670, %v671
        %v673 = vsel %vm667, %v664, 0.0
        %v674 = vadd.f32 %v672, %v673
        %675 = vadd.xlane.f32.xlu0 %v674
        %v676 = vpop.xlane.xlu0 %675
        %v677 = vrot.slane %v676, 4
        %v678 = vadd.f32 %v676, %v677
        %v679 = vrot.slane %v678, 2
        %v680 = vadd.f32 %v678, %v679
        %v681 = vrot.slane %v680, 1
        %v682 = vadd.f32 %v680, %v681
        %s683 = vtos %v682
        %v684 = vstv %s683
        %v685 = vrcp.pop 2048.0
        %v686 = vmul.f32 %v684, %v685
        %v687 = vsub.f32 %v659, %v686
        %v688 = vsub.f32 %v660, %v686
        %v689 = vmul.f32 %v687, %v687
        %v690 = vmul.f32 %v688, %v688
        %v693 = vcombine.high %v689, %v689
        %v694 = vcombine.high %v690, %v690
        %v697 = vsel %vm667, %v689, 0.0
        %v698 = vsel %vm667, %v693, 0.0
        %v699 = vadd.f32 %v697, %v698
        %v700 = vsel %vm667, %v690, 0.0
        %v701 = vadd.f32 %v699, %v700
        %v702 = vsel %vm667, %v694, 0.0
        %v703 = vadd.f32 %v701, %v702
        %704 = vadd.xlane.f32.xlu0 %v703
        %v705 = vpop.xlane.xlu0 %704
        %v706 = vrot.slane %v705, 4
        %v707 = vadd.f32 %v705, %v706
        %v708 = vrot.slane %v707, 2
        %v709 = vadd.f32 %v707, %v708
        %v710 = vrot.slane %v709, 1
        %v711 = vadd.f32 %v709, %v710
        %s712 = vtos %v711
        %v713 = vstv %s712
        %v714 = vmul.f32 %v713, %v685
        %v715 = vadd.f32 %v714, 1e-05
        %v716 = vrsqrt.pop %v715
        %v717 = vmul.f32 %v687, %v716
        %v718 = vmul.f32 %v688, %v716
        %v721 = vcombine.high %v717, %v717
        %v722 = vcombine.high %v718, %v718
        %725 = vrot.lane.b32.xlu0 %v717, 73
        %v726 = vpop.permute.xlu0 %725
        %727 = vrot.lane.b32.xlu0 %v721, 73
        %v728 = vpop.permute.xlu0 %727
        %729 = vrot.lane.b32.xlu0 %v718, 73
        %v730 = vpop.permute.xlu0 %729
        %731 = vrot.lane.b32.xlu0 %v722, 73
        %v732 = vpop.permute.xlu0 %731
        %v733 = vlaneseq
        %v734 = vand.u32 %v733, 127
        %vm735 = vcmp.lt.s32.totalorder %v734, 73
        %v736 = vsel %vm735, %v730, %v732
        %v737 = vsel %vm735, %v728, %v730
        %v738 = vsel %vm735, %v726, %v728
        %v739 = vsel %vm735, %v732, %v726
        %v740 = vld [vmem:[#allocation3] ss:$8 sm:$0xf]
        %v742 = vlaneseq
        %v743 = vshrl.u32 %v742, 7
        %v744 = vsub.s32 0, %v743
        %v745 = vrot.slane %v740, %v744
        %v746 = vlaneseq
        %v747 = vshrl.u32 %v746, 7
        %v748 = vsub.s32 1, %v747
        %v749 = vrot.slane %v740, %v748
        %v750 = vlaneseq
        %v751 = vshrl.u32 %v750, 7
        %v752 = vsub.s32 2, %v751
        %v753 = vrot.slane %v740, %v752
        %v754 = vlaneseq
        %v755 = vshrl.u32 %v754, 7
        %v756 = vsub.s32 3, %v755
        %v757 = vrot.slane %v740, %v756
        %v762 = vmul.f32 %v739, %v745
        %v763 = vmul.f32 %v738, %v749
        %v764 = vmul.f32 %v737, %v753
        %v765 = vmul.f32 %v736, %v757
        %766 = vst [vmem:[#allocation2] sm:$0xf] %v762
        %767 = vst [vmem:[#allocation2 + $0x8] sm:$0xf] %v763
        %768 = vst [vmem:[#allocation2 + $0x10] sm:$0xf] %v764
        %769 = vst [vmem:[#allocation2 + $0x18] sm:$0xf] %v765
        %770 = vrot.lane.b32.xlu0 %v717, 72
        %v771 = vpop.permute.xlu0 %770
        %772 = vrot.lane.b32.xlu0 %v721, 72
        %v773 = vpop.permute.xlu0 %772
        %774 = vrot.lane.b32.xlu0 %v718, 72
        %v775 = vpop.permute.xlu0 %774
        %776 = vrot.lane.b32.xlu0 %v722, 72
        %v777 = vpop.permute.xlu0 %776
        %vm778 = vcmp.lt.s32.totalorder %v734, 72
        %v779 = vsel %vm778, %v775, %v777
        %v780 = vsel %vm778, %v773, %v775
        %v781 = vsel %vm778, %v771, %v773
        %v782 = vsel %vm778, %v777, %v771
        %s783 = scalar_lea.vmem [#allocation3], 1
        %v784 = vld [vmem:[%s783] ss:$8 sm:$0xf]
        %v786 = vlaneseq
        %v787 = vshrl.u32 %v786, 7
        %v788 = vsub.s32 0, %v787
        %v789 = vrot.slane %v784, %v788
        %v790 = vlaneseq
        %v791 = vshrl.u32 %v790, 7
        %v792 = vsub.s32 1, %v791
        %v793 = vrot.slane %v784, %v792
        %v794 = vlaneseq
        %v795 = vshrl.u32 %v794, 7
        %v796 = vsub.s32 2, %v795
        %v797 = vrot.slane %v784, %v796
        %v798 = vlaneseq
        %v799 = vshrl.u32 %v798, 7
        %v800 = vsub.s32 3, %v799
        %v801 = vrot.slane %v784, %v800
        %v806 = vmul.f32 %v782, %v789
        %v807 = vmul.f32 %v781, %v793
        %v808 = vmul.f32 %v780, %v797
        %v809 = vmul.f32 %v779, %v801
        %v814 = vrot.slane %v806, 4
        %v815 = vrot.slane %v807, 4
        %v816 = vrot.slane %v808, 4
        %v817 = vrot.slane %v809, 4
        %822 = vst [vmem:[#allocation2] sm:$0xf0] %v814
        %823 = vst [vmem:[#allocation2 + $0x8] sm:$0xf0] %v815
        %824 = vst [vmem:[#allocation2 + $0x10] sm:$0xf0] %v816
        %825 = vst [vmem:[#allocation2 + $0x18] sm:$0xf0] %v817
        %826 = vrot.lane.b32.xlu0 %v717, 71
        %v827 = vpop.permute.xlu0 %826
        %828 = vrot.lane.b32.xlu0 %v721, 71
        %v829 = vpop.permute.xlu0 %828
        %830 = vrot.lane.b32.xlu0 %v718, 71
        %v831 = vpop.permute.xlu0 %830
        %832 = vrot.lane.b32.xlu0 %v722, 71
        %v833 = vpop.permute.xlu0 %832
        %vm834 = vcmp.lt.s32.totalorder %v734, 71
        %v835 = vsel %vm834, %v831, %v833
        %v836 = vsel %vm834, %v829, %v831
        %v837 = vsel %vm834, %v827, %v829
        %v838 = vsel %vm834, %v833, %v827
        %s839 = scalar_lea.vmem [#allocation3], 2
        %v840 = vld [vmem:[%s839] ss:$8 sm:$0xf]
        %v842 = vlaneseq
        %v843 = vshrl.u32 %v842, 7
        %v844 = vsub.s32 0, %v843
        %v845 = vrot.slane %v840, %v844
        %v846 = vlaneseq
        %v847 = vshrl.u32 %v846, 7
        %v848 = vsub.s32 1, %v847
        %v849 = vrot.slane %v840, %v848
        %v850 = vlaneseq
        %v851 = vshrl.u32 %v850, 7
        %v852 = vsub.s32 2, %v851
        %v853 = vrot.slane %v840, %v852
        %v854 = vlaneseq
        %v855 = vshrl.u32 %v854, 7
        %v856 = vsub.s32 3, %v855
        %v857 = vrot.slane %v840, %v856
        %v862 = vmul.f32 %v838, %v845
        %v863 = vmul.f32 %v837, %v849
        %v864 = vmul.f32 %v836, %v853
        %v865 = vmul.f32 %v835, %v857
        %866 = vst [vmem:[#allocation2 + $0x20] sm:$0xf] %v862
        %867 = vst [vmem:[#allocation2 + $0x28] sm:$0xf] %v863
        %868 = vst [vmem:[#allocation2 + $0x30] sm:$0xf] %v864
        %869 = vst [vmem:[#allocation2 + $0x38] sm:$0xf] %v865
        %870 = vrot.lane.b32.xlu0 %v717, 65
        %v871 = vpop.permute.xlu0 %870
        %872 = vrot.lane.b32.xlu0 %v721, 65
        %v873 = vpop.permute.xlu0 %872
        %874 = vrot.lane.b32.xlu0 %v718, 65
        %v875 = vpop.permute.xlu0 %874
        %876 = vrot.lane.b32.xlu0 %v722, 65
        %v877 = vpop.permute.xlu0 %876
        %vm878 = vcmp.lt.s32.totalorder %v734, 65
        %v879 = vsel %vm878, %v875, %v877
        %v880 = vsel %vm878, %v873, %v875
        %v881 = vsel %vm878, %v871, %v873
        %v882 = vsel %vm878, %v877, %v871
        %s883 = scalar_lea.vmem [#allocation3], 3
        %v884 = vld [vmem:[%s883] ss:$8 sm:$0xf]
        %v886 = vlaneseq
        %v887 = vshrl.u32 %v886, 7
        %v888 = vsub.s32 0, %v887
        %v889 = vrot.slane %v884, %v888
        %v890 = vlaneseq
        %v891 = vshrl.u32 %v890, 7
        %v892 = vsub.s32 1, %v891
        %v893 = vrot.slane %v884, %v892
        %v894 = vlaneseq
        %v895 = vshrl.u32 %v894, 7
        %v896 = vsub.s32 2, %v895
        %v897 = vrot.slane %v884, %v896
        %v898 = vlaneseq
        %v899 = vshrl.u32 %v898, 7
        %v900 = vsub.s32 3, %v899
        %v901 = vrot.slane %v884, %v900
        %v906 = vmul.f32 %v882, %v889
        %v907 = vmul.f32 %v881, %v893
        %v908 = vmul.f32 %v880, %v897
        %v909 = vmul.f32 %v879, %v901
        %v914 = vrot.slane %v906, 4
        %v915 = vrot.slane %v907, 4
        %v916 = vrot.slane %v908, 4
        %v917 = vrot.slane %v909, 4
        %922 = vst [vmem:[#allocation2 + $0x20] sm:$0xf0] %v914
        %923 = vst [vmem:[#allocation2 + $0x28] sm:$0xf0] %v915
        %924 = vst [vmem:[#allocation2 + $0x30] sm:$0xf0] %v916
        %925 = vst [vmem:[#allocation2 + $0x38] sm:$0xf0] %v917
        %926 = vrot.lane.b32.xlu0 %v717, 64
        %v927 = vpop.permute.xlu0 %926
        %928 = vrot.lane.b32.xlu0 %v721, 64
        %v929 = vpop.permute.xlu0 %928
        %930 = vrot.lane.b32.xlu0 %v718, 64
        %v931 = vpop.permute.xlu0 %930
        %932 = vrot.lane.b32.xlu0 %v722, 64
        %v933 = vpop.permute.xlu0 %932
        %vm934 = vcmp.lt.s32.totalorder %v734, 64
        %v935 = vsel %vm934, %v931, %v933
        %v936 = vsel %vm934, %v929, %v931
        %v937 = vsel %vm934, %v927, %v929
        %v938 = vsel %vm934, %v933, %v927
        %s939 = scalar_lea.vmem [#allocation3], 4
        %v940 = vld [vmem:[%s939] ss:$8 sm:$0xf]
        %v942 = vlaneseq
        %v943 = vshrl.u32 %v942, 7
        %v944 = vsub.s32 0, %v943
        %v945 = vrot.slane %v940, %v944
        %v946 = vlaneseq
        %v947 = vshrl.u32 %v946, 7
        %v948 = vsub.s32 1, %v947
        %v949 = vrot.slane %v940, %v948
        %v950 = vlaneseq
        %v951 = vshrl.u32 %v950, 7
        %v952 = vsub.s32 2, %v951
        %v953 = vrot.slane %v940, %v952
        %v954 = vlaneseq
        %v955 = vshrl.u32 %v954, 7
        %v956 = vsub.s32 3, %v955
        %v957 = vrot.slane %v940, %v956
        %v962 = vmul.f32 %v938, %v945
        %v963 = vmul.f32 %v937, %v949
        %v964 = vmul.f32 %v936, %v953
        %v965 = vmul.f32 %v935, %v957
        %966 = vst [vmem:[#allocation2 + $0x40] sm:$0xf] %v962
        %967 = vst [vmem:[#allocation2 + $0x48] sm:$0xf] %v963
        %968 = vst [vmem:[#allocation2 + $0x50] sm:$0xf] %v964
        %969 = vst [vmem:[#allocation2 + $0x58] sm:$0xf] %v965
        %970 = vrot.lane.b32.xlu0 %v717, 63
        %v971 = vpop.permute.xlu0 %970
        %972 = vrot.lane.b32.xlu0 %v721, 63
        %v973 = vpop.permute.xlu0 %972
        %974 = vrot.lane.b32.xlu0 %v718, 63
        %v975 = vpop.permute.xlu0 %974
        %976 = vrot.lane.b32.xlu0 %v722, 63
        %v977 = vpop.permute.xlu0 %976
        %vm978 = vcmp.lt.s32.totalorder %v734, 63
        %v979 = vsel %vm978, %v975, %v977
        %v980 = vsel %vm978, %v973, %v975
        %v981 = vsel %vm978, %v971, %v973
        %v982 = vsel %vm978, %v977, %v971
        %s983 = scalar_lea.vmem [#allocation3], 5
        %v984 = vld [vmem:[%s983] ss:$8 sm:$0xf]
        %v986 = vlaneseq
        %v987 = vshrl.u32 %v986, 7
        %v988 = vsub.s32 0, %v987
        %v989 = vrot.slane %v984, %v988
        %v990 = vlaneseq
        %v991 = vshrl.u32 %v990, 7
        %v992 = vsub.s32 1, %v991
        %v993 = vrot.slane %v984, %v992
        %v994 = vlaneseq
        %v995 = vshrl.u32 %v994, 7
        %v996 = vsub.s32 2, %v995
        %v997 = vrot.slane %v984, %v996
        %v998 = vlaneseq
        %v999 = vshrl.u32 %v998, 7
        %v1000 = vsub.s32 3, %v999
        %v1001 = vrot.slane %v984, %v1000
        %v1006 = vmul.f32 %v982, %v989
        %v1007 = vmul.f32 %v981, %v993
        %v1008 = vmul.f32 %v980, %v997
        %v1009 = vmul.f32 %v979, %v1001
        %v1014 = vrot.slane %v1006, 4
        %v1015 = vrot.slane %v1007, 4
        %v1016 = vrot.slane %v1008, 4
        %v1017 = vrot.slane %v1009, 4
        %1022 = vst [vmem:[#allocation2 + $0x40] sm:$0xf0] %v1014
        %1023 = vst [vmem:[#allocation2 + $0x48] sm:$0xf0] %v1015
        %1024 = vst [vmem:[#allocation2 + $0x50] sm:$0xf0] %v1016
        %1025 = vst [vmem:[#allocation2 + $0x58] sm:$0xf0] %v1017
        %1026 = vrot.lane.b32.xlu0 %v717, 57
        %v1027 = vpop.permute.xlu0 %1026
        %1028 = vrot.lane.b32.xlu0 %v721, 57
        %v1029 = vpop.permute.xlu0 %1028
        %1030 = vrot.lane.b32.xlu0 %v718, 57
        %v1031 = vpop.permute.xlu0 %1030
        %1032 = vrot.lane.b32.xlu0 %v722, 57
        %v1033 = vpop.permute.xlu0 %1032
        %vm1034 = vcmp.lt.s32.totalorder %v734, 57
        %v1035 = vsel %vm1034, %v1031, %v1033
        %v1036 = vsel %vm1034, %v1029, %v1031
        %v1037 = vsel %vm1034, %v1027, %v1029
        %v1038 = vsel %vm1034, %v1033, %v1027
        %s1039 = scalar_lea.vmem [#allocation3], 6
        %v1040 = vld [vmem:[%s1039] ss:$8 sm:$0xf]
        %v1042 = vlaneseq
        %v1043 = vshrl.u32 %v1042, 7
        %v1044 = vsub.s32 0, %v1043
        %v1045 = vrot.slane %v1040, %v1044
        %v1046 = vlaneseq
        %v1047 = vshrl.u32 %v1046, 7
        %v1048 = vsub.s32 1, %v1047
        %v1049 = vrot.slane %v1040, %v1048
        %v1050 = vlaneseq
        %v1051 = vshrl.u32 %v1050, 7
        %v1052 = vsub.s32 2, %v1051
        %v1053 = vrot.slane %v1040, %v1052
        %v1054 = vlaneseq
        %v1055 = vshrl.u32 %v1054, 7
        %v1056 = vsub.s32 3, %v1055
        %v1057 = vrot.slane %v1040, %v1056
        %v1062 = vmul.f32 %v1038, %v1045
        %v1063 = vmul.f32 %v1037, %v1049
        %v1064 = vmul.f32 %v1036, %v1053
        %v1065 = vmul.f32 %v1035, %v1057
        %1066 = vst [vmem:[#allocation2 + $0x60] sm:$0xf] %v1062
        %1067 = vst [vmem:[#allocation2 + $0x68] sm:$0xf] %v1063
        %1068 = vst [vmem:[#allocation2 + $0x70] sm:$0xf] %v1064
        %1069 = vst [vmem:[#allocation2 + $0x78] sm:$0xf] %v1065
        %1070 = vrot.lane.b32.xlu0 %v717, 56
        %v1071 = vpop.permute.xlu0 %1070
        %1072 = vrot.lane.b32.xlu0 %v721, 56
        %v1073 = vpop.permute.xlu0 %1072
        %1074 = vrot.lane.b32.xlu0 %v718, 56
        %v1075 = vpop.permute.xlu0 %1074
        %1076 = vrot.lane.b32.xlu0 %v722, 56
        %v1077 = vpop.permute.xlu0 %1076
        %vm1078 = vcmp.lt.s32.totalorder %v734, 56
        %v1079 = vsel %vm1078, %v1075, %v1077
        %v1080 = vsel %vm1078, %v1073, %v1075
        %v1081 = vsel %vm1078, %v1071, %v1073
        %v1082 = vsel %vm1078, %v1077, %v1071
        %s1083 = scalar_lea.vmem [#allocation3], 7
        %v1084 = vld [vmem:[%s1083] ss:$8 sm:$0xf]
        %v1086 = vlaneseq
        %v1087 = vshrl.u32 %v1086, 7
        %v1088 = vsub.s32 0, %v1087
        %v1089 = vrot.slane %v1084, %v1088
        %v1090 = vlaneseq
        %v1091 = vshrl.u32 %v1090, 7
        %v1092 = vsub.s32 1, %v1091
        %v1093 = vrot.slane %v1084, %v1092
        %v1094 = vlaneseq
        %v1095 = vshrl.u32 %v1094, 7
        %v1096 = vsub.s32 2, %v1095
        %v1097 = vrot.slane %v1084, %v1096
        %v1098 = vlaneseq
        %v1099 = vshrl.u32 %v1098, 7
        %v1100 = vsub.s32 3, %v1099
        %v1101 = vrot.slane %v1084, %v1100
        %v1106 = vmul.f32 %v1082, %v1089
        %v1107 = vmul.f32 %v1081, %v1093
        %v1108 = vmul.f32 %v1080, %v1097
        %v1109 = vmul.f32 %v1079, %v1101
        %v1114 = vrot.slane %v1106, 4
        %v1115 = vrot.slane %v1107, 4
        %v1116 = vrot.slane %v1108, 4
        %v1117 = vrot.slane %v1109, 4
        %1122 = vst [vmem:[#allocation2 + $0x60] sm:$0xf0] %v1114
        %1123 = vst [vmem:[#allocation2 + $0x68] sm:$0xf0] %v1115
        %1124 = vst [vmem:[#allocation2 + $0x70] sm:$0xf0] %v1116
        %1125 = vst [vmem:[#allocation2 + $0x78] sm:$0xf0] %v1117
        %1126 = vrot.lane.b32.xlu0 %v717, 55
        %v1127 = vpop.permute.xlu0 %1126
        %1128 = vrot.lane.b32.xlu0 %v721, 55
        %v1129 = vpop.permute.xlu0 %1128
        %1130 = vrot.lane.b32.xlu0 %v718, 55
        %v1131 = vpop.permute.xlu0 %1130
        %1132 = vrot.lane.b32.xlu0 %v722, 55
        %v1133 = vpop.permute.xlu0 %1132
        %vm1134 = vcmp.lt.s32.totalorder %v734, 55
        %v1135 = vsel %vm1134, %v1131, %v1133
        %v1136 = vsel %vm1134, %v1129, %v1131
        %v1137 = vsel %vm1134, %v1127, %v1129
        %v1138 = vsel %vm1134, %v1133, %v1127
        %s1139 = scalar_lea.vmem [#allocation3], 32
        %v1140 = vld [vmem:[%s1139] ss:$8 sm:$0xf]
        %v1142 = vlaneseq
        %v1143 = vshrl.u32 %v1142, 7
        %v1144 = vsub.s32 0, %v1143
        %v1145 = vrot.slane %v1140, %v1144
        %v1146 = vlaneseq
        %v1147 = vshrl.u32 %v1146, 7
        %v1148 = vsub.s32 1, %v1147
        %v1149 = vrot.slane %v1140, %v1148
        %v1150 = vlaneseq
        %v1151 = vshrl.u32 %v1150, 7
        %v1152 = vsub.s32 2, %v1151
        %v1153 = vrot.slane %v1140, %v1152
        %v1154 = vlaneseq
        %v1155 = vshrl.u32 %v1154, 7
        %v1156 = vsub.s32 3, %v1155
        %v1157 = vrot.slane %v1140, %v1156
        %v1162 = vmul.f32 %v1138, %v1145
        %v1163 = vmul.f32 %v1137, %v1149
        %v1164 = vmul.f32 %v1136, %v1153
        %v1165 = vmul.f32 %v1135, %v1157
        %1166 = vst [vmem:[#allocation2 + $0x80] sm:$0xf] %v1162
        %1167 = vst [vmem:[#allocation2 + $0x88] sm:$0xf] %v1163
        %1168 = vst [vmem:[#allocation2 + $0x90] sm:$0xf] %v1164
        %1169 = vst [vmem:[#allocation2 + $0x98] sm:$0xf] %v1165
        %1170 = vrot.lane.b32.xlu0 %v717, 9
        %v1171 = vpop.permute.xlu0 %1170
        %1172 = vrot.lane.b32.xlu0 %v721, 9
        %v1173 = vpop.permute.xlu0 %1172
        %1174 = vrot.lane.b32.xlu0 %v718, 9
        %v1175 = vpop.permute.xlu0 %1174
        %1176 = vrot.lane.b32.xlu0 %v722, 9
        %v1177 = vpop.permute.xlu0 %1176
        %vm1178 = vcmp.lt.s32.totalorder %v734, 9
        %v1179 = vsel %vm1178, %v1175, %v1177
        %v1180 = vsel %vm1178, %v1173, %v1175
        %v1181 = vsel %vm1178, %v1171, %v1173
        %v1182 = vsel %vm1178, %v1177, %v1171
        %s1183 = scalar_lea.vmem [#allocation3], 33
        %v1184 = vld [vmem:[%s1183] ss:$8 sm:$0xf]
        %v1186 = vlaneseq
        %v1187 = vshrl.u32 %v1186, 7
        %v1188 = vsub.s32 0, %v1187
        %v1189 = vrot.slane %v1184, %v1188
        %v1190 = vlaneseq
        %v1191 = vshrl.u32 %v1190, 7
        %v1192 = vsub.s32 1, %v1191
        %v1193 = vrot.slane %v1184, %v1192
        %v1194 = vlaneseq
        %v1195 = vshrl.u32 %v1194, 7
        %v1196 = vsub.s32 2, %v1195
        %v1197 = vrot.slane %v1184, %v1196
        %v1198 = vlaneseq
        %v1199 = vshrl.u32 %v1198, 7
        %v1200 = vsub.s32 3, %v1199
        %v1201 = vrot.slane %v1184, %v1200
        %v1206 = vmul.f32 %v1182, %v1189
        %v1207 = vmul.f32 %v1181, %v1193
        %v1208 = vmul.f32 %v1180, %v1197
        %v1209 = vmul.f32 %v1179, %v1201
        %v1214 = vrot.slane %v1206, 4
        %v1215 = vrot.slane %v1207, 4
        %v1216 = vrot.slane %v1208, 4
        %v1217 = vrot.slane %v1209, 4
        %1222 = vst [vmem:[#allocation2 + $0x80] sm:$0xf0] %v1214
        %1223 = vst [vmem:[#allocation2 + $0x88] sm:$0xf0] %v1215
        %1224 = vst [vmem:[#allocation2 + $0x90] sm:$0xf0] %v1216
        %1225 = vst [vmem:[#allocation2 + $0x98] sm:$0xf0] %v1217
        %1226 = vrot.lane.b32.xlu0 %v717, 8
        %v1227 = vpop.permute.xlu0 %1226
        %1228 = vrot.lane.b32.xlu0 %v721, 8
        %v1229 = vpop.permute.xlu0 %1228
        %1230 = vrot.lane.b32.xlu0 %v718, 8
        %v1231 = vpop.permute.xlu0 %1230
        %1232 = vrot.lane.b32.xlu0 %v722, 8
        %v1233 = vpop.permute.xlu0 %1232
        %vm1234 = vcmp.lt.s32.totalorder %v734, 8
        %v1235 = vsel %vm1234, %v1231, %v1233
        %v1236 = vsel %vm1234, %v1229, %v1231
        %v1237 = vsel %vm1234, %v1227, %v1229
        %v1238 = vsel %vm1234, %v1233, %v1227
        %s1239 = scalar_lea.vmem [#allocation3], 34
        %v1240 = vld [vmem:[%s1239] ss:$8 sm:$0xf]
        %v1242 = vlaneseq
        %v1243 = vshrl.u32 %v1242, 7
        %v1244 = vsub.s32 0, %v1243
        %v1245 = vrot.slane %v1240, %v1244
        %v1246 = vlaneseq
        %v1247 = vshrl.u32 %v1246, 7
        %v1248 = vsub.s32 1, %v1247
        %v1249 = vrot.slane %v1240, %v1248
        %v1250 = vlaneseq
        %v1251 = vshrl.u32 %v1250, 7
        %v1252 = vsub.s32 2, %v1251
        %v1253 = vrot.slane %v1240, %v1252
        %v1254 = vlaneseq
        %v1255 = vshrl.u32 %v1254, 7
        %v1256 = vsub.s32 3, %v1255
        %v1257 = vrot.slane %v1240, %v1256
        %v1262 = vmul.f32 %v1238, %v1245
        %v1263 = vmul.f32 %v1237, %v1249
        %v1264 = vmul.f32 %v1236, %v1253
        %v1265 = vmul.f32 %v1235, %v1257
        %1266 = vst [vmem:[#allocation2 + $0xa0] sm:$0xf] %v1262
        %1267 = vst [vmem:[#allocation2 + $0xa8] sm:$0xf] %v1263
        %1268 = vst [vmem:[#allocation2 + $0xb0] sm:$0xf] %v1264
        %1269 = vst [vmem:[#allocation2 + $0xb8] sm:$0xf] %v1265
        %1270 = vrot.lane.b32.xlu0 %v717, 7
        %v1271 = vpop.permute.xlu0 %1270
        %1272 = vrot.lane.b32.xlu0 %v721, 7
        %v1273 = vpop.permute.xlu0 %1272
        %1274 = vrot.lane.b32.xlu0 %v718, 7
        %v1275 = vpop.permute.xlu0 %1274
        %1276 = vrot.lane.b32.xlu0 %v722, 7
        %v1277 = vpop.permute.xlu0 %1276
        %vm1278 = vcmp.lt.s32.totalorder %v734, 7
        %v1279 = vsel %vm1278, %v1275, %v1277
        %v1280 = vsel %vm1278, %v1273, %v1275
        %v1281 = vsel %vm1278, %v1271, %v1273
        %v1282 = vsel %vm1278, %v1277, %v1271
        %s1283 = scalar_lea.vmem [#allocation3], 35
        %v1284 = vld [vmem:[%s1283] ss:$8 sm:$0xf]
        %v1286 = vlaneseq
        %v1287 = vshrl.u32 %v1286, 7
        %v1288 = vsub.s32 0, %v1287
        %v1289 = vrot.slane %v1284, %v1288
        %v1290 = vlaneseq
        %v1291 = vshrl.u32 %v1290, 7
        %v1292 = vsub.s32 1, %v1291
        %v1293 = vrot.slane %v1284, %v1292
        %v1294 = vlaneseq
        %v1295 = vshrl.u32 %v1294, 7
        %v1296 = vsub.s32 2, %v1295
        %v1297 = vrot.slane %v1284, %v1296
        %v1298 = vlaneseq
        %v1299 = vshrl.u32 %v1298, 7
        %v1300 = vsub.s32 3, %v1299
        %v1301 = vrot.slane %v1284, %v1300
        %v1306 = vmul.f32 %v1282, %v1289
        %v1307 = vmul.f32 %v1281, %v1293
        %v1308 = vmul.f32 %v1280, %v1297
        %v1309 = vmul.f32 %v1279, %v1301
        %v1314 = vrot.slane %v1306, 4
        %v1315 = vrot.slane %v1307, 4
        %v1316 = vrot.slane %v1308, 4
        %v1317 = vrot.slane %v1309, 4
        %1322 = vst [vmem:[#allocation2 + $0xa0] sm:$0xf0] %v1314
        %1323 = vst [vmem:[#allocation2 + $0xa8] sm:$0xf0] %v1315
        %1324 = vst [vmem:[#allocation2 + $0xb0] sm:$0xf0] %v1316
        %1325 = vst [vmem:[#allocation2 + $0xb8] sm:$0xf0] %v1317
        %1326 = vrot.lane.b32.xlu0 %v717, 1
        %v1327 = vpop.permute.xlu0 %1326
        %1328 = vrot.lane.b32.xlu0 %v721, 1
        %v1329 = vpop.permute.xlu0 %1328
        %1330 = vrot.lane.b32.xlu0 %v718, 1
        %v1331 = vpop.permute.xlu0 %1330
        %1332 = vrot.lane.b32.xlu0 %v722, 1
        %v1333 = vpop.permute.xlu0 %1332
        %vm1334 = vcmp.lt.s32.totalorder %v734, 1
        %v1335 = vsel %vm1334, %v1331, %v1333
        %v1336 = vsel %vm1334, %v1329, %v1331
        %v1337 = vsel %vm1334, %v1327, %v1329
        %v1338 = vsel %vm1334, %v1333, %v1327
        %s1339 = scalar_lea.vmem [#allocation3], 36
        %v1340 = vld [vmem:[%s1339] ss:$8 sm:$0xf]
        %v1342 = vlaneseq
        %v1343 = vshrl.u32 %v1342, 7
        %v1344 = vsub.s32 0, %v1343
        %v1345 = vrot.slane %v1340, %v1344
        %v1346 = vlaneseq
        %v1347 = vshrl.u32 %v1346, 7
        %v1348 = vsub.s32 1, %v1347
        %v1349 = vrot.slane %v1340, %v1348
        %v1350 = vlaneseq
        %v1351 = vshrl.u32 %v1350, 7
        %v1352 = vsub.s32 2, %v1351
        %v1353 = vrot.slane %v1340, %v1352
        %v1354 = vlaneseq
        %v1355 = vshrl.u32 %v1354, 7
        %v1356 = vsub.s32 3, %v1355
        %v1357 = vrot.slane %v1340, %v1356
        %v1362 = vmul.f32 %v1338, %v1345
        %v1363 = vmul.f32 %v1337, %v1349
        %v1364 = vmul.f32 %v1336, %v1353
        %v1365 = vmul.f32 %v1335, %v1357
        %1366 = vst [vmem:[#allocation2 + $0xc0] sm:$0xf] %v1362
        %1367 = vst [vmem:[#allocation2 + $0xc8] sm:$0xf] %v1363
        %1368 = vst [vmem:[#allocation2 + $0xd0] sm:$0xf] %v1364
        %1369 = vst [vmem:[#allocation2 + $0xd8] sm:$0xf] %v1365
        %v1370 = vcombine.low %v717, %v717
        %v1371 = vcombine.low %v718, %v718
        %1374 = vst [vmem:[#allocation2 + $0xc0] sm:$0xf0] %v1370
        %1375 = vst [vmem:[#allocation2 + $0xc8] sm:$0xf0] %v717
        %1376 = vst [vmem:[#allocation2 + $0xd0] sm:$0xf0] %v1371
        %1377 = vst [vmem:[#allocation2 + $0xd8] sm:$0xf0] %v718
        %1378 = vrot.lane.b32.xlu0 %v717, 127
        %v1379 = vpop.permute.xlu0 %1378
        %1380 = vrot.lane.b32.xlu0 %v721, 127
        %v1381 = vpop.permute.xlu0 %1380
        %1382 = vrot.lane.b32.xlu0 %v718, 127
        %v1383 = vpop.permute.xlu0 %1382
        %1384 = vrot.lane.b32.xlu0 %v722, 127
        %v1385 = vpop.permute.xlu0 %1384
        %vm1386 = vcmp.lt.s32.totalorder %v734, 127
        %v1387 = vsel %vm1386, %v1383, %v1385
        %v1388 = vsel %vm1386, %v1381, %v1383
        %v1389 = vsel %vm1386, %v1379, %v1381
        %v1390 = vsel %vm1386, %v1385, %v1379
        %s1391 = scalar_lea.vmem [#allocation3], 38
        %v1392 = vld [vmem:[%s1391] ss:$8 sm:$0xf]
        %v1394 = vlaneseq
        %v1395 = vshrl.u32 %v1394, 7
        %v1396 = vsub.s32 0, %v1395
        %v1397 = vrot.slane %v1392, %v1396
        %v1398 = vlaneseq
        %v1399 = vshrl.u32 %v1398, 7
        %v1400 = vsub.s32 1, %v1399
        %v1401 = vrot.slane %v1392, %v1400
        %v1402 = vlaneseq
        %v1403 = vshrl.u32 %v1402, 7
        %v1404 = vsub.s32 2, %v1403
        %v1405 = vrot.slane %v1392, %v1404
        %v1406 = vlaneseq
        %v1407 = vshrl.u32 %v1406, 7
        %v1408 = vsub.s32 3, %v1407
        %v1409 = vrot.slane %v1392, %v1408
        %v1414 = vmul.f32 %v1389, %v1397
        %v1415 = vmul.f32 %v1388, %v1401
        %v1416 = vmul.f32 %v1387, %v1405
        %v1417 = vmul.f32 %v1390, %v1409
        %1418 = vst [vmem:[#allocation2 + $0xe0] sm:$0xf] %v1414
        %1419 = vst [vmem:[#allocation2 + $0xe8] sm:$0xf] %v1415
        %1420 = vst [vmem:[#allocation2 + $0xf0] sm:$0xf] %v1416
        %1421 = vst [vmem:[#allocation2 + $0xf8] sm:$0xf] %v1417
        %1422 = vrot.lane.b32.xlu0 %v717, 121
        %v1423 = vpop.permute.xlu0 %1422
        %1424 = vrot.lane.b32.xlu0 %v721, 121
        %v1425 = vpop.permute.xlu0 %1424
        %1426 = vrot.lane.b32.xlu0 %v718, 121
        %v1427 = vpop.permute.xlu0 %1426
        %1428 = vrot.lane.b32.xlu0 %v722, 121
        %v1429 = vpop.permute.xlu0 %1428
        %vm1430 = vcmp.lt.s32.totalorder %v734, 121
        %v1431 = vsel %vm1430, %v1427, %v1429
        %v1432 = vsel %vm1430, %v1425, %v1427
        %v1433 = vsel %vm1430, %v1423, %v1425
        %v1434 = vsel %vm1430, %v1429, %v1423
        %s1435 = scalar_lea.vmem [#allocation3], 39
        %v1436 = vld [vmem:[%s1435] ss:$8 sm:$0xf]
        %v1438 = vlaneseq
        %v1439 = vshrl.u32 %v1438, 7
        %v1440 = vsub.s32 0, %v1439
        %v1441 = vrot.slane %v1436, %v1440
        %v1442 = vlaneseq
        %v1443 = vshrl.u32 %v1442, 7
        %v1444 = vsub.s32 1, %v1443
        %v1445 = vrot.slane %v1436, %v1444
        %v1446 = vlaneseq
        %v1447 = vshrl.u32 %v1446, 7
        %v1448 = vsub.s32 2, %v1447
        %v1449 = vrot.slane %v1436, %v1448
        %v1450 = vlaneseq
        %v1451 = vshrl.u32 %v1450, 7
        %v1452 = vsub.s32 3, %v1451
        %v1453 = vrot.slane %v1436, %v1452
        %v1458 = vmul.f32 %v1433, %v1441
        %v1459 = vmul.f32 %v1432, %v1445
        %v1460 = vmul.f32 %v1431, %v1449
        %v1461 = vmul.f32 %v1434, %v1453
        %v1466 = vrot.slane %v1458, 4
        %v1467 = vrot.slane %v1459, 4
        %v1468 = vrot.slane %v1460, 4
        %v1469 = vrot.slane %v1461, 4
        %1474 = vst [vmem:[#allocation2 + $0xe0] sm:$0xf0] %v1466
        %1475 = vst [vmem:[#allocation2 + $0xe8] sm:$0xf0] %v1467
        %1476 = vst [vmem:[#allocation2 + $0xf0] sm:$0xf0] %v1468
        %1477 = vst [vmem:[#allocation2 + $0xf8] sm:$0xf0] %v1469
        %1478 = vrot.lane.b32.xlu0 %v717, 120
        %v1479 = vpop.permute.xlu0 %1478
        %1480 = vrot.lane.b32.xlu0 %v721, 120
        %v1481 = vpop.permute.xlu0 %1480
        %1482 = vrot.lane.b32.xlu0 %v718, 120
        %v1483 = vpop.permute.xlu0 %1482
        %1484 = vrot.lane.b32.xlu0 %v722, 120
        %v1485 = vpop.permute.xlu0 %1484
        %vm1486 = vcmp.lt.s32.totalorder %v734, 120
        %v1487 = vsel %vm1486, %v1483, %v1485
        %v1488 = vsel %vm1486, %v1481, %v1483
        %v1489 = vsel %vm1486, %v1479, %v1481
        %v1490 = vsel %vm1486, %v1485, %v1479
        %s1491 = scalar_lea.vmem [#allocation3], 64
        %v1492 = vld [vmem:[%s1491] ss:$8 sm:$0xf]
        %v1494 = vlaneseq
        %v1495 = vshrl.u32 %v1494, 7
        %v1496 = vsub.s32 0, %v1495
        %v1497 = vrot.slane %v1492, %v1496
        %v1498 = vlaneseq
        %v1499 = vshrl.u32 %v1498, 7
        %v1500 = vsub.s32 1, %v1499
        %v1501 = vrot.slane %v1492, %v1500
        %v1502 = vlaneseq
        %v1503 = vshrl.u32 %v1502, 7
        %v1504 = vsub.s32 2, %v1503
        %v1505 = vrot.slane %v1492, %v1504
        %v1506 = vlaneseq
        %v1507 = vshrl.u32 %v1506, 7
        %v1508 = vsub.s32 3, %v1507
        %v1509 = vrot.slane %v1492, %v1508
        %v1514 = vmul.f32 %v1489, %v1497
        %v1515 = vmul.f32 %v1488, %v1501
        %v1516 = vmul.f32 %v1487, %v1505
        %v1517 = vmul.f32 %v1490, %v1509
        %1518 = vst [vmem:[#allocation2 + $0x100] sm:$0xf] %v1514
        %1519 = vst [vmem:[#allocation2 + $0x108] sm:$0xf] %v1515
        %1520 = vst [vmem:[#allocation2 + $0x110] sm:$0xf] %v1516
        %1521 = vst [vmem:[#allocation2 + $0x118] sm:$0xf] %v1517
        %1522 = vrot.lane.b32.xlu0 %v717, 119
        %v1523 = vpop.permute.xlu0 %1522
        %1524 = vrot.lane.b32.xlu0 %v721, 119
        %v1525 = vpop.permute.xlu0 %1524
        %1526 = vrot.lane.b32.xlu0 %v718, 119
        %v1527 = vpop.permute.xlu0 %1526
        %1528 = vrot.lane.b32.xlu0 %v722, 119
        %v1529 = vpop.permute.xlu0 %1528
        %vm1530 = vcmp.lt.s32.totalorder %v734, 119
        %v1531 = vsel %vm1530, %v1527, %v1529
        %v1532 = vsel %vm1530, %v1525, %v1527
        %v1533 = vsel %vm1530, %v1523, %v1525
        %v1534 = vsel %vm1530, %v1529, %v1523
        %s1535 = scalar_lea.vmem [#allocation3], 65
        %v1536 = vld [vmem:[%s1535] ss:$8 sm:$0xf]
        %v1538 = vlaneseq
        %v1539 = vshrl.u32 %v1538, 7
        %v1540 = vsub.s32 0, %v1539
        %v1541 = vrot.slane %v1536, %v1540
        %v1542 = vlaneseq
        %v1543 = vshrl.u32 %v1542, 7
        %v1544 = vsub.s32 1, %v1543
        %v1545 = vrot.slane %v1536, %v1544
        %v1546 = vlaneseq
        %v1547 = vshrl.u32 %v1546, 7
        %v1548 = vsub.s32 2, %v1547
        %v1549 = vrot.slane %v1536, %v1548
        %v1550 = vlaneseq
        %v1551 = vshrl.u32 %v1550, 7
        %v1552 = vsub.s32 3, %v1551
        %v1553 = vrot.slane %v1536, %v1552
        %v1558 = vmul.f32 %v1533, %v1541
        %v1559 = vmul.f32 %v1532, %v1545
        %v1560 = vmul.f32 %v1531, %v1549
        %v1561 = vmul.f32 %v1534, %v1553
        %v1566 = vrot.slane %v1558, 4
        %v1567 = vrot.slane %v1559, 4
        %v1568 = vrot.slane %v1560, 4
        %v1569 = vrot.slane %v1561, 4
        %1574 = vst [vmem:[#allocation2 + $0x100] sm:$0xf0] %v1566
        %1575 = vst [vmem:[#allocation2 + $0x108] sm:$0xf0] %v1567
        %1576 = vst [vmem:[#allocation2 + $0x110] sm:$0xf0] %v1568
        %1577 = vst [vmem:[#allocation2 + $0x118] sm:$0xf0] %v1569
        %s1578 = scalar_lea.vmem [#allocation3], 66
        %v1579 = vld [vmem:[%s1578] ss:$8 sm:$0xf]
        %v1581 = vlaneseq
        %v1582 = vshrl.u32 %v1581, 7
        %v1583 = vsub.s32 0, %v1582
        %v1584 = vrot.slane %v1579, %v1583
        %v1585 = vlaneseq
        %v1586 = vshrl.u32 %v1585, 7
        %v1587 = vsub.s32 1, %v1586
        %v1588 = vrot.slane %v1579, %v1587
        %v1589 = vlaneseq
        %v1590 = vshrl.u32 %v1589, 7
        %v1591 = vsub.s32 2, %v1590
        %v1592 = vrot.slane %v1579, %v1591
        %v1593 = vlaneseq
        %v1594 = vshrl.u32 %v1593, 7
        %v1595 = vsub.s32 3, %v1594
        %v1596 = vrot.slane %v1579, %v1595
        %v1601 = vmul.f32 %v738, %v1584
        %v1602 = vmul.f32 %v737, %v1588
        %v1603 = vmul.f32 %v736, %v1592
        %v1604 = vmul.f32 %v739, %v1596
        %1605 = vst [vmem:[#allocation2 + $0x120] sm:$0xf] %v1601
        %1606 = vst [vmem:[#allocation2 + $0x128] sm:$0xf] %v1602
        %1607 = vst [vmem:[#allocation2 + $0x130] sm:$0xf] %v1603
        %1608 = vst [vmem:[#allocation2 + $0x138] sm:$0xf] %v1604
        %s1609 = scalar_lea.vmem [#allocation3], 67
        %v1610 = vld [vmem:[%s1609] ss:$8 sm:$0xf]
        %v1612 = vlaneseq
        %v1613 = vshrl.u32 %v1612, 7
        %v1614 = vsub.s32 0, %v1613
        %v1615 = vrot.slane %v1610, %v1614
        %v1616 = vlaneseq
        %v1617 = vshrl.u32 %v1616, 7
        %v1618 = vsub.s32 1, %v1617
        %v1619 = vrot.slane %v1610, %v1618
        %v1620 = vlaneseq
        %v1621 = vshrl.u32 %v1620, 7
        %v1622 = vsub.s32 2, %v1621
        %v1623 = vrot.slane %v1610, %v1622
        %v1624 = vlaneseq
        %v1625 = vshrl.u32 %v1624, 7
        %v1626 = vsub.s32 3, %v1625
        %v1627 = vrot.slane %v1610, %v1626
        %v1632 = vmul.f32 %v781, %v1615
        %v1633 = vmul.f32 %v780, %v1619
        %v1634 = vmul.f32 %v779, %v1623
        %v1635 = vmul.f32 %v782, %v1627
        %v1640 = vrot.slane %v1632, 4
        %v1641 = vrot.slane %v1633, 4
        %v1642 = vrot.slane %v1634, 4
        %v1643 = vrot.slane %v1635, 4
        %1648 = vst [vmem:[#allocation2 + $0x120] sm:$0xf0] %v1640
        %1649 = vst [vmem:[#allocation2 + $0x128] sm:$0xf0] %v1641
        %1650 = vst [vmem:[#allocation2 + $0x130] sm:$0xf0] %v1642
        %1651 = vst [vmem:[#allocation2 + $0x138] sm:$0xf0] %v1643
        %s1652 = scalar_lea.vmem [#allocation3], 68
        %v1653 = vld [vmem:[%s1652] ss:$8 sm:$0xf]
        %v1655 = vlaneseq
        %v1656 = vshrl.u32 %v1655, 7
        %v1657 = vsub.s32 0, %v1656
        %v1658 = vrot.slane %v1653, %v1657
        %v1659 = vlaneseq
        %v1660 = vshrl.u32 %v1659, 7
        %v1661 = vsub.s32 1, %v1660
        %v1662 = vrot.slane %v1653, %v1661
        %v1663 = vlaneseq
        %v1664 = vshrl.u32 %v1663, 7
        %v1665 = vsub.s32 2, %v1664
        %v1666 = vrot.slane %v1653, %v1665
        %v1667 = vlaneseq
        %v1668 = vshrl.u32 %v1667, 7
        %v1669 = vsub.s32 3, %v1668
        %v1670 = vrot.slane %v1653, %v1669
        %v1675 = vmul.f32 %v837, %v1658
        %v1676 = vmul.f32 %v836, %v1662
        %v1677 = vmul.f32 %v835, %v1666
        %v1678 = vmul.f32 %v838, %v1670
        %1679 = vst [vmem:[#allocation2 + $0x140] sm:$0xf] %v1675
        %1680 = vst [vmem:[#allocation2 + $0x148] sm:$0xf] %v1676
        %1681 = vst [vmem:[#allocation2 + $0x150] sm:$0xf] %v1677
        %1682 = vst [vmem:[#allocation2 + $0x158] sm:$0xf] %v1678
        %s1683 = scalar_lea.vmem [#allocation3], 69
        %v1684 = vld [vmem:[%s1683] ss:$8 sm:$0xf]
        %v1686 = vlaneseq
        %v1687 = vshrl.u32 %v1686, 7
        %v1688 = vsub.s32 0, %v1687
        %v1689 = vrot.slane %v1684, %v1688
        %v1690 = vlaneseq
        %v1691 = vshrl.u32 %v1690, 7
        %v1692 = vsub.s32 1, %v1691
        %v1693 = vrot.slane %v1684, %v1692
        %v1694 = vlaneseq
        %v1695 = vshrl.u32 %v1694, 7
        %v1696 = vsub.s32 2, %v1695
        %v1697 = vrot.slane %v1684, %v1696
        %v1698 = vlaneseq
        %v1699 = vshrl.u32 %v1698, 7
        %v1700 = vsub.s32 3, %v1699
        %v1701 = vrot.slane %v1684, %v1700
        %v1706 = vmul.f32 %v881, %v1689
        %v1707 = vmul.f32 %v880, %v1693
        %v1708 = vmul.f32 %v879, %v1697
        %v1709 = vmul.f32 %v882, %v1701
        %v1714 = vrot.slane %v1706, 4
        %v1715 = vrot.slane %v1707, 4
        %v1716 = vrot.slane %v1708, 4
        %v1717 = vrot.slane %v1709, 4
        %1722 = vst [vmem:[#allocation2 + $0x140] sm:$0xf0] %v1714
        %1723 = vst [vmem:[#allocation2 + $0x148] sm:$0xf0] %v1715
        %1724 = vst [vmem:[#allocation2 + $0x150] sm:$0xf0] %v1716
        %1725 = vst [vmem:[#allocation2 + $0x158] sm:$0xf0] %v1717
        %s1726 = scalar_lea.vmem [#allocation3], 70
        %v1727 = vld [vmem:[%s1726] ss:$8 sm:$0xf]
        %v1729 = vlaneseq
        %v1730 = vshrl.u32 %v1729, 7
        %v1731 = vsub.s32 0, %v1730
        %v1732 = vrot.slane %v1727, %v1731
        %v1733 = vlaneseq
        %v1734 = vshrl.u32 %v1733, 7
        %v1735 = vsub.s32 1, %v1734
        %v1736 = vrot.slane %v1727, %v1735
        %v1737 = vlaneseq
        %v1738 = vshrl.u32 %v1737, 7
        %v1739 = vsub.s32 2, %v1738
        %v1740 = vrot.slane %v1727, %v1739
        %v1741 = vlaneseq
        %v1742 = vshrl.u32 %v1741, 7
        %v1743 = vsub.s32 3, %v1742
        %v1744 = vrot.slane %v1727, %v1743
        %v1749 = vmul.f32 %v937, %v1732
        %v1750 = vmul.f32 %v936, %v1736
        %v1751 = vmul.f32 %v935, %v1740
        %v1752 = vmul.f32 %v938, %v1744
        %1753 = vst [vmem:[#allocation2 + $0x160] sm:$0xf] %v1749
        %1754 = vst [vmem:[#allocation2 + $0x168] sm:$0xf] %v1750
        %1755 = vst [vmem:[#allocation2 + $0x170] sm:$0xf] %v1751
        %1756 = vst [vmem:[#allocation2 + $0x178] sm:$0xf] %v1752
        %s1757 = scalar_lea.vmem [#allocation3], 71
        %v1758 = vld [vmem:[%s1757] ss:$8 sm:$0xf]
        %v1760 = vlaneseq
        %v1761 = vshrl.u32 %v1760, 7
        %v1762 = vsub.s32 0, %v1761
        %v1763 = vrot.slane %v1758, %v1762
        %v1764 = vlaneseq
        %v1765 = vshrl.u32 %v1764, 7
        %v1766 = vsub.s32 1, %v1765
        %v1767 = vrot.slane %v1758, %v1766
        %v1768 = vlaneseq
        %v1769 = vshrl.u32 %v1768, 7
        %v1770 = vsub.s32 2, %v1769
        %v1771 = vrot.slane %v1758, %v1770
        %v1772 = vlaneseq
        %v1773 = vshrl.u32 %v1772, 7
        %v1774 = vsub.s32 3, %v1773
        %v1775 = vrot.slane %v1758, %v1774
        %v1780 = vmul.f32 %v981, %v1763
        %v1781 = vmul.f32 %v980, %v1767
        %v1782 = vmul.f32 %v979, %v1771
        %v1783 = vmul.f32 %v982, %v1775
        %v1788 = vrot.slane %v1780, 4
        %v1789 = vrot.slane %v1781, 4
        %v1790 = vrot.slane %v1782, 4
        %v1791 = vrot.slane %v1783, 4
        %1796 = vst [vmem:[#allocation2 + $0x160] sm:$0xf0] %v1788
        %1797 = vst [vmem:[#allocation2 + $0x168] sm:$0xf0] %v1789
        %1798 = vst [vmem:[#allocation2 + $0x170] sm:$0xf0] %v1790
        %1799 = vst [vmem:[#allocation2 + $0x178] sm:$0xf0] %v1791
        %s1800 = scalar_lea.vmem [#allocation3], 96
        %v1801 = vld [vmem:[%s1800] ss:$8 sm:$0xf]
        %v1803 = vlaneseq
        %v1804 = vshrl.u32 %v1803, 7
        %v1805 = vsub.s32 0, %v1804
        %v1806 = vrot.slane %v1801, %v1805
        %v1807 = vlaneseq
        %v1808 = vshrl.u32 %v1807, 7
        %v1809 = vsub.s32 1, %v1808
        %v1810 = vrot.slane %v1801, %v1809
        %v1811 = vlaneseq
        %v1812 = vshrl.u32 %v1811, 7
        %v1813 = vsub.s32 2, %v1812
        %v1814 = vrot.slane %v1801, %v1813
        %v1815 = vlaneseq
        %v1816 = vshrl.u32 %v1815, 7
        %v1817 = vsub.s32 3, %v1816
        %v1818 = vrot.slane %v1801, %v1817
        %v1823 = vmul.f32 %v1037, %v1806
        %v1824 = vmul.f32 %v1036, %v1810
        %v1825 = vmul.f32 %v1035, %v1814
        %v1826 = vmul.f32 %v1038, %v1818
        %1827 = vst [vmem:[#allocation2 + $0x180] sm:$0xf] %v1823
        %1828 = vst [vmem:[#allocation2 + $0x188] sm:$0xf] %v1824
        %1829 = vst [vmem:[#allocation2 + $0x190] sm:$0xf] %v1825
        %1830 = vst [vmem:[#allocation2 + $0x198] sm:$0xf] %v1826
        %s1831 = scalar_lea.vmem [#allocation3], 97
        %v1832 = vld [vmem:[%s1831] ss:$8 sm:$0xf]
        %v1834 = vlaneseq
        %v1835 = vshrl.u32 %v1834, 7
        %v1836 = vsub.s32 0, %v1835
        %v1837 = vrot.slane %v1832, %v1836
        %v1838 = vlaneseq
        %v1839 = vshrl.u32 %v1838, 7
        %v1840 = vsub.s32 1, %v1839
        %v1841 = vrot.slane %v1832, %v1840
        %v1842 = vlaneseq
        %v1843 = vshrl.u32 %v1842, 7
        %v1844 = vsub.s32 2, %v1843
        %v1845 = vrot.slane %v1832, %v1844
        %v1846 = vlaneseq
        %v1847 = vshrl.u32 %v1846, 7
        %v1848 = vsub.s32 3, %v1847
        %v1849 = vrot.slane %v1832, %v1848
        %v1854 = vmul.f32 %v1081, %v1837
        %v1855 = vmul.f32 %v1080, %v1841
        %v1856 = vmul.f32 %v1079, %v1845
        %v1857 = vmul.f32 %v1082, %v1849
        %v1862 = vrot.slane %v1854, 4
        %v1863 = vrot.slane %v1855, 4
        %v1864 = vrot.slane %v1856, 4
        %v1865 = vrot.slane %v1857, 4
        %1870 = vst [vmem:[#allocation2 + $0x180] sm:$0xf0] %v1862
        %1871 = vst [vmem:[#allocation2 + $0x188] sm:$0xf0] %v1863
        %1872 = vst [vmem:[#allocation2 + $0x190] sm:$0xf0] %v1864
        %1873 = vst [vmem:[#allocation2 + $0x198] sm:$0xf0] %v1865
        %s1874 = scalar_lea.vmem [#allocation3], 98
        %v1875 = vld [vmem:[%s1874] ss:$8 sm:$0xf]
        %v1877 = vlaneseq
        %v1878 = vshrl.u32 %v1877, 7
        %v1879 = vsub.s32 0, %v1878
        %v1880 = vrot.slane %v1875, %v1879
        %v1881 = vlaneseq
        %v1882 = vshrl.u32 %v1881, 7
        %v1883 = vsub.s32 1, %v1882
        %v1884 = vrot.slane %v1875, %v1883
        %v1885 = vlaneseq
        %v1886 = vshrl.u32 %v1885, 7
        %v1887 = vsub.s32 2, %v1886
        %v1888 = vrot.slane %v1875, %v1887
        %v1889 = vlaneseq
        %v1890 = vshrl.u32 %v1889, 7
        %v1891 = vsub.s32 3, %v1890
        %v1892 = vrot.slane %v1875, %v1891
        %v1897 = vmul.f32 %v1137, %v1880
        %v1898 = vmul.f32 %v1136, %v1884
        %v1899 = vmul.f32 %v1135, %v1888
        %v1900 = vmul.f32 %v1138, %v1892
        %1901 = vst [vmem:[#allocation2 + $0x1a0] sm:$0xf] %v1897
        %1902 = vst [vmem:[#allocation2 + $0x1a8] sm:$0xf] %v1898
        %1903 = vst [vmem:[#allocation2 + $0x1b0] sm:$0xf] %v1899
        %1904 = vst [vmem:[#allocation2 + $0x1b8] sm:$0xf] %v1900
        %v1905 = vld [vmem:[#allocation7] sm:$0xf]
        %v1906 = vld [vmem:[#allocation2] sm:$0xff]
        %v1907 = vld [vmem:[#allocation2 + $0x8] sm:$0xff]
        %v1908 = vld [vmem:[#allocation2 + $0x10] sm:$0xff]
        %v1909 = vld [vmem:[#allocation2 + $0x18] sm:$0xff]
        %v1910 = vld [vmem:[#allocation2 + $0x20] sm:$0xff]
        %v1911 = vld [vmem:[#allocation2 + $0x28] sm:$0xff]
        %v1912 = vld [vmem:[#allocation2 + $0x30] sm:$0xff]
        %v1913 = vld [vmem:[#allocation2 + $0x38] sm:$0xff]
        %v1914 = vld [vmem:[#allocation2 + $0x40] sm:$0xff]
        %v1915 = vld [vmem:[#allocation2 + $0x48] sm:$0xff]
        %v1916 = vld [vmem:[#allocation2 + $0x50] sm:$0xff]
        %v1917 = vld [vmem:[#allocation2 + $0x58] sm:$0xff]
        %v1918 = vld [vmem:[#allocation2 + $0x60] sm:$0xff]
        %v1919 = vld [vmem:[#allocation2 + $0x68] sm:$0xff]
        %v1920 = vld [vmem:[#allocation2 + $0x70] sm:$0xff]
        %v1921 = vld [vmem:[#allocation2 + $0x78] sm:$0xff]
        %v1922 = vld [vmem:[#allocation2 + $0x80] sm:$0xff]
        %v1923 = vld [vmem:[#allocation2 + $0x88] sm:$0xff]
        %v1924 = vld [vmem:[#allocation2 + $0x90] sm:$0xff]
        %v1925 = vld [vmem:[#allocation2 + $0x98] sm:$0xff]
        %v1926 = vld [vmem:[#allocation2 + $0xa0] sm:$0xff]
        %v1927 = vld [vmem:[#allocation2 + $0xa8] sm:$0xff]
        %v1928 = vld [vmem:[#allocation2 + $0xb0] sm:$0xff]
        %v1929 = vld [vmem:[#allocation2 + $0xb8] sm:$0xff]
        %v1930 = vld [vmem:[#allocation2 + $0xc0] sm:$0xff]
        %v1931 = vld [vmem:[#allocation2 + $0xc8] sm:$0xff]
        %v1932 = vld [vmem:[#allocation2 + $0xd0] sm:$0xff]
        %v1933 = vld [vmem:[#allocation2 + $0xd8] sm:$0xff]
        %v1934 = vld [vmem:[#allocation2 + $0xe0] sm:$0xff]
        %v1935 = vld [vmem:[#allocation2 + $0xe8] sm:$0xff]
        %v1936 = vld [vmem:[#allocation2 + $0xf0] sm:$0xff]
        %v1937 = vld [vmem:[#allocation2 + $0xf8] sm:$0xff]
        %v1938 = vld [vmem:[#allocation2 + $0x100] sm:$0xff]
        %v1939 = vld [vmem:[#allocation2 + $0x108] sm:$0xff]
        %v1940 = vld [vmem:[#allocation2 + $0x110] sm:$0xff]
        %v1941 = vld [vmem:[#allocation2 + $0x118] sm:$0xff]
        %v1942 = vld [vmem:[#allocation2 + $0x120] sm:$0xff]
        %v1943 = vld [vmem:[#allocation2 + $0x128] sm:$0xff]
        %v1944 = vld [vmem:[#allocation2 + $0x130] sm:$0xff]
        %v1945 = vld [vmem:[#allocation2 + $0x138] sm:$0xff]
        %v1946 = vld [vmem:[#allocation2 + $0x140] sm:$0xff]
        %v1947 = vld [vmem:[#allocation2 + $0x148] sm:$0xff]
        %v1948 = vld [vmem:[#allocation2 + $0x150] sm:$0xff]
        %v1949 = vld [vmem:[#allocation2 + $0x158] sm:$0xff]
        %v1950 = vld [vmem:[#allocation2 + $0x160] sm:$0xff]
        %v1951 = vld [vmem:[#allocation2 + $0x168] sm:$0xff]
        %v1952 = vld [vmem:[#allocation2 + $0x170] sm:$0xff]
        %v1953 = vld [vmem:[#allocation2 + $0x178] sm:$0xff]
        %v1954 = vld [vmem:[#allocation2 + $0x180] sm:$0xff]
        %v1955 = vld [vmem:[#allocation2 + $0x188] sm:$0xff]
        %v1956 = vld [vmem:[#allocation2 + $0x190] sm:$0xff]
        %v1957 = vld [vmem:[#allocation2 + $0x198] sm:$0xff]
        %v1958 = vld [vmem:[#allocation2 + $0x1a0] sm:$0xf]
        %v1959 = vld [vmem:[#allocation2 + $0x1a8] sm:$0xf]
        %v1960 = vld [vmem:[#allocation2 + $0x1b0] sm:$0xf]
        %v1961 = vld [vmem:[#allocation2 + $0x1b8] sm:$0xf]
        %v1962 = vld [vmem:[%s3] sm:$0xf]
        %1964 = vset.pattern.permute.xlu0 0
        %1965 = vperm.xlu0 %1964, %v1962
        %v1966 = vpop.permute.xlu0 %1965
        %vm1968 = vcmask 883712
        %v1970 = vsel %vm1968, %v1905, 0
        %v1973 = vsel %vm667, %v1958, 0
        %v1976 = vsel %vm667, %v1959, 0
        %v1979 = vsel %vm667, %v1960, 0
        %v1982 = vsel %vm667, %v1961, 0
        %1984 = vmatprep.subr.mxu0 0.0
        %1985 = vmatpush1.msra.mxu0 0.0
        %1986 = vmatprep.subr.mxu0 0.0
        %1987 = vmatpush1.msra.mxu0 0.0
        %1988 = vmatprep.subr.mxu0 %v1976
        %1989 = vmatpush1.msra.mxu0 %v1973
        %1990 = vmatprep.subr.mxu0 %v1955
        %1991 = vmatpush1.msra.mxu0 %v1954
        %1992 = vmatprep.subr.mxu0 %v1951
        %1993 = vmatpush1.msra.mxu0 %v1950
        %1994 = vmatprep.subr.mxu0 %v1947
        %1995 = vmatpush1.msra.mxu0 %v1946
        %1996 = vmatprep.subr.mxu0 %v1943
        %1997 = vmatpush1.msra.mxu0 %v1942
        %1998 = vmatprep.subr.mxu0 %v1939
        %1999 = vmatpush1.msra.mxu0 %v1938
        %2000 = vmatprep.subr.mxu0 %v1935
        %2001 = vmatpush1.msra.mxu0 %v1934
        %2002 = vmatprep.subr.mxu0 %v1931
        %2003 = vmatpush1.msra.mxu0 %v1930
        %2004 = vmatprep.subr.mxu0 %v1927
        %2005 = vmatpush1.msra.mxu0 %v1926
        %2006 = vmatprep.subr.mxu0 %v1923
        %2007 = vmatpush1.msra.mxu0 %v1922
        %2008 = vmatprep.subr.mxu0 %v1919
        %2009 = vmatpush1.msra.mxu0 %v1918
        %2010 = vmatprep.subr.mxu0 %v1915
        %2011 = vmatpush1.msra.mxu0 %v1914
        %2012 = vmatprep.subr.mxu0 %v1911
        %2013 = vmatpush1.msra.mxu0 %v1910
        %2014 = vmatprep.subr.mxu0 %v1907
        %2015 = vmatpush1.msra.mxu0 %v1906
        %2016 = vmatprep.subr.mxu0 0.0
        %2017 = vmatpush2.msra.mxu0 0.0
        %2018 = vmatprep.subr.mxu0 0.0
        %2019 = vmatpush2.msra.mxu0 0.0
        %2020 = vmatprep.subr.mxu0 0.0
        %2021 = vmatpush2.msra.mxu0 0.0
        %2022 = vmatprep.subr.mxu0 0.0
        %2023 = vmatpush2.msra.mxu0 0.0
        %2024 = vmatprep.subr.mxu0 0.0
        %2025 = vmatpush2.msra.mxu0 0.0
        %2026 = vmatprep.subr.mxu0 0.0
        %2027 = vmatpush2.msra.mxu0 0.0
        %2028 = vmatprep.subr.mxu0 0.0
        %2029 = vmatpush2.msra.mxu0 0.0
        %2030 = vmatprep.subr.mxu0 0.0
        %2031 = vmatpush2.msra.mxu0 0.0
        %2032 = vmatprep.subr.mxu0 0.0
        %2033 = vmatpush2.msra.mxu0 0.0
        %2034 = vmatprep.subr.mxu0 0.0
        %2035 = vmatpush2.msra.mxu0 0.0
        %2036 = vmatprep.subr.mxu0 0.0
        %2037 = vmatpush2.msra.mxu0 0.0
        %2038 = vmatprep.subr.mxu0 0.0
        %2039 = vmatpush2.msra.mxu0 0.0
        %2040 = vmatprep.subr.mxu0 0.0
        %2041 = vmatpush2.msra.mxu0 0.0
        %2042 = vmatprep.subr.mxu0 0.0
        %2043 = vmatpush2.msra.mxu0 0.0
        %2044 = vmatprep.subr.mxu0 0.0
        %2045 = vmatpush2.msra.mxu0 0.0
        %2046 = vmatprep.subr.mxu0 0.0
        %2047 = vmatpush2.msra.mxu0 0.0
        %2048 = vmatprep.mubr.f32.mxu0 0.0
        %2049 = vmatmul.mubr.f32.gmra.mxu0 %v1970
        %v2050 = vpop.f32.mrf.mxu0
        %v2051 = vadd.f32 %v1966, %v2050
        %v2052 = vpop.f32.mrf.mxu0
        %v2053 = vadd.f32 %v1966, %v2052
        %2054 = vdwg.mxu0
        %2055 = vmatprep.subr.mxu0 0.0
        %2056 = vmatpush1.msra.mxu0 0.0
        %2057 = vmatprep.subr.mxu0 0.0
        %2058 = vmatpush1.msra.mxu0 0.0
        %2059 = vmatprep.subr.mxu0 %v1982
        %2060 = vmatpush1.msra.mxu0 %v1979
        %2061 = vmatprep.subr.mxu0 %v1957
        %2062 = vmatpush1.msra.mxu0 %v1956
        %2063 = vmatprep.subr.mxu0 %v1953
        %2064 = vmatpush1.msra.mxu0 %v1952
        %2065 = vmatprep.subr.mxu0 %v1949
        %2066 = vmatpush1.msra.mxu0 %v1948
        %2067 = vmatprep.subr.mxu0 %v1945
        %2068 = vmatpush1.msra.mxu0 %v1944
        %2069 = vmatprep.subr.mxu0 %v1941
        %2070 = vmatpush1.msra.mxu0 %v1940
        %2071 = vmatprep.subr.mxu0 %v1937
        %2072 = vmatpush1.msra.mxu0 %v1936
        %2073 = vmatprep.subr.mxu0 %v1933
        %2074 = vmatpush1.msra.mxu0 %v1932
        %2075 = vmatprep.subr.mxu0 %v1929
        %2076 = vmatpush1.msra.mxu0 %v1928
        %2077 = vmatprep.subr.mxu0 %v1925
        %2078 = vmatpush1.msra.mxu0 %v1924
        %2079 = vmatprep.subr.mxu0 %v1921
        %2080 = vmatpush1.msra.mxu0 %v1920
        %2081 = vmatprep.subr.mxu0 %v1917
        %2082 = vmatpush1.msra.mxu0 %v1916
        %2083 = vmatprep.subr.mxu0 %v1913
        %2084 = vmatpush1.msra.mxu0 %v1912
        %2085 = vmatprep.subr.mxu0 %v1909
        %2086 = vmatpush1.msra.mxu0 %v1908
        %2087 = vmatprep.subr.mxu0 0.0
        %2088 = vmatpush2.msra.mxu0 0.0
        %2089 = vmatprep.subr.mxu0 0.0
        %2090 = vmatpush2.msra.mxu0 0.0
        %2091 = vmatprep.subr.mxu0 0.0
        %2092 = vmatpush2.msra.mxu0 0.0
        %2093 = vmatprep.subr.mxu0 0.0
        %2094 = vmatpush2.msra.mxu0 0.0
        %2095 = vmatprep.subr.mxu0 0.0
        %2096 = vmatpush2.msra.mxu0 0.0
        %2097 = vmatprep.subr.mxu0 0.0
        %2098 = vmatpush2.msra.mxu0 0.0
        %2099 = vmatprep.subr.mxu0 0.0
        %2100 = vmatpush2.msra.mxu0 0.0
        %2101 = vmatprep.subr.mxu0 0.0
        %2102 = vmatpush2.msra.mxu0 0.0
        %2103 = vmatprep.subr.mxu0 0.0
        %2104 = vmatpush2.msra.mxu0 0.0
        %2105 = vmatprep.subr.mxu0 0.0
        %2106 = vmatpush2.msra.mxu0 0.0
        %2107 = vmatprep.subr.mxu0 0.0
        %2108 = vmatpush2.msra.mxu0 0.0
        %2109 = vmatprep.subr.mxu0 0.0
        %2110 = vmatpush2.msra.mxu0 0.0
        %2111 = vmatprep.subr.mxu0 0.0
        %2112 = vmatpush2.msra.mxu0 0.0
        %2113 = vmatprep.subr.mxu0 0.0
        %2114 = vmatpush2.msra.mxu0 0.0
        %2115 = vmatprep.subr.mxu0 0.0
        %2116 = vmatpush2.msra.mxu0 0.0
        %2117 = vmatprep.subr.mxu0 0.0
        %2118 = vmatpush2.msra.mxu0 0.0
        %2119 = vmatprep.mubr.f32.mxu0 0.0
        %2120 = vmatmul.mubr.f32.gmra.mxu0 %v1970
        %v2121 = vpop.f32.mrf.mxu0
        %v2122 = vadd.f32 %v1966, %v2121
        %v2123 = vpop.f32.mrf.mxu0
        %v2124 = vadd.f32 %v1966, %v2123
        %2125 = vdwg.mxu0
        %v2126 = vmax.f32 %v2051, 0.0
        %v2127 = vmax.f32 %v2053, 0.0
        %v2128 = vmax.f32 %v2122, 0.0
        %v2129 = vmax.f32 %v2124, 0.0
        %v2130 = vld [vmem:[%s4] sm:$0xf]
        %2132 = vset.pattern.permute.xlu0 0
        %2133 = vperm.xlu0 %2132, %v2130
        %v2134 = vpop.permute.xlu0 %2133
        %v2136 = vmul.f32 %v2126, %v2134
        %v2137 = vmul.f32 %v2127, %v2134
        %v2138 = vmul.f32 %v2128, %v2134
        %v2139 = vmul.f32 %v2129, %v2134
        %v2140 = vsel %vm667, %v2136, 0.0
        %v2141 = vrot.slane %v2140, 4
        %v2142 = vadd.f32 %v2140, %v2141
        %v2143 = vrot.slane %v2142, 2
        %v2144 = vadd.f32 %v2142, %v2143
        %v2145 = vrot.slane %v2144, 1
        %v2146 = vadd.f32 %v2144, %v2145
        %v2147 = vsel %vm667, %v2137, 0.0
        %v2148 = vrot.slane %v2147, 4
        %v2149 = vadd.f32 %v2147, %v2148
        %v2150 = vrot.slane %v2149, 2
        %v2151 = vadd.f32 %v2149, %v2150
        %v2152 = vrot.slane %v2151, 1
        %v2153 = vadd.f32 %v2151, %v2152
        %v2154 = vsel %vm667, %v2138, 0.0
        %v2155 = vrot.slane %v2154, 4
        %v2156 = vadd.f32 %v2154, %v2155
        %v2157 = vrot.slane %v2156, 2
        %v2158 = vadd.f32 %v2156, %v2157
        %v2159 = vrot.slane %v2158, 1
        %v2160 = vadd.f32 %v2158, %v2159
        %v2161 = vsel %vm667, %v2139, 0.0
        %v2162 = vrot.slane %v2161, 4
        %v2163 = vadd.f32 %v2161, %v2162
        %v2164 = vrot.slane %v2163, 2
        %v2165 = vadd.f32 %v2163, %v2164
        %v2166 = vrot.slane %v2165, 1
        %v2167 = vadd.f32 %v2165, %v2166
        %s2168 = sld [smem:[#allocation9]]
        %v2169 = vstv %s2168
        %v2170 = vadd.f32 %v2146, %v2169
        %v2171 = vadd.f32 %v2153, %v2169
        %v2172 = vadd.f32 %v2160, %v2169
        %v2173 = vadd.f32 %v2167, %v2169
        %vm2174 = vcmask 1040384
        %v2175 = vsel %vm2174, %v2170, 0.0
        %v2176 = vsel %vm2174, %v2171, 0.0
        %v2177 = vadd.f32 %v2175, %v2176
        %v2178 = vsel %vm2174, %v2172, 0.0
        %v2179 = vadd.f32 %v2177, %v2178
        %v2180 = vsel %vm2174, %v2173, 0.0
        %v2181 = vadd.f32 %v2179, %v2180
        %2182 = vadd.xlane.f32.xlu0 %v2181
        %v2183 = vpop.xlane.xlu0 %2182
        %v2184 = vrot.slane %v2183, 4
        %v2185 = vadd.f32 %v2183, %v2184
        %v2186 = vrot.slane %v2185, 2
        %v2187 = vadd.f32 %v2185, %v2186
        %v2188 = vrot.slane %v2187, 1
        %v2189 = vadd.f32 %v2187, %v2188
        %s2190 = vtos %v2189
        %v2191 = vstv %s2190
        %v2192 = vrcp.pop 512.0
        %v2193 = vmul.f32 %v2191, %v2192
        %v2194 = vsub.f32 %v2170, %v2193
        %v2195 = vsub.f32 %v2171, %v2193
        %v2196 = vsub.f32 %v2172, %v2193
        %v2197 = vsub.f32 %v2173, %v2193
        %v2198 = vmul.f32 %v2194, %v2194
        %v2199 = vmul.f32 %v2195, %v2195
        %v2200 = vmul.f32 %v2196, %v2196
        %v2201 = vmul.f32 %v2197, %v2197
        %v2202 = vsel %vm2174, %v2198, 0.0
        %v2203 = vsel %vm2174, %v2199, 0.0
        %v2204 = vadd.f32 %v2202, %v2203
        %v2205 = vsel %vm2174, %v2200, 0.0
        %v2206 = vadd.f32 %v2204, %v2205
        %v2207 = vsel %vm2174, %v2201, 0.0
        %v2208 = vadd.f32 %v2206, %v2207
        %2209 = vadd.xlane.f32.xlu0 %v2208
        %v2210 = vpop.xlane.xlu0 %2209
        %v2211 = vrot.slane %v2210, 4
        %v2212 = vadd.f32 %v2210, %v2211
        %v2213 = vrot.slane %v2212, 2
        %v2214 = vadd.f32 %v2212, %v2213
        %v2215 = vrot.slane %v2214, 1
        %v2216 = vadd.f32 %v2214, %v2215
        %s2217 = vtos %v2216
        %v2218 = vstv %s2217
        %v2219 = vmul.f32 %v2218, %v2192
        %v2220 = vadd.f32 %v2219, 1e-06
        %v2221 = vrsqrt.pop %v2220
        %v2222 = vmul.f32 %v2194, %v2221
        %v2223 = vmul.f32 %v2195, %v2221
        %v2224 = vmul.f32 %v2196, %v2221
        %v2225 = vmul.f32 %v2197, %v2221
        %s2226 = sld [smem:[#allocation9 + $0x1]]
        %v2227 = vstv %s2226
        %v2228 = vmul.f32 %v2222, %v2227
        %v2229 = vmul.f32 %v2223, %v2227
        %v2230 = vmul.f32 %v2224, %v2227
        %v2231 = vmul.f32 %v2225, %v2227
        %s2232 = sld [smem:[#allocation9 + $0x2]]
        %v2233 = vstv %s2232
        %v2234 = vadd.f32 %v2228, %v2233
        %v2235 = vadd.f32 %v2229, %v2233
        %v2236 = vadd.f32 %v2230, %v2233
        %v2237 = vadd.f32 %v2231, %v2233
        %v2238 = vxor.u32 %v2234, 2147483648
        %v2239 = vxor.u32 %v2235, 2147483648
        %v2240 = vxor.u32 %v2236, 2147483648
        %v2241 = vxor.u32 %v2237, 2147483648
        %v2242 = vmul.f32 %v2238, 1.442695
        %v2243 = vpow.pop %v2242
        %v2244 = vmul.f32 %v2239, 1.442695
        %v2245 = vpow.pop %v2244
        %v2246 = vmul.f32 %v2240, 1.442695
        %v2247 = vpow.pop %v2246
        %v2248 = vmul.f32 %v2241, 1.442695
        %v2249 = vpow.pop %v2248
        %v2250 = vadd.f32 %v2243, 1.0
        %v2251 = vadd.f32 %v2245, 1.0
        %v2252 = vadd.f32 %v2247, 1.0
        %v2253 = vadd.f32 %v2249, 1.0
        %v2254 = vrcp.pop %v2250
        %v2255 = vmul.f32 1.0, %v2254
        %v2256 = vrcp.pop %v2251
        %v2257 = vmul.f32 1.0, %v2256
        %v2258 = vrcp.pop %v2252
        %v2259 = vmul.f32 1.0, %v2258
        %v2260 = vrcp.pop %v2253
        %v2261 = vmul.f32 1.0, %v2260
        %v2266 = vcombine.low %v2255, %v2257
        %v2267 = vcombine.low %v2259, %v2261
        %v2269 = vunpack.c.l.s4 1966171168
        %v2270 = vunpack.c.0.s8 %v2269
        %v2271 = vlaneseq
        %v2272 = vshrl.u32 %v2271, 7
        %v2273 = vsub.s32 %v2270, %v2272
        %v2274 = vrot.slane %v2266, %v2273
        %v2276 = vunpack.c.l.s4 1966171168
        %v2277 = vunpack.c.0.s8 %v2276
        %v2278 = vlaneseq
        %v2279 = vshrl.u32 %v2278, 7
        %v2280 = vsub.s32 %v2277, %v2279
        %v2281 = vrot.slane %v2267, %v2280
        %v2282 = vcombine.low %v2274, %v2281
        %v2284 = vunpack.c.l.s4 1966171168
        %v2285 = vunpack.c.0.s8 %v2284
        %v2286 = vlaneseq
        %v2287 = vshrl.u32 %v2286, 7
        %v2288 = vsub.s32 %v2285, %v2287
        %v2289 = vrot.slane %v2282, %v2288
        %v2291 = vlaneseq
        %vm2292 = vcmp.ge.s32.totalorder %v2291, 0
        %vm2293 = vcmp.lt.s32.totalorder %v2291, 512
        %vm2294 = vmand %vm2292, %vm2293
        %2295 = vst.msk [vmem:[%s654] sm:$0xf] %vm2294, %v2289
        %v2298 = vmul.f32 %v717, %v2266
        %v2299 = vmul.f32 %v718, %v2267
        %v2302 = vlaneseq
        %v2303 = vshrl.u32 %v2302, 7
        %v2304 = vsub.s32 0, %v2303
        %v2305 = vrot.slane %v2298, %v2304
        %v2306 = vlaneseq
        %v2307 = vshrl.u32 %v2306, 7
        %v2308 = vsub.s32 4, %v2307
        %v2309 = vrot.slane %v2298, %v2308
        %v2310 = vlaneseq
        %v2311 = vshrl.u32 %v2310, 7
        %v2312 = vsub.s32 0, %v2311
        %v2313 = vrot.slane %v2299, %v2312
        %v2314 = vlaneseq
        %v2315 = vshrl.u32 %v2314, 7
        %v2316 = vsub.s32 4, %v2315
        %v2317 = vrot.slane %v2299, %v2316
        %v2322 = vlaneseq
        %v2323 = vshrl.u32 %v2322, 7
        %v2324 = vsub.s32 1, %v2323
        %v2325 = vrot.slane %v2298, %v2324
        %v2326 = vlaneseq
        %v2327 = vshrl.u32 %v2326, 7
        %v2328 = vsub.s32 5, %v2327
        %v2329 = vrot.slane %v2298, %v2328
        %v2330 = vlaneseq
        %v2331 = vshrl.u32 %v2330, 7
        %v2332 = vsub.s32 1, %v2331
        %v2333 = vrot.slane %v2299, %v2332
        %v2334 = vlaneseq
        %v2335 = vshrl.u32 %v2334, 7
        %v2336 = vsub.s32 5, %v2335
        %v2337 = vrot.slane %v2299, %v2336
        %v2342 = vlaneseq
        %v2343 = vshrl.u32 %v2342, 7
        %v2344 = vsub.s32 2, %v2343
        %v2345 = vrot.slane %v2298, %v2344
        %v2346 = vlaneseq
        %v2347 = vshrl.u32 %v2346, 7
        %v2348 = vsub.s32 6, %v2347
        %v2349 = vrot.slane %v2298, %v2348
        %v2350 = vlaneseq
        %v2351 = vshrl.u32 %v2350, 7
        %v2352 = vsub.s32 2, %v2351
        %v2353 = vrot.slane %v2299, %v2352
        %v2354 = vlaneseq
        %v2355 = vshrl.u32 %v2354, 7
        %v2356 = vsub.s32 6, %v2355
        %v2357 = vrot.slane %v2299, %v2356
        %v2362 = vlaneseq
        %v2363 = vshrl.u32 %v2362, 7
        %v2364 = vsub.s32 3, %v2363
        %v2365 = vrot.slane %v2298, %v2364
        %v2366 = vlaneseq
        %v2367 = vshrl.u32 %v2366, 7
        %v2368 = vsub.s32 7, %v2367
        %v2369 = vrot.slane %v2298, %v2368
        %v2370 = vlaneseq
        %v2371 = vshrl.u32 %v2370, 7
        %v2372 = vsub.s32 3, %v2371
        %v2373 = vrot.slane %v2299, %v2372
        %v2374 = vlaneseq
        %v2375 = vshrl.u32 %v2374, 7
        %v2376 = vsub.s32 7, %v2375
        %v2377 = vrot.slane %v2299, %v2376
        %v2382 = vcombine.low %v2305, %v2309
        %v2383 = vcombine.low %v2313, %v2317
        %v2384 = vcombine.low %v2325, %v2329
        %v2385 = vcombine.low %v2333, %v2337
        %v2387 = vunpack.c.l.s4 1966171168
        %v2388 = vunpack.c.0.s8 %v2387
        %v2389 = vlaneseq
        %v2390 = vshrl.u32 %v2389, 7
        %v2391 = vsub.s32 %v2388, %v2390
        %v2392 = vrot.slane %v2382, %v2391
        %v2394 = vunpack.c.l.s4 1966171168
        %v2395 = vunpack.c.0.s8 %v2394
        %v2396 = vlaneseq
        %v2397 = vshrl.u32 %v2396, 7
        %v2398 = vsub.s32 %v2395, %v2397
        %v2399 = vrot.slane %v2383, %v2398
        %v2401 = vunpack.c.l.s4 1966171168
        %v2402 = vunpack.c.0.s8 %v2401
        %v2403 = vlaneseq
        %v2404 = vshrl.u32 %v2403, 7
        %v2405 = vsub.s32 %v2402, %v2404
        %v2406 = vrot.slane %v2384, %v2405
        %v2408 = vunpack.c.l.s4 1966171168
        %v2409 = vunpack.c.0.s8 %v2408
        %v2410 = vlaneseq
        %v2411 = vshrl.u32 %v2410, 7
        %v2412 = vsub.s32 %v2409, %v2411
        %v2413 = vrot.slane %v2385, %v2412
        %v2414 = vcombine.low %v2392, %v2399
        %v2415 = vcombine.low %v2406, %v2413
        %v2417 = vunpack.c.l.s4 1966171168
        %v2418 = vunpack.c.0.s8 %v2417
        %v2419 = vlaneseq
        %v2420 = vshrl.u32 %v2419, 7
        %v2421 = vsub.s32 %v2418, %v2420
        %v2422 = vrot.slane %v2414, %v2421
        %v2424 = vunpack.c.l.s4 1966171168
        %v2425 = vunpack.c.0.s8 %v2424
        %v2426 = vlaneseq
        %v2427 = vshrl.u32 %v2426, 7
        %v2428 = vsub.s32 %v2425, %v2427
        %v2429 = vrot.slane %v2415, %v2428
        %v2430 = vcombine.low %v2422, %v2429
        %v2431 = vcombine.low %v2345, %v2349
        %v2432 = vcombine.low %v2353, %v2357
        %v2433 = vcombine.low %v2365, %v2369
        %v2434 = vcombine.low %v2373, %v2377
        %v2436 = vunpack.c.l.s4 1966171168
        %v2437 = vunpack.c.0.s8 %v2436
        %v2438 = vlaneseq
        %v2439 = vshrl.u32 %v2438, 7
        %v2440 = vsub.s32 %v2437, %v2439
        %v2441 = vrot.slane %v2431, %v2440
        %v2443 = vunpack.c.l.s4 1966171168
        %v2444 = vunpack.c.0.s8 %v2443
        %v2445 = vlaneseq
        %v2446 = vshrl.u32 %v2445, 7
        %v2447 = vsub.s32 %v2444, %v2446
        %v2448 = vrot.slane %v2432, %v2447
        %v2450 = vunpack.c.l.s4 1966171168
        %v2451 = vunpack.c.0.s8 %v2450
        %v2452 = vlaneseq
        %v2453 = vshrl.u32 %v2452, 7
        %v2454 = vsub.s32 %v2451, %v2453
        %v2455 = vrot.slane %v2433, %v2454
        %v2457 = vunpack.c.l.s4 1966171168
        %v2458 = vunpack.c.0.s8 %v2457
        %v2459 = vlaneseq
        %v2460 = vshrl.u32 %v2459, 7
        %v2461 = vsub.s32 %v2458, %v2460
        %v2462 = vrot.slane %v2434, %v2461
        %v2463 = vcombine.low %v2441, %v2448
        %v2464 = vcombine.low %v2455, %v2462
        %v2466 = vunpack.c.l.s4 1966171168
        %v2467 = vunpack.c.0.s8 %v2466
        %v2468 = vlaneseq
        %v2469 = vshrl.u32 %v2468, 7
        %v2470 = vsub.s32 %v2467, %v2469
        %v2471 = vrot.slane %v2463, %v2470
        %v2473 = vunpack.c.l.s4 1966171168
        %v2474 = vunpack.c.0.s8 %v2473
        %v2475 = vlaneseq
        %v2476 = vshrl.u32 %v2475, 7
        %v2477 = vsub.s32 %v2474, %v2476
        %v2478 = vrot.slane %v2464, %v2477
        %v2479 = vcombine.low %v2471, %v2478
        %2482 = vst [vmem:[%s658] sm:$0xff] %v2430
        %2483 = vst [vmem:[%s658 + $0x8] sm:$0xff] %v2479
        %v2484 = vld [vmem:[%s6] sm:$0xff]
        %v2485 = vld [vmem:[%s6 + $0x8] sm:$0xff]
        %v2486 = vld [vmem:[%s6 + $0x10] sm:$0xff]
        %v2487 = vld [vmem:[%s6 + $0x18] sm:$0xff]
        %v2488 = vld [vmem:[%s6 + $0x20] sm:$0xff]
        %v2489 = vld [vmem:[%s6 + $0x28] sm:$0xff]
        %v2490 = vld [vmem:[%s6 + $0x30] sm:$0xff]
        %v2491 = vld [vmem:[%s6 + $0x38] sm:$0xff]
        %v2492 = vld [vmem:[%s6 + $0x40] sm:$0xff]
        %v2493 = vld [vmem:[%s6 + $0x48] sm:$0xff]
        %v2494 = vld [vmem:[%s6 + $0x50] sm:$0xff]
        %v2495 = vld [vmem:[%s6 + $0x58] sm:$0xff]
        %v2496 = vld [vmem:[%s6 + $0x60] sm:$0xff]
        %v2497 = vld [vmem:[%s6 + $0x68] sm:$0xff]
        %v2498 = vld [vmem:[%s6 + $0x70] sm:$0xff]
        %v2499 = vld [vmem:[%s6 + $0x78] sm:$0xff]
        %v2500 = vld [vmem:[%s6 + $0x80] sm:$0xff]
        %v2501 = vld [vmem:[%s6 + $0x88] sm:$0xff]
        %v2502 = vld [vmem:[%s6 + $0x90] sm:$0xff]
        %v2503 = vld [vmem:[%s6 + $0x98] sm:$0xff]
        %v2504 = vld [vmem:[%s6 + $0xa0] sm:$0xff]
        %v2505 = vld [vmem:[%s6 + $0xa8] sm:$0xff]
        %v2506 = vld [vmem:[%s6 + $0xb0] sm:$0xff]
        %v2507 = vld [vmem:[%s6 + $0xb8] sm:$0xff]
        %v2508 = vld [vmem:[%s6 + $0xc0] sm:$0xff]
        %v2509 = vld [vmem:[%s6 + $0xc8] sm:$0xff]
        %v2510 = vld [vmem:[%s6 + $0xd0] sm:$0xff]
        %v2511 = vld [vmem:[%s6 + $0xd8] sm:$0xff]
        %v2512 = vld [vmem:[%s6 + $0xe0] sm:$0xff]
        %v2513 = vld [vmem:[%s6 + $0xe8] sm:$0xff]
        %v2514 = vld [vmem:[%s6 + $0xf0] sm:$0xff]
        %v2515 = vld [vmem:[%s6 + $0xf8] sm:$0xff]
        %v2516 = vld [vmem:[%s6 + $0x100] sm:$0xff]
        %v2517 = vld [vmem:[%s6 + $0x108] sm:$0xff]
        %v2518 = vld [vmem:[%s6 + $0x110] sm:$0xff]
        %v2519 = vld [vmem:[%s6 + $0x118] sm:$0xff]
        %v2520 = vld [vmem:[%s6 + $0x120] sm:$0xff]
        %v2521 = vld [vmem:[%s6 + $0x128] sm:$0xff]
        %v2522 = vld [vmem:[%s6 + $0x130] sm:$0xff]
        %v2523 = vld [vmem:[%s6 + $0x138] sm:$0xff]
        %v2524 = vld [vmem:[%s6 + $0x140] sm:$0xff]
        %v2525 = vld [vmem:[%s6 + $0x148] sm:$0xff]
        %v2526 = vld [vmem:[%s6 + $0x150] sm:$0xff]
        %v2527 = vld [vmem:[%s6 + $0x158] sm:$0xff]
        %v2528 = vld [vmem:[%s6 + $0x160] sm:$0xff]
        %v2529 = vld [vmem:[%s6 + $0x168] sm:$0xff]
        %v2530 = vld [vmem:[%s6 + $0x170] sm:$0xff]
        %v2531 = vld [vmem:[%s6 + $0x178] sm:$0xff]
        %v2532 = vld [vmem:[%s6 + $0x180] sm:$0xff]
        %v2533 = vld [vmem:[%s6 + $0x188] sm:$0xff]
        %v2534 = vld [vmem:[%s6 + $0x190] sm:$0xff]
        %v2535 = vld [vmem:[%s6 + $0x198] sm:$0xff]
        %v2536 = vld [vmem:[%s6 + $0x1a0] sm:$0xff]
        %v2537 = vld [vmem:[%s6 + $0x1a8] sm:$0xff]
        %v2538 = vld [vmem:[%s6 + $0x1b0] sm:$0xff]
        %v2539 = vld [vmem:[%s6 + $0x1b8] sm:$0xff]
        %v2540 = vld [vmem:[%s6 + $0x1c0] sm:$0xff]
        %v2541 = vld [vmem:[%s6 + $0x1c8] sm:$0xff]
        %v2542 = vld [vmem:[%s6 + $0x1d0] sm:$0xff]
        %v2543 = vld [vmem:[%s6 + $0x1d8] sm:$0xff]
        %v2544 = vld [vmem:[%s6 + $0x1e0] sm:$0xff]
        %v2545 = vld [vmem:[%s6 + $0x1e8] sm:$0xff]
        %v2546 = vld [vmem:[%s6 + $0x1f0] sm:$0xff]
        %v2547 = vld [vmem:[%s6 + $0x1f8] sm:$0xff]
        %v2548 = vld [vmem:[%s6 + $0x200] sm:$0xff]
        %v2549 = vld [vmem:[%s6 + $0x208] sm:$0xff]
        %v2550 = vld [vmem:[%s6 + $0x210] sm:$0xff]
        %v2551 = vld [vmem:[%s6 + $0x218] sm:$0xff]
        %v2552 = vld [vmem:[%s6 + $0x220] sm:$0xff]
        %v2553 = vld [vmem:[%s6 + $0x228] sm:$0xff]
        %v2554 = vld [vmem:[%s6 + $0x230] sm:$0xff]
        %v2555 = vld [vmem:[%s6 + $0x238] sm:$0xff]
        %v2556 = vld [vmem:[%s6 + $0x240] sm:$0xff]
        %v2557 = vld [vmem:[%s6 + $0x248] sm:$0xff]
        %v2558 = vld [vmem:[%s6 + $0x250] sm:$0xff]
        %v2559 = vld [vmem:[%s6 + $0x258] sm:$0xff]
        %v2560 = vld [vmem:[%s6 + $0x260] sm:$0xff]
        %v2561 = vld [vmem:[%s6 + $0x268] sm:$0xff]
        %v2562 = vld [vmem:[%s6 + $0x270] sm:$0xff]
        %v2563 = vld [vmem:[%s6 + $0x278] sm:$0xff]
        %v2564 = vld [vmem:[%s6 + $0x280] sm:$0xff]
        %v2565 = vld [vmem:[%s6 + $0x288] sm:$0xff]
        %v2566 = vld [vmem:[%s6 + $0x290] sm:$0xff]
        %v2567 = vld [vmem:[%s6 + $0x298] sm:$0xff]
        %v2568 = vld [vmem:[%s6 + $0x2a0] sm:$0xff]
        %v2569 = vld [vmem:[%s6 + $0x2a8] sm:$0xff]
        %v2570 = vld [vmem:[%s6 + $0x2b0] sm:$0xff]
        %v2571 = vld [vmem:[%s6 + $0x2b8] sm:$0xff]
        %v2572 = vld [vmem:[%s6 + $0x2c0] sm:$0xff]
        %v2573 = vld [vmem:[%s6 + $0x2c8] sm:$0xff]
        %v2574 = vld [vmem:[%s6 + $0x2d0] sm:$0xff]
        %v2575 = vld [vmem:[%s6 + $0x2d8] sm:$0xff]
        %v2576 = vld [vmem:[%s6 + $0x2e0] sm:$0xff]
        %v2577 = vld [vmem:[%s6 + $0x2e8] sm:$0xff]
        %v2578 = vld [vmem:[%s6 + $0x2f0] sm:$0xff]
        %v2579 = vld [vmem:[%s6 + $0x2f8] sm:$0xff]
        %v2580 = vld [vmem:[%s6 + $0x300] sm:$0xff]
        %v2581 = vld [vmem:[%s6 + $0x308] sm:$0xff]
        %v2582 = vld [vmem:[%s6 + $0x310] sm:$0xff]
        %v2583 = vld [vmem:[%s6 + $0x318] sm:$0xff]
        %v2584 = vld [vmem:[%s6 + $0x320] sm:$0xff]
        %v2585 = vld [vmem:[%s6 + $0x328] sm:$0xff]
        %v2586 = vld [vmem:[%s6 + $0x330] sm:$0xff]
        %v2587 = vld [vmem:[%s6 + $0x338] sm:$0xff]
        %v2588 = vld [vmem:[%s6 + $0x340] sm:$0xff]
        %v2589 = vld [vmem:[%s6 + $0x348] sm:$0xff]
        %v2590 = vld [vmem:[%s6 + $0x350] sm:$0xff]
        %v2591 = vld [vmem:[%s6 + $0x358] sm:$0xff]
        %v2592 = vld [vmem:[%s6 + $0x360] sm:$0xff]
        %v2593 = vld [vmem:[%s6 + $0x368] sm:$0xff]
        %v2594 = vld [vmem:[%s6 + $0x370] sm:$0xff]
        %v2595 = vld [vmem:[%s6 + $0x378] sm:$0xff]
        %v2596 = vld [vmem:[%s6 + $0x380] sm:$0xff]
        %v2597 = vld [vmem:[%s6 + $0x388] sm:$0xff]
        %v2598 = vld [vmem:[%s6 + $0x390] sm:$0xff]
        %v2599 = vld [vmem:[%s6 + $0x398] sm:$0xff]
        %v2600 = vld [vmem:[%s6 + $0x3a0] sm:$0xff]
        %v2601 = vld [vmem:[%s6 + $0x3a8] sm:$0xff]
        %v2602 = vld [vmem:[%s6 + $0x3b0] sm:$0xff]
        %v2603 = vld [vmem:[%s6 + $0x3b8] sm:$0xff]
        %v2604 = vld [vmem:[%s6 + $0x3c0] sm:$0xff]
        %v2605 = vld [vmem:[%s6 + $0x3c8] sm:$0xff]
        %v2606 = vld [vmem:[%s6 + $0x3d0] sm:$0xff]
        %v2607 = vld [vmem:[%s6 + $0x3d8] sm:$0xff]
        %v2608 = vld [vmem:[%s6 + $0x3e0] sm:$0xff]
        %v2609 = vld [vmem:[%s6 + $0x3e8] sm:$0xff]
        %v2610 = vld [vmem:[%s6 + $0x3f0] sm:$0xff]
        %v2611 = vld [vmem:[%s6 + $0x3f8] sm:$0xff]
        %v2612 = vld [vmem:[%s6 + $0x400] sm:$0xff]
        %v2613 = vld [vmem:[%s6 + $0x408] sm:$0xff]
        %v2614 = vld [vmem:[%s6 + $0x410] sm:$0xff]
        %v2615 = vld [vmem:[%s6 + $0x418] sm:$0xff]
        %v2616 = vld [vmem:[%s6 + $0x420] sm:$0xff]
        %v2617 = vld [vmem:[%s6 + $0x428] sm:$0xff]
        %v2618 = vld [vmem:[%s6 + $0x430] sm:$0xff]
        %v2619 = vld [vmem:[%s6 + $0x438] sm:$0xff]
        %v2620 = vld [vmem:[%s6 + $0x440] sm:$0xff]
        %v2621 = vld [vmem:[%s6 + $0x448] sm:$0xff]
        %v2622 = vld [vmem:[%s6 + $0x450] sm:$0xff]
        %v2623 = vld [vmem:[%s6 + $0x458] sm:$0xff]
        %v2624 = vld [vmem:[%s6 + $0x460] sm:$0xff]
        %v2625 = vld [vmem:[%s6 + $0x468] sm:$0xff]
        %v2626 = vld [vmem:[%s6 + $0x470] sm:$0xff]
        %v2627 = vld [vmem:[%s6 + $0x478] sm:$0xff]
        %v2628 = vld [vmem:[%s6 + $0x480] sm:$0xff]
        %v2629 = vld [vmem:[%s6 + $0x488] sm:$0xff]
        %v2630 = vld [vmem:[%s6 + $0x490] sm:$0xff]
        %v2631 = vld [vmem:[%s6 + $0x498] sm:$0xff]
        %v2632 = vld [vmem:[%s6 + $0x4a0] sm:$0xff]
        %v2633 = vld [vmem:[%s6 + $0x4a8] sm:$0xff]
        %v2634 = vld [vmem:[%s6 + $0x4b0] sm:$0xff]
        %v2635 = vld [vmem:[%s6 + $0x4b8] sm:$0xff]
        %v2636 = vld [vmem:[%s6 + $0x4c0] sm:$0xff]
        %v2637 = vld [vmem:[%s6 + $0x4c8] sm:$0xff]
        %v2638 = vld [vmem:[%s6 + $0x4d0] sm:$0xff]
        %v2639 = vld [vmem:[%s6 + $0x4d8] sm:$0xff]
        %v2640 = vld [vmem:[%s6 + $0x4e0] sm:$0xff]
        %v2641 = vld [vmem:[%s6 + $0x4e8] sm:$0xff]
        %v2642 = vld [vmem:[%s6 + $0x4f0] sm:$0xff]
        %v2643 = vld [vmem:[%s6 + $0x4f8] sm:$0xff]
        %v2644 = vld [vmem:[%s6 + $0x500] sm:$0xff]
        %v2645 = vld [vmem:[%s6 + $0x508] sm:$0xff]
        %v2646 = vld [vmem:[%s6 + $0x510] sm:$0xff]
        %v2647 = vld [vmem:[%s6 + $0x518] sm:$0xff]
        %v2648 = vld [vmem:[%s6 + $0x520] sm:$0xff]
        %v2649 = vld [vmem:[%s6 + $0x528] sm:$0xff]
        %v2650 = vld [vmem:[%s6 + $0x530] sm:$0xff]
        %v2651 = vld [vmem:[%s6 + $0x538] sm:$0xff]
        %v2652 = vld [vmem:[%s6 + $0x540] sm:$0xff]
        %v2653 = vld [vmem:[%s6 + $0x548] sm:$0xff]
        %v2654 = vld [vmem:[%s6 + $0x550] sm:$0xff]
        %v2655 = vld [vmem:[%s6 + $0x558] sm:$0xff]
        %v2656 = vld [vmem:[%s6 + $0x560] sm:$0xff]
        %v2657 = vld [vmem:[%s6 + $0x568] sm:$0xff]
        %v2658 = vld [vmem:[%s6 + $0x570] sm:$0xff]
        %v2659 = vld [vmem:[%s6 + $0x578] sm:$0xff]
        %v2660 = vld [vmem:[%s6 + $0x580] sm:$0xff]
        %v2661 = vld [vmem:[%s6 + $0x588] sm:$0xff]
        %v2662 = vld [vmem:[%s6 + $0x590] sm:$0xff]
        %v2663 = vld [vmem:[%s6 + $0x598] sm:$0xff]
        %v2664 = vld [vmem:[%s6 + $0x5a0] sm:$0xff]
        %v2665 = vld [vmem:[%s6 + $0x5a8] sm:$0xff]
        %v2666 = vld [vmem:[%s6 + $0x5b0] sm:$0xff]
        %v2667 = vld [vmem:[%s6 + $0x5b8] sm:$0xff]
        %v2668 = vld [vmem:[%s6 + $0x5c0] sm:$0xff]
        %v2669 = vld [vmem:[%s6 + $0x5c8] sm:$0xff]
        %v2670 = vld [vmem:[%s6 + $0x5d0] sm:$0xff]
        %v2671 = vld [vmem:[%s6 + $0x5d8] sm:$0xff]
        %v2672 = vld [vmem:[%s6 + $0x5e0] sm:$0xff]
        %v2673 = vld [vmem:[%s6 + $0x5e8] sm:$0xff]
        %v2674 = vld [vmem:[%s6 + $0x5f0] sm:$0xff]
        %v2675 = vld [vmem:[%s6 + $0x5f8] sm:$0xff]
        %v2676 = vld [vmem:[%s6 + $0x600] sm:$0xff]
        %v2677 = vld [vmem:[%s6 + $0x608] sm:$0xff]
        %v2678 = vld [vmem:[%s6 + $0x610] sm:$0xff]
        %v2679 = vld [vmem:[%s6 + $0x618] sm:$0xff]
        %v2680 = vld [vmem:[%s6 + $0x620] sm:$0xff]
        %v2681 = vld [vmem:[%s6 + $0x628] sm:$0xff]
        %v2682 = vld [vmem:[%s6 + $0x630] sm:$0xff]
        %v2683 = vld [vmem:[%s6 + $0x638] sm:$0xff]
        %v2684 = vld [vmem:[%s6 + $0x640] sm:$0xff]
        %v2685 = vld [vmem:[%s6 + $0x648] sm:$0xff]
        %v2686 = vld [vmem:[%s6 + $0x650] sm:$0xff]
        %v2687 = vld [vmem:[%s6 + $0x658] sm:$0xff]
        %v2688 = vld [vmem:[%s6 + $0x660] sm:$0xff]
        %v2689 = vld [vmem:[%s6 + $0x668] sm:$0xff]
        %v2690 = vld [vmem:[%s6 + $0x670] sm:$0xff]
        %v2691 = vld [vmem:[%s6 + $0x678] sm:$0xff]
        %v2692 = vld [vmem:[%s6 + $0x680] sm:$0xff]
        %v2693 = vld [vmem:[%s6 + $0x688] sm:$0xff]
        %v2694 = vld [vmem:[%s6 + $0x690] sm:$0xff]
        %v2695 = vld [vmem:[%s6 + $0x698] sm:$0xff]
        %v2696 = vld [vmem:[%s6 + $0x6a0] sm:$0xff]
        %v2697 = vld [vmem:[%s6 + $0x6a8] sm:$0xff]
        %v2698 = vld [vmem:[%s6 + $0x6b0] sm:$0xff]
        %v2699 = vld [vmem:[%s6 + $0x6b8] sm:$0xff]
        %v2700 = vld [vmem:[%s6 + $0x6c0] sm:$0xff]
        %v2701 = vld [vmem:[%s6 + $0x6c8] sm:$0xff]
        %v2702 = vld [vmem:[%s6 + $0x6d0] sm:$0xff]
        %v2703 = vld [vmem:[%s6 + $0x6d8] sm:$0xff]
        %v2704 = vld [vmem:[%s6 + $0x6e0] sm:$0xff]
        %v2705 = vld [vmem:[%s6 + $0x6e8] sm:$0xff]
        %v2706 = vld [vmem:[%s6 + $0x6f0] sm:$0xff]
        %v2707 = vld [vmem:[%s6 + $0x6f8] sm:$0xff]
        %v2708 = vld [vmem:[%s6 + $0x700] sm:$0xff]
        %v2709 = vld [vmem:[%s6 + $0x708] sm:$0xff]
        %v2710 = vld [vmem:[%s6 + $0x710] sm:$0xff]
        %v2711 = vld [vmem:[%s6 + $0x718] sm:$0xff]
        %v2712 = vld [vmem:[%s6 + $0x720] sm:$0xff]
        %v2713 = vld [vmem:[%s6 + $0x728] sm:$0xff]
        %v2714 = vld [vmem:[%s6 + $0x730] sm:$0xff]
        %v2715 = vld [vmem:[%s6 + $0x738] sm:$0xff]
        %v2716 = vld [vmem:[%s6 + $0x740] sm:$0xff]
        %v2717 = vld [vmem:[%s6 + $0x748] sm:$0xff]
        %v2718 = vld [vmem:[%s6 + $0x750] sm:$0xff]
        %v2719 = vld [vmem:[%s6 + $0x758] sm:$0xff]
        %v2720 = vld [vmem:[%s6 + $0x760] sm:$0xff]
        %v2721 = vld [vmem:[%s6 + $0x768] sm:$0xff]
        %v2722 = vld [vmem:[%s6 + $0x770] sm:$0xff]
        %v2723 = vld [vmem:[%s6 + $0x778] sm:$0xff]
        %v2724 = vld [vmem:[%s6 + $0x780] sm:$0xff]
        %v2725 = vld [vmem:[%s6 + $0x788] sm:$0xff]
        %v2726 = vld [vmem:[%s6 + $0x790] sm:$0xff]
        %v2727 = vld [vmem:[%s6 + $0x798] sm:$0xff]
        %v2728 = vld [vmem:[%s6 + $0x7a0] sm:$0xff]
        %v2729 = vld [vmem:[%s6 + $0x7a8] sm:$0xff]
        %v2730 = vld [vmem:[%s6 + $0x7b0] sm:$0xff]
        %v2731 = vld [vmem:[%s6 + $0x7b8] sm:$0xff]
        %v2732 = vld [vmem:[%s6 + $0x7c0] sm:$0xff]
        %v2733 = vld [vmem:[%s6 + $0x7c8] sm:$0xff]
        %v2734 = vld [vmem:[%s6 + $0x7d0] sm:$0xff]
        %v2735 = vld [vmem:[%s6 + $0x7d8] sm:$0xff]
        %v2736 = vld [vmem:[%s6 + $0x7e0] sm:$0xff]
        %v2737 = vld [vmem:[%s6 + $0x7e8] sm:$0xff]
        %v2738 = vld [vmem:[%s6 + $0x7f0] sm:$0xff]
        %v2739 = vld [vmem:[%s6 + $0x7f8] sm:$0xff]
        %v2740 = vld [vmem:[#allocation10] sm:$0x1]
        %2741 = vmatprep.subr.mxu0 0.0
        %2742 = vmatpush1.msra.mxu0 %v2499
        %2743 = vmatprep.subr.mxu0 0.0
        %2744 = vmatpush1.msra.mxu0 %v2498
        %2745 = vmatprep.subr.mxu0 0.0
        %2746 = vmatpush1.msra.mxu0 %v2497
        %2747 = vmatprep.subr.mxu0 0.0
        %2748 = vmatpush1.msra.mxu0 %v2496
        %2749 = vmatprep.subr.mxu0 0.0
        %2750 = vmatpush1.msra.mxu0 %v2495
        %2751 = vmatprep.subr.mxu0 0.0
        %2752 = vmatpush1.msra.mxu0 %v2494
        %2753 = vmatprep.subr.mxu0 0.0
        %2754 = vmatpush1.msra.mxu0 %v2493
        %2755 = vmatprep.subr.mxu0 0.0
        %2756 = vmatpush1.msra.mxu0 %v2492
        %2757 = vmatprep.subr.mxu0 0.0
        %2758 = vmatpush1.msra.mxu0 %v2491
        %2759 = vmatprep.subr.mxu0 0.0
        %2760 = vmatpush1.msra.mxu0 %v2490
        %2761 = vmatprep.subr.mxu0 0.0
        %2762 = vmatpush1.msra.mxu0 %v2489
        %2763 = vmatprep.subr.mxu0 0.0
        %2764 = vmatpush1.msra.mxu0 %v2488
        %2765 = vmatprep.subr.mxu0 0.0
        %2766 = vmatpush1.msra.mxu0 %v2487
        %2767 = vmatprep.subr.mxu0 0.0
        %2768 = vmatpush1.msra.mxu0 %v2486
        %2769 = vmatprep.subr.mxu0 0.0
        %2770 = vmatpush1.msra.mxu0 %v2485
        %2771 = vmatprep.subr.mxu0 0.0
        %2772 = vmatpush1.msra.mxu0 %v2484
        %2773 = vmatprep.subr.mxu0 0.0
        %2774 = vmatpush2.msra.mxu0 %v2515
        %2775 = vmatprep.subr.mxu0 0.0
        %2776 = vmatpush2.msra.mxu0 %v2514
        %2777 = vmatprep.subr.mxu0 0.0
        %2778 = vmatpush2.msra.mxu0 %v2513
        %2779 = vmatprep.subr.mxu0 0.0
        %2780 = vmatpush2.msra.mxu0 %v2512
        %2781 = vmatprep.subr.mxu0 0.0
        %2782 = vmatpush2.msra.mxu0 %v2511
        %2783 = vmatprep.subr.mxu0 0.0
        %2784 = vmatpush2.msra.mxu0 %v2510
        %2785 = vmatprep.subr.mxu0 0.0
        %2786 = vmatpush2.msra.mxu0 %v2509
        %2787 = vmatprep.subr.mxu0 0.0
        %2788 = vmatpush2.msra.mxu0 %v2508
        %2789 = vmatprep.subr.mxu0 0.0
        %2790 = vmatpush2.msra.mxu0 %v2507
        %2791 = vmatprep.subr.mxu0 0.0
        %2792 = vmatpush2.msra.mxu0 %v2506
        %2793 = vmatprep.subr.mxu0 0.0
        %2794 = vmatpush2.msra.mxu0 %v2505
        %2795 = vmatprep.subr.mxu0 0.0
        %2796 = vmatpush2.msra.mxu0 %v2504
        %2797 = vmatprep.subr.mxu0 0.0
        %2798 = vmatpush2.msra.mxu0 %v2503
        %2799 = vmatprep.subr.mxu0 0.0
        %2800 = vmatpush2.msra.mxu0 %v2502
        %2801 = vmatprep.subr.mxu0 0.0
        %2802 = vmatpush2.msra.mxu0 %v2501
        %2803 = vmatprep.subr.mxu0 0.0
        %2804 = vmatpush2.msra.mxu0 %v2500
        %2805 = vmatprep.mubr.f32.mxu0 %v2309
        %2806 = vmatmul.mubr.f32.gmra.mxu0 %v2305
        %v2807 = vpop.f32.mrf.mxu0
        %v2808 = vadd.f32 %v2740, %v2807
        %v2809 = vpop.f32.mrf.mxu0
        %2810 = vdwg.mxu0
        %2811 = vmatprep.subr.mxu0 0.0
        %2812 = vmatpush1.msra.mxu0 %v2531
        %2813 = vmatprep.subr.mxu0 0.0
        %2814 = vmatpush1.msra.mxu0 %v2530
        %2815 = vmatprep.subr.mxu0 0.0
        %2816 = vmatpush1.msra.mxu0 %v2529
        %2817 = vmatprep.subr.mxu0 0.0
        %2818 = vmatpush1.msra.mxu0 %v2528
        %2819 = vmatprep.subr.mxu0 0.0
        %2820 = vmatpush1.msra.mxu0 %v2527
        %2821 = vmatprep.subr.mxu0 0.0
        %2822 = vmatpush1.msra.mxu0 %v2526
        %2823 = vmatprep.subr.mxu0 0.0
        %2824 = vmatpush1.msra.mxu0 %v2525
        %2825 = vmatprep.subr.mxu0 0.0
        %2826 = vmatpush1.msra.mxu0 %v2524
        %2827 = vmatprep.subr.mxu0 0.0
        %2828 = vmatpush1.msra.mxu0 %v2523
        %2829 = vmatprep.subr.mxu0 0.0
        %2830 = vmatpush1.msra.mxu0 %v2522
        %2831 = vmatprep.subr.mxu0 0.0
        %2832 = vmatpush1.msra.mxu0 %v2521
        %2833 = vmatprep.subr.mxu0 0.0
        %2834 = vmatpush1.msra.mxu0 %v2520
        %2835 = vmatprep.subr.mxu0 0.0
        %2836 = vmatpush1.msra.mxu0 %v2519
        %2837 = vmatprep.subr.mxu0 0.0
        %2838 = vmatpush1.msra.mxu0 %v2518
        %2839 = vmatprep.subr.mxu0 0.0
        %2840 = vmatpush1.msra.mxu0 %v2517
        %2841 = vmatprep.subr.mxu0 0.0
        %2842 = vmatpush1.msra.mxu0 %v2516
        %2843 = vmatprep.subr.mxu0 0.0
        %2844 = vmatpush2.msra.mxu0 %v2547
        %2845 = vmatprep.subr.mxu0 0.0
        %2846 = vmatpush2.msra.mxu0 %v2546
        %2847 = vmatprep.subr.mxu0 0.0
        %2848 = vmatpush2.msra.mxu0 %v2545
        %2849 = vmatprep.subr.mxu0 0.0
        %2850 = vmatpush2.msra.mxu0 %v2544
        %2851 = vmatprep.subr.mxu0 0.0
        %2852 = vmatpush2.msra.mxu0 %v2543
        %2853 = vmatprep.subr.mxu0 0.0
        %2854 = vmatpush2.msra.mxu0 %v2542
        %2855 = vmatprep.subr.mxu0 0.0
        %2856 = vmatpush2.msra.mxu0 %v2541
        %2857 = vmatprep.subr.mxu0 0.0
        %2858 = vmatpush2.msra.mxu0 %v2540
        %2859 = vmatprep.subr.mxu0 0.0
        %2860 = vmatpush2.msra.mxu0 %v2539
        %2861 = vmatprep.subr.mxu0 0.0
        %2862 = vmatpush2.msra.mxu0 %v2538
        %2863 = vmatprep.subr.mxu0 0.0
        %2864 = vmatpush2.msra.mxu0 %v2537
        %2865 = vmatprep.subr.mxu0 0.0
        %2866 = vmatpush2.msra.mxu0 %v2536
        %2867 = vmatprep.subr.mxu0 0.0
        %2868 = vmatpush2.msra.mxu0 %v2535
        %2869 = vmatprep.subr.mxu0 0.0
        %2870 = vmatpush2.msra.mxu0 %v2534
        %2871 = vmatprep.subr.mxu0 0.0
        %2872 = vmatpush2.msra.mxu0 %v2533
        %2873 = vmatprep.subr.mxu0 0.0
        %2874 = vmatpush2.msra.mxu0 %v2532
        %2875 = vmatprep.mubr.f32.mxu0 %v2317
        %2876 = vmatmul.mubr.f32.gmra.mxu0 %v2313
        %v2877 = vpop.f32.mrf.mxu0
        %v2878 = vadd.f32 %v2808, %v2877
        %v2879 = vpop.f32.mrf.mxu0
        %2880 = vdwg.mxu0
        %2881 = vmatprep.subr.mxu0 0.0
        %2882 = vmatpush1.msra.mxu0 %v2563
        %2883 = vmatprep.subr.mxu0 0.0
        %2884 = vmatpush1.msra.mxu0 %v2562
        %2885 = vmatprep.subr.mxu0 0.0
        %2886 = vmatpush1.msra.mxu0 %v2561
        %2887 = vmatprep.subr.mxu0 0.0
        %2888 = vmatpush1.msra.mxu0 %v2560
        %2889 = vmatprep.subr.mxu0 0.0
        %2890 = vmatpush1.msra.mxu0 %v2559
        %2891 = vmatprep.subr.mxu0 0.0
        %2892 = vmatpush1.msra.mxu0 %v2558
        %2893 = vmatprep.subr.mxu0 0.0
        %2894 = vmatpush1.msra.mxu0 %v2557
        %2895 = vmatprep.subr.mxu0 0.0
        %2896 = vmatpush1.msra.mxu0 %v2556
        %2897 = vmatprep.subr.mxu0 0.0
        %2898 = vmatpush1.msra.mxu0 %v2555
        %2899 = vmatprep.subr.mxu0 0.0
        %2900 = vmatpush1.msra.mxu0 %v2554
        %2901 = vmatprep.subr.mxu0 0.0
        %2902 = vmatpush1.msra.mxu0 %v2553
        %2903 = vmatprep.subr.mxu0 0.0
        %2904 = vmatpush1.msra.mxu0 %v2552
        %2905 = vmatprep.subr.mxu0 0.0
        %2906 = vmatpush1.msra.mxu0 %v2551
        %2907 = vmatprep.subr.mxu0 0.0
        %2908 = vmatpush1.msra.mxu0 %v2550
        %2909 = vmatprep.subr.mxu0 0.0
        %2910 = vmatpush1.msra.mxu0 %v2549
        %2911 = vmatprep.subr.mxu0 0.0
        %2912 = vmatpush1.msra.mxu0 %v2548
        %2913 = vmatprep.subr.mxu0 0.0
        %2914 = vmatpush2.msra.mxu0 %v2579
        %2915 = vmatprep.subr.mxu0 0.0
        %2916 = vmatpush2.msra.mxu0 %v2578
        %2917 = vmatprep.subr.mxu0 0.0
        %2918 = vmatpush2.msra.mxu0 %v2577
        %2919 = vmatprep.subr.mxu0 0.0
        %2920 = vmatpush2.msra.mxu0 %v2576
        %2921 = vmatprep.subr.mxu0 0.0
        %2922 = vmatpush2.msra.mxu0 %v2575
        %2923 = vmatprep.subr.mxu0 0.0
        %2924 = vmatpush2.msra.mxu0 %v2574
        %2925 = vmatprep.subr.mxu0 0.0
        %2926 = vmatpush2.msra.mxu0 %v2573
        %2927 = vmatprep.subr.mxu0 0.0
        %2928 = vmatpush2.msra.mxu0 %v2572
        %2929 = vmatprep.subr.mxu0 0.0
        %2930 = vmatpush2.msra.mxu0 %v2571
        %2931 = vmatprep.subr.mxu0 0.0
        %2932 = vmatpush2.msra.mxu0 %v2570
        %2933 = vmatprep.subr.mxu0 0.0
        %2934 = vmatpush2.msra.mxu0 %v2569
        %2935 = vmatprep.subr.mxu0 0.0
        %2936 = vmatpush2.msra.mxu0 %v2568
        %2937 = vmatprep.subr.mxu0 0.0
        %2938 = vmatpush2.msra.mxu0 %v2567
        %2939 = vmatprep.subr.mxu0 0.0
        %2940 = vmatpush2.msra.mxu0 %v2566
        %2941 = vmatprep.subr.mxu0 0.0
        %2942 = vmatpush2.msra.mxu0 %v2565
        %2943 = vmatprep.subr.mxu0 0.0
        %2944 = vmatpush2.msra.mxu0 %v2564
        %2945 = vmatprep.mubr.f32.mxu0 %v2329
        %2946 = vmatmul.mubr.f32.gmra.mxu0 %v2325
        %v2947 = vpop.f32.mrf.mxu0
        %v2948 = vadd.f32 %v2878, %v2947
        %v2949 = vpop.f32.mrf.mxu0
        %2950 = vdwg.mxu0
        %2951 = vmatprep.subr.mxu0 0.0
        %2952 = vmatpush1.msra.mxu0 %v2595
        %2953 = vmatprep.subr.mxu0 0.0
        %2954 = vmatpush1.msra.mxu0 %v2594
        %2955 = vmatprep.subr.mxu0 0.0
        %2956 = vmatpush1.msra.mxu0 %v2593
        %2957 = vmatprep.subr.mxu0 0.0
        %2958 = vmatpush1.msra.mxu0 %v2592
        %2959 = vmatprep.subr.mxu0 0.0
        %2960 = vmatpush1.msra.mxu0 %v2591
        %2961 = vmatprep.subr.mxu0 0.0
        %2962 = vmatpush1.msra.mxu0 %v2590
        %2963 = vmatprep.subr.mxu0 0.0
        %2964 = vmatpush1.msra.mxu0 %v2589
        %2965 = vmatprep.subr.mxu0 0.0
        %2966 = vmatpush1.msra.mxu0 %v2588
        %2967 = vmatprep.subr.mxu0 0.0
        %2968 = vmatpush1.msra.mxu0 %v2587
        %2969 = vmatprep.subr.mxu0 0.0
        %2970 = vmatpush1.msra.mxu0 %v2586
        %2971 = vmatprep.subr.mxu0 0.0
        %2972 = vmatpush1.msra.mxu0 %v2585
        %2973 = vmatprep.subr.mxu0 0.0
        %2974 = vmatpush1.msra.mxu0 %v2584
        %2975 = vmatprep.subr.mxu0 0.0
        %2976 = vmatpush1.msra.mxu0 %v2583
        %2977 = vmatprep.subr.mxu0 0.0
        %2978 = vmatpush1.msra.mxu0 %v2582
        %2979 = vmatprep.subr.mxu0 0.0
        %2980 = vmatpush1.msra.mxu0 %v2581
        %2981 = vmatprep.subr.mxu0 0.0
        %2982 = vmatpush1.msra.mxu0 %v2580
        %2983 = vmatprep.subr.mxu0 0.0
        %2984 = vmatpush2.msra.mxu0 %v2611
        %2985 = vmatprep.subr.mxu0 0.0
        %2986 = vmatpush2.msra.mxu0 %v2610
        %2987 = vmatprep.subr.mxu0 0.0
        %2988 = vmatpush2.msra.mxu0 %v2609
        %2989 = vmatprep.subr.mxu0 0.0
        %2990 = vmatpush2.msra.mxu0 %v2608
        %2991 = vmatprep.subr.mxu0 0.0
        %2992 = vmatpush2.msra.mxu0 %v2607
        %2993 = vmatprep.subr.mxu0 0.0
        %2994 = vmatpush2.msra.mxu0 %v2606
        %2995 = vmatprep.subr.mxu0 0.0
        %2996 = vmatpush2.msra.mxu0 %v2605
        %2997 = vmatprep.subr.mxu0 0.0
        %2998 = vmatpush2.msra.mxu0 %v2604
        %2999 = vmatprep.subr.mxu0 0.0
        %3000 = vmatpush2.msra.mxu0 %v2603
        %3001 = vmatprep.subr.mxu0 0.0
        %3002 = vmatpush2.msra.mxu0 %v2602
        %3003 = vmatprep.subr.mxu0 0.0
        %3004 = vmatpush2.msra.mxu0 %v2601
        %3005 = vmatprep.subr.mxu0 0.0
        %3006 = vmatpush2.msra.mxu0 %v2600
        %3007 = vmatprep.subr.mxu0 0.0
        %3008 = vmatpush2.msra.mxu0 %v2599
        %3009 = vmatprep.subr.mxu0 0.0
        %3010 = vmatpush2.msra.mxu0 %v2598
        %3011 = vmatprep.subr.mxu0 0.0
        %3012 = vmatpush2.msra.mxu0 %v2597
        %3013 = vmatprep.subr.mxu0 0.0
        %3014 = vmatpush2.msra.mxu0 %v2596
        %3015 = vmatprep.mubr.f32.mxu0 %v2337
        %3016 = vmatmul.mubr.f32.gmra.mxu0 %v2333
        %v3017 = vpop.f32.mrf.mxu0
        %v3018 = vadd.f32 %v2948, %v3017
        %v3019 = vpop.f32.mrf.mxu0
        %3020 = vdwg.mxu0
        %3021 = vmatprep.subr.mxu0 0.0
        %3022 = vmatpush1.msra.mxu0 %v2627
        %3023 = vmatprep.subr.mxu0 0.0
        %3024 = vmatpush1.msra.mxu0 %v2626
        %3025 = vmatprep.subr.mxu0 0.0
        %3026 = vmatpush1.msra.mxu0 %v2625
        %3027 = vmatprep.subr.mxu0 0.0
        %3028 = vmatpush1.msra.mxu0 %v2624
        %3029 = vmatprep.subr.mxu0 0.0
        %3030 = vmatpush1.msra.mxu0 %v2623
        %3031 = vmatprep.subr.mxu0 0.0
        %3032 = vmatpush1.msra.mxu0 %v2622
        %3033 = vmatprep.subr.mxu0 0.0
        %3034 = vmatpush1.msra.mxu0 %v2621
        %3035 = vmatprep.subr.mxu0 0.0
        %3036 = vmatpush1.msra.mxu0 %v2620
        %3037 = vmatprep.subr.mxu0 0.0
        %3038 = vmatpush1.msra.mxu0 %v2619
        %3039 = vmatprep.subr.mxu0 0.0
        %3040 = vmatpush1.msra.mxu0 %v2618
        %3041 = vmatprep.subr.mxu0 0.0
        %3042 = vmatpush1.msra.mxu0 %v2617
        %3043 = vmatprep.subr.mxu0 0.0
        %3044 = vmatpush1.msra.mxu0 %v2616
        %3045 = vmatprep.subr.mxu0 0.0
        %3046 = vmatpush1.msra.mxu0 %v2615
        %3047 = vmatprep.subr.mxu0 0.0
        %3048 = vmatpush1.msra.mxu0 %v2614
        %3049 = vmatprep.subr.mxu0 0.0
        %3050 = vmatpush1.msra.mxu0 %v2613
        %3051 = vmatprep.subr.mxu0 0.0
        %3052 = vmatpush1.msra.mxu0 %v2612
        %3053 = vmatprep.subr.mxu0 0.0
        %3054 = vmatpush2.msra.mxu0 %v2643
        %3055 = vmatprep.subr.mxu0 0.0
        %3056 = vmatpush2.msra.mxu0 %v2642
        %3057 = vmatprep.subr.mxu0 0.0
        %3058 = vmatpush2.msra.mxu0 %v2641
        %3059 = vmatprep.subr.mxu0 0.0
        %3060 = vmatpush2.msra.mxu0 %v2640
        %3061 = vmatprep.subr.mxu0 0.0
        %3062 = vmatpush2.msra.mxu0 %v2639
        %3063 = vmatprep.subr.mxu0 0.0
        %3064 = vmatpush2.msra.mxu0 %v2638
        %3065 = vmatprep.subr.mxu0 0.0
        %3066 = vmatpush2.msra.mxu0 %v2637
        %3067 = vmatprep.subr.mxu0 0.0
        %3068 = vmatpush2.msra.mxu0 %v2636
        %3069 = vmatprep.subr.mxu0 0.0
        %3070 = vmatpush2.msra.mxu0 %v2635
        %3071 = vmatprep.subr.mxu0 0.0
        %3072 = vmatpush2.msra.mxu0 %v2634
        %3073 = vmatprep.subr.mxu0 0.0
        %3074 = vmatpush2.msra.mxu0 %v2633
        %3075 = vmatprep.subr.mxu0 0.0
        %3076 = vmatpush2.msra.mxu0 %v2632
        %3077 = vmatprep.subr.mxu0 0.0
        %3078 = vmatpush2.msra.mxu0 %v2631
        %3079 = vmatprep.subr.mxu0 0.0
        %3080 = vmatpush2.msra.mxu0 %v2630
        %3081 = vmatprep.subr.mxu0 0.0
        %3082 = vmatpush2.msra.mxu0 %v2629
        %3083 = vmatprep.subr.mxu0 0.0
        %3084 = vmatpush2.msra.mxu0 %v2628
        %3085 = vmatprep.mubr.f32.mxu0 %v2349
        %3086 = vmatmul.mubr.f32.gmra.mxu0 %v2345
        %v3087 = vpop.f32.mrf.mxu0
        %v3088 = vadd.f32 %v3018, %v3087
        %v3089 = vpop.f32.mrf.mxu0
        %3090 = vdwg.mxu0
        %3091 = vmatprep.subr.mxu0 0.0
        %3092 = vmatpush1.msra.mxu0 %v2659
        %3093 = vmatprep.subr.mxu0 0.0
        %3094 = vmatpush1.msra.mxu0 %v2658
        %3095 = vmatprep.subr.mxu0 0.0
        %3096 = vmatpush1.msra.mxu0 %v2657
        %3097 = vmatprep.subr.mxu0 0.0
        %3098 = vmatpush1.msra.mxu0 %v2656
        %3099 = vmatprep.subr.mxu0 0.0
        %3100 = vmatpush1.msra.mxu0 %v2655
        %3101 = vmatprep.subr.mxu0 0.0
        %3102 = vmatpush1.msra.mxu0 %v2654
        %3103 = vmatprep.subr.mxu0 0.0
        %3104 = vmatpush1.msra.mxu0 %v2653
        %3105 = vmatprep.subr.mxu0 0.0
        %3106 = vmatpush1.msra.mxu0 %v2652
        %3107 = vmatprep.subr.mxu0 0.0
        %3108 = vmatpush1.msra.mxu0 %v2651
        %3109 = vmatprep.subr.mxu0 0.0
        %3110 = vmatpush1.msra.mxu0 %v2650
        %3111 = vmatprep.subr.mxu0 0.0
        %3112 = vmatpush1.msra.mxu0 %v2649
        %3113 = vmatprep.subr.mxu0 0.0
        %3114 = vmatpush1.msra.mxu0 %v2648
        %3115 = vmatprep.subr.mxu0 0.0
        %3116 = vmatpush1.msra.mxu0 %v2647
        %3117 = vmatprep.subr.mxu0 0.0
        %3118 = vmatpush1.msra.mxu0 %v2646
        %3119 = vmatprep.subr.mxu0 0.0
        %3120 = vmatpush1.msra.mxu0 %v2645
        %3121 = vmatprep.subr.mxu0 0.0
        %3122 = vmatpush1.msra.mxu0 %v2644
        %3123 = vmatprep.subr.mxu0 0.0
        %3124 = vmatpush2.msra.mxu0 %v2675
        %3125 = vmatprep.subr.mxu0 0.0
        %3126 = vmatpush2.msra.mxu0 %v2674
        %3127 = vmatprep.subr.mxu0 0.0
        %3128 = vmatpush2.msra.mxu0 %v2673
        %3129 = vmatprep.subr.mxu0 0.0
        %3130 = vmatpush2.msra.mxu0 %v2672
        %3131 = vmatprep.subr.mxu0 0.0
        %3132 = vmatpush2.msra.mxu0 %v2671
        %3133 = vmatprep.subr.mxu0 0.0
        %3134 = vmatpush2.msra.mxu0 %v2670
        %3135 = vmatprep.subr.mxu0 0.0
        %3136 = vmatpush2.msra.mxu0 %v2669
        %3137 = vmatprep.subr.mxu0 0.0
        %3138 = vmatpush2.msra.mxu0 %v2668
        %3139 = vmatprep.subr.mxu0 0.0
        %3140 = vmatpush2.msra.mxu0 %v2667
        %3141 = vmatprep.subr.mxu0 0.0
        %3142 = vmatpush2.msra.mxu0 %v2666
        %3143 = vmatprep.subr.mxu0 0.0
        %3144 = vmatpush2.msra.mxu0 %v2665
        %3145 = vmatprep.subr.mxu0 0.0
        %3146 = vmatpush2.msra.mxu0 %v2664
        %3147 = vmatprep.subr.mxu0 0.0
        %3148 = vmatpush2.msra.mxu0 %v2663
        %3149 = vmatprep.subr.mxu0 0.0
        %3150 = vmatpush2.msra.mxu0 %v2662
        %3151 = vmatprep.subr.mxu0 0.0
        %3152 = vmatpush2.msra.mxu0 %v2661
        %3153 = vmatprep.subr.mxu0 0.0
        %3154 = vmatpush2.msra.mxu0 %v2660
        %3155 = vmatprep.mubr.f32.mxu0 %v2357
        %3156 = vmatmul.mubr.f32.gmra.mxu0 %v2353
        %v3157 = vpop.f32.mrf.mxu0
        %v3158 = vadd.f32 %v3088, %v3157
        %v3159 = vpop.f32.mrf.mxu0
        %3160 = vdwg.mxu0
        %3161 = vmatprep.subr.mxu0 0.0
        %3162 = vmatpush1.msra.mxu0 %v2691
        %3163 = vmatprep.subr.mxu0 0.0
        %3164 = vmatpush1.msra.mxu0 %v2690
        %3165 = vmatprep.subr.mxu0 0.0
        %3166 = vmatpush1.msra.mxu0 %v2689
        %3167 = vmatprep.subr.mxu0 0.0
        %3168 = vmatpush1.msra.mxu0 %v2688
        %3169 = vmatprep.subr.mxu0 0.0
        %3170 = vmatpush1.msra.mxu0 %v2687
        %3171 = vmatprep.subr.mxu0 0.0
        %3172 = vmatpush1.msra.mxu0 %v2686
        %3173 = vmatprep.subr.mxu0 0.0
        %3174 = vmatpush1.msra.mxu0 %v2685
        %3175 = vmatprep.subr.mxu0 0.0
        %3176 = vmatpush1.msra.mxu0 %v2684
        %3177 = vmatprep.subr.mxu0 0.0
        %3178 = vmatpush1.msra.mxu0 %v2683
        %3179 = vmatprep.subr.mxu0 0.0
        %3180 = vmatpush1.msra.mxu0 %v2682
        %3181 = vmatprep.subr.mxu0 0.0
        %3182 = vmatpush1.msra.mxu0 %v2681
        %3183 = vmatprep.subr.mxu0 0.0
        %3184 = vmatpush1.msra.mxu0 %v2680
        %3185 = vmatprep.subr.mxu0 0.0
        %3186 = vmatpush1.msra.mxu0 %v2679
        %3187 = vmatprep.subr.mxu0 0.0
        %3188 = vmatpush1.msra.mxu0 %v2678
        %3189 = vmatprep.subr.mxu0 0.0
        %3190 = vmatpush1.msra.mxu0 %v2677
        %3191 = vmatprep.subr.mxu0 0.0
        %3192 = vmatpush1.msra.mxu0 %v2676
        %3193 = vmatprep.subr.mxu0 0.0
        %3194 = vmatpush2.msra.mxu0 %v2707
        %3195 = vmatprep.subr.mxu0 0.0
        %3196 = vmatpush2.msra.mxu0 %v2706
        %3197 = vmatprep.subr.mxu0 0.0
        %3198 = vmatpush2.msra.mxu0 %v2705
        %3199 = vmatprep.subr.mxu0 0.0
        %3200 = vmatpush2.msra.mxu0 %v2704
        %3201 = vmatprep.subr.mxu0 0.0
        %3202 = vmatpush2.msra.mxu0 %v2703
        %3203 = vmatprep.subr.mxu0 0.0
        %3204 = vmatpush2.msra.mxu0 %v2702
        %3205 = vmatprep.subr.mxu0 0.0
        %3206 = vmatpush2.msra.mxu0 %v2701
        %3207 = vmatprep.subr.mxu0 0.0
        %3208 = vmatpush2.msra.mxu0 %v2700
        %3209 = vmatprep.subr.mxu0 0.0
        %3210 = vmatpush2.msra.mxu0 %v2699
        %3211 = vmatprep.subr.mxu0 0.0
        %3212 = vmatpush2.msra.mxu0 %v2698
        %3213 = vmatprep.subr.mxu0 0.0
        %3214 = vmatpush2.msra.mxu0 %v2697
        %3215 = vmatprep.subr.mxu0 0.0
        %3216 = vmatpush2.msra.mxu0 %v2696
        %3217 = vmatprep.subr.mxu0 0.0
        %3218 = vmatpush2.msra.mxu0 %v2695
        %3219 = vmatprep.subr.mxu0 0.0
        %3220 = vmatpush2.msra.mxu0 %v2694
        %3221 = vmatprep.subr.mxu0 0.0
        %3222 = vmatpush2.msra.mxu0 %v2693
        %3223 = vmatprep.subr.mxu0 0.0
        %3224 = vmatpush2.msra.mxu0 %v2692
        %3225 = vmatprep.mubr.f32.mxu0 %v2369
        %3226 = vmatmul.mubr.f32.gmra.mxu0 %v2365
        %v3227 = vpop.f32.mrf.mxu0
        %v3228 = vadd.f32 %v3158, %v3227
        %v3229 = vpop.f32.mrf.mxu0
        %3230 = vdwg.mxu0
        %3231 = vmatprep.subr.mxu0 0.0
        %3232 = vmatpush1.msra.mxu0 %v2723
        %3233 = vmatprep.subr.mxu0 0.0
        %3234 = vmatpush1.msra.mxu0 %v2722
        %3235 = vmatprep.subr.mxu0 0.0
        %3236 = vmatpush1.msra.mxu0 %v2721
        %3237 = vmatprep.subr.mxu0 0.0
        %3238 = vmatpush1.msra.mxu0 %v2720
        %3239 = vmatprep.subr.mxu0 0.0
        %3240 = vmatpush1.msra.mxu0 %v2719
        %3241 = vmatprep.subr.mxu0 0.0
        %3242 = vmatpush1.msra.mxu0 %v2718
        %3243 = vmatprep.subr.mxu0 0.0
        %3244 = vmatpush1.msra.mxu0 %v2717
        %3245 = vmatprep.subr.mxu0 0.0
        %3246 = vmatpush1.msra.mxu0 %v2716
        %3247 = vmatprep.subr.mxu0 0.0
        %3248 = vmatpush1.msra.mxu0 %v2715
        %3249 = vmatprep.subr.mxu0 0.0
        %3250 = vmatpush1.msra.mxu0 %v2714
        %3251 = vmatprep.subr.mxu0 0.0
        %3252 = vmatpush1.msra.mxu0 %v2713
        %3253 = vmatprep.subr.mxu0 0.0
        %3254 = vmatpush1.msra.mxu0 %v2712
        %3255 = vmatprep.subr.mxu0 0.0
        %3256 = vmatpush1.msra.mxu0 %v2711
        %3257 = vmatprep.subr.mxu0 0.0
        %3258 = vmatpush1.msra.mxu0 %v2710
        %3259 = vmatprep.subr.mxu0 0.0
        %3260 = vmatpush1.msra.mxu0 %v2709
        %3261 = vmatprep.subr.mxu0 0.0
        %3262 = vmatpush1.msra.mxu0 %v2708
        %3263 = vmatprep.subr.mxu0 0.0
        %3264 = vmatpush2.msra.mxu0 %v2739
        %3265 = vmatprep.subr.mxu0 0.0
        %3266 = vmatpush2.msra.mxu0 %v2738
        %3267 = vmatprep.subr.mxu0 0.0
        %3268 = vmatpush2.msra.mxu0 %v2737
        %3269 = vmatprep.subr.mxu0 0.0
        %3270 = vmatpush2.msra.mxu0 %v2736
        %3271 = vmatprep.subr.mxu0 0.0
        %3272 = vmatpush2.msra.mxu0 %v2735
        %3273 = vmatprep.subr.mxu0 0.0
        %3274 = vmatpush2.msra.mxu0 %v2734
        %3275 = vmatprep.subr.mxu0 0.0
        %3276 = vmatpush2.msra.mxu0 %v2733
        %3277 = vmatprep.subr.mxu0 0.0
        %3278 = vmatpush2.msra.mxu0 %v2732
        %3279 = vmatprep.subr.mxu0 0.0
        %3280 = vmatpush2.msra.mxu0 %v2731
        %3281 = vmatprep.subr.mxu0 0.0
        %3282 = vmatpush2.msra.mxu0 %v2730
        %3283 = vmatprep.subr.mxu0 0.0
        %3284 = vmatpush2.msra.mxu0 %v2729
        %3285 = vmatprep.subr.mxu0 0.0
        %3286 = vmatpush2.msra.mxu0 %v2728
        %3287 = vmatprep.subr.mxu0 0.0
        %3288 = vmatpush2.msra.mxu0 %v2727
        %3289 = vmatprep.subr.mxu0 0.0
        %3290 = vmatpush2.msra.mxu0 %v2726
        %3291 = vmatprep.subr.mxu0 0.0
        %3292 = vmatpush2.msra.mxu0 %v2725
        %3293 = vmatprep.subr.mxu0 0.0
        %3294 = vmatpush2.msra.mxu0 %v2724
        %3295 = vmatprep.mubr.f32.mxu0 %v2377
        %3296 = vmatmul.mubr.f32.gmra.mxu0 %v2373
        %v3297 = vpop.f32.mrf.mxu0
        %v3298 = vadd.f32 %v3228, %v3297
        %v3299 = vpop.f32.mrf.mxu0
        %3300 = vdwg.mxu0
        %v3301 = vld [vmem:[#allocation14] sm:$0xff]
        %v3302 = vld [vmem:[#allocation14 + $0x8] sm:$0xff]
        %v3303 = vld [vmem:[#allocation14 + $0x10] sm:$0xff]
        %v3304 = vld [vmem:[#allocation14 + $0x18] sm:$0xff]
        %v3305 = vld [vmem:[#allocation14 + $0x20] sm:$0xff]
        %v3306 = vld [vmem:[#allocation14 + $0x28] sm:$0xff]
        %v3307 = vld [vmem:[#allocation14 + $0x30] sm:$0xff]
        %v3308 = vld [vmem:[#allocation14 + $0x38] sm:$0xff]
        %vm3309 = vcmask 523264
        %v3311 = vsel %vm3309, %v3298, 0
        %3313 = vmatprep.subr.mxu0 0.0
        %3314 = vmatpush1.msra.mxu0 0.0
        %3315 = vmatprep.subr.mxu0 0.0
        %3316 = vmatpush1.msra.mxu0 0.0
        %3317 = vmatprep.subr.mxu0 0.0
        %3318 = vmatpush1.msra.mxu0 0.0
        %3319 = vmatprep.subr.mxu0 0.0
        %3320 = vmatpush1.msra.mxu0 0.0
        %3321 = vmatprep.subr.mxu0 0.0
        %3322 = vmatpush1.msra.mxu0 0.0
        %3323 = vmatprep.subr.mxu0 0.0
        %3324 = vmatpush1.msra.mxu0 0.0
        %3325 = vmatprep.subr.mxu0 0.0
        %3326 = vmatpush1.msra.mxu0 0.0
        %3327 = vmatprep.subr.mxu0 0.0
        %3328 = vmatpush1.msra.mxu0 0.0
        %3329 = vmatprep.subr.mxu0 0.0
        %3330 = vmatpush1.msra.mxu0 %v3308
        %3331 = vmatprep.subr.mxu0 0.0
        %3332 = vmatpush1.msra.mxu0 %v3307
        %3333 = vmatprep.subr.mxu0 0.0
        %3334 = vmatpush1.msra.mxu0 %v3306
        %3335 = vmatprep.subr.mxu0 0.0
        %3336 = vmatpush1.msra.mxu0 %v3305
        %3337 = vmatprep.subr.mxu0 0.0
        %3338 = vmatpush1.msra.mxu0 %v3304
        %3339 = vmatprep.subr.mxu0 0.0
        %3340 = vmatpush1.msra.mxu0 %v3303
        %3341 = vmatprep.subr.mxu0 0.0
        %3342 = vmatpush1.msra.mxu0 %v3302
        %3343 = vmatprep.subr.mxu0 0.0
        %3344 = vmatpush1.msra.mxu0 %v3301
        %3345 = vmatprep.subr.mxu0 0.0
        %3346 = vmatpush2.msra.mxu0 0.0
        %3347 = vmatprep.subr.mxu0 0.0
        %3348 = vmatpush2.msra.mxu0 0.0
        %3349 = vmatprep.subr.mxu0 0.0
        %3350 = vmatpush2.msra.mxu0 0.0
        %3351 = vmatprep.subr.mxu0 0.0
        %3352 = vmatpush2.msra.mxu0 0.0
        %3353 = vmatprep.subr.mxu0 0.0
        %3354 = vmatpush2.msra.mxu0 0.0
        %3355 = vmatprep.subr.mxu0 0.0
        %3356 = vmatpush2.msra.mxu0 0.0
        %3357 = vmatprep.subr.mxu0 0.0
        %3358 = vmatpush2.msra.mxu0 0.0
        %3359 = vmatprep.subr.mxu0 0.0
        %3360 = vmatpush2.msra.mxu0 0.0
        %3361 = vmatprep.subr.mxu0 0.0
        %3362 = vmatpush2.msra.mxu0 0.0
        %3363 = vmatprep.subr.mxu0 0.0
        %3364 = vmatpush2.msra.mxu0 0.0
        %3365 = vmatprep.subr.mxu0 0.0
        %3366 = vmatpush2.msra.mxu0 0.0
        %3367 = vmatprep.subr.mxu0 0.0
        %3368 = vmatpush2.msra.mxu0 0.0
        %3369 = vmatprep.subr.mxu0 0.0
        %3370 = vmatpush2.msra.mxu0 0.0
        %3371 = vmatprep.subr.mxu0 0.0
        %3372 = vmatpush2.msra.mxu0 0.0
        %3373 = vmatprep.subr.mxu0 0.0
        %3374 = vmatpush2.msra.mxu0 0.0
        %3375 = vmatprep.subr.mxu0 0.0
        %3376 = vmatpush2.msra.mxu0 0.0
        %3377 = vmatprep.mubr.f32.mxu0 0.0
        %3378 = vmatmul.mubr.f32.gmra.mxu0 %v3311
        %v3379 = vpop.f32.mrf.mxu0
        %v3380 = vadd.f32 0.0, %v3379
        %v3381 = vpop.f32.mrf.mxu0
        %3382 = vdwg.mxu0
        %v3383 = vld [vmem:[#allocation16] sm:$0xff]
        %v3384 = vld [vmem:[#allocation16 + $0x8] sm:$0xff]
        %v3385 = vld [vmem:[#allocation16 + $0x10] sm:$0xff]
        %v3386 = vld [vmem:[#allocation16 + $0x18] sm:$0xff]
        %vm3387 = vcmask 261120
        %v3389 = vsel %vm3387, %v3380, 0
        %3391 = vmatprep.subr.mxu0 0.0
        %3392 = vmatpush1.msra.mxu0 0.0
        %3393 = vmatprep.subr.mxu0 0.0
        %3394 = vmatpush1.msra.mxu0 0.0
        %3395 = vmatprep.subr.mxu0 0.0
        %3396 = vmatpush1.msra.mxu0 0.0
        %3397 = vmatprep.subr.mxu0 0.0
        %3398 = vmatpush1.msra.mxu0 0.0
        %3399 = vmatprep.subr.mxu0 0.0
        %3400 = vmatpush1.msra.mxu0 0.0
        %3401 = vmatprep.subr.mxu0 0.0
        %3402 = vmatpush1.msra.mxu0 0.0
        %3403 = vmatprep.subr.mxu0 0.0
        %3404 = vmatpush1.msra.mxu0 0.0
        %3405 = vmatprep.subr.mxu0 0.0
        %3406 = vmatpush1.msra.mxu0 0.0
        %3407 = vmatprep.subr.mxu0 0.0
        %3408 = vmatpush1.msra.mxu0 0.0
        %3409 = vmatprep.subr.mxu0 0.0
        %3410 = vmatpush1.msra.mxu0 0.0
        %3411 = vmatprep.subr.mxu0 0.0
        %3412 = vmatpush1.msra.mxu0 0.0
        %3413 = vmatprep.subr.mxu0 0.0
        %3414 = vmatpush1.msra.mxu0 0.0
        %3415 = vmatprep.subr.mxu0 0.0
        %3416 = vmatpush1.msra.mxu0 %v3386
        %3417 = vmatprep.subr.mxu0 0.0
        %3418 = vmatpush1.msra.mxu0 %v3385
        %3419 = vmatprep.subr.mxu0 0.0
        %3420 = vmatpush1.msra.mxu0 %v3384
        %3421 = vmatprep.subr.mxu0 0.0
        %3422 = vmatpush1.msra.mxu0 %v3383
        %3423 = vmatprep.subr.mxu0 0.0
        %3424 = vmatpush2.msra.mxu0 0.0
        %3425 = vmatprep.subr.mxu0 0.0
        %3426 = vmatpush2.msra.mxu0 0.0
        %3427 = vmatprep.subr.mxu0 0.0
        %3428 = vmatpush2.msra.mxu0 0.0
        %3429 = vmatprep.subr.mxu0 0.0
        %3430 = vmatpush2.msra.mxu0 0.0
        %3431 = vmatprep.subr.mxu0 0.0
        %3432 = vmatpush2.msra.mxu0 0.0
        %3433 = vmatprep.subr.mxu0 0.0
        %3434 = vmatpush2.msra.mxu0 0.0
        %3435 = vmatprep.subr.mxu0 0.0
        %3436 = vmatpush2.msra.mxu0 0.0
        %3437 = vmatprep.subr.mxu0 0.0
        %3438 = vmatpush2.msra.mxu0 0.0
        %3439 = vmatprep.subr.mxu0 0.0
        %3440 = vmatpush2.msra.mxu0 0.0
        %3441 = vmatprep.subr.mxu0 0.0
        %3442 = vmatpush2.msra.mxu0 0.0
        %3443 = vmatprep.subr.mxu0 0.0
        %3444 = vmatpush2.msra.mxu0 0.0
        %3445 = vmatprep.subr.mxu0 0.0
        %3446 = vmatpush2.msra.mxu0 0.0
        %3447 = vmatprep.subr.mxu0 0.0
        %3448 = vmatpush2.msra.mxu0 0.0
        %3449 = vmatprep.subr.mxu0 0.0
        %3450 = vmatpush2.msra.mxu0 0.0
        %3451 = vmatprep.subr.mxu0 0.0
        %3452 = vmatpush2.msra.mxu0 0.0
        %3453 = vmatprep.subr.mxu0 0.0
        %3454 = vmatpush2.msra.mxu0 0.0
        %3455 = vmatprep.mubr.f32.mxu0 0.0
        %3456 = vmatmul.mubr.f32.gmra.mxu0 %v3389
        %v3457 = vpop.f32.mrf.mxu0
        %v3458 = vadd.f32 0.0, %v3457
        %v3459 = vpop.f32.mrf.mxu0
        %3460 = vdwg.mxu0
        %v3461 = vsub.f32 %v3298, %v3458
        %v3462 = vmul.f32 %v3461, %v3461
        %v3464 = vsel %vm3309, %v3462, 0
        %3466 = vmatprep.subr.mxu0 0.0
        %3467 = vmatpush1.msra.mxu0 0.0
        %3468 = vmatprep.subr.mxu0 0.0
        %3469 = vmatpush1.msra.mxu0 0.0
        %3470 = vmatprep.subr.mxu0 0.0
        %3471 = vmatpush1.msra.mxu0 0.0
        %3472 = vmatprep.subr.mxu0 0.0
        %3473 = vmatpush1.msra.mxu0 0.0
        %3474 = vmatprep.subr.mxu0 0.0
        %3475 = vmatpush1.msra.mxu0 0.0
        %3476 = vmatprep.subr.mxu0 0.0
        %3477 = vmatpush1.msra.mxu0 0.0
        %3478 = vmatprep.subr.mxu0 0.0
        %3479 = vmatpush1.msra.mxu0 0.0
        %3480 = vmatprep.subr.mxu0 0.0
        %3481 = vmatpush1.msra.mxu0 0.0
        %3482 = vmatprep.subr.mxu0 0.0
        %3483 = vmatpush1.msra.mxu0 %v3308
        %3484 = vmatprep.subr.mxu0 0.0
        %3485 = vmatpush1.msra.mxu0 %v3307
        %3486 = vmatprep.subr.mxu0 0.0
        %3487 = vmatpush1.msra.mxu0 %v3306
        %3488 = vmatprep.subr.mxu0 0.0
        %3489 = vmatpush1.msra.mxu0 %v3305
        %3490 = vmatprep.subr.mxu0 0.0
        %3491 = vmatpush1.msra.mxu0 %v3304
        %3492 = vmatprep.subr.mxu0 0.0
        %3493 = vmatpush1.msra.mxu0 %v3303
        %3494 = vmatprep.subr.mxu0 0.0
        %3495 = vmatpush1.msra.mxu0 %v3302
        %3496 = vmatprep.subr.mxu0 0.0
        %3497 = vmatpush1.msra.mxu0 %v3301
        %3498 = vmatprep.subr.mxu0 0.0
        %3499 = vmatpush2.msra.mxu0 0.0
        %3500 = vmatprep.subr.mxu0 0.0
        %3501 = vmatpush2.msra.mxu0 0.0
        %3502 = vmatprep.subr.mxu0 0.0
        %3503 = vmatpush2.msra.mxu0 0.0
        %3504 = vmatprep.subr.mxu0 0.0
        %3505 = vmatpush2.msra.mxu0 0.0
        %3506 = vmatprep.subr.mxu0 0.0
        %3507 = vmatpush2.msra.mxu0 0.0
        %3508 = vmatprep.subr.mxu0 0.0
        %3509 = vmatpush2.msra.mxu0 0.0
        %3510 = vmatprep.subr.mxu0 0.0
        %3511 = vmatpush2.msra.mxu0 0.0
        %3512 = vmatprep.subr.mxu0 0.0
        %3513 = vmatpush2.msra.mxu0 0.0
        %3514 = vmatprep.subr.mxu0 0.0
        %3515 = vmatpush2.msra.mxu0 0.0
        %3516 = vmatprep.subr.mxu0 0.0
        %3517 = vmatpush2.msra.mxu0 0.0
        %3518 = vmatprep.subr.mxu0 0.0
        %3519 = vmatpush2.msra.mxu0 0.0
        %3520 = vmatprep.subr.mxu0 0.0
        %3521 = vmatpush2.msra.mxu0 0.0
        %3522 = vmatprep.subr.mxu0 0.0
        %3523 = vmatpush2.msra.mxu0 0.0
        %3524 = vmatprep.subr.mxu0 0.0
        %3525 = vmatpush2.msra.mxu0 0.0
        %3526 = vmatprep.subr.mxu0 0.0
        %3527 = vmatpush2.msra.mxu0 0.0
        %3528 = vmatprep.subr.mxu0 0.0
        %3529 = vmatpush2.msra.mxu0 0.0
        %3530 = vmatprep.mubr.f32.mxu0 0.0
        %3531 = vmatmul.mubr.f32.gmra.mxu0 %v3464
        %v3532 = vpop.f32.mrf.mxu0
        %v3533 = vadd.f32 0.0, %v3532
        %v3534 = vpop.f32.mrf.mxu0
        %3535 = vdwg.mxu0
        %v3537 = vsel %vm3387, %v3533, 0
        %3539 = vmatprep.subr.mxu0 0.0
        %3540 = vmatpush1.msra.mxu0 0.0
        %3541 = vmatprep.subr.mxu0 0.0
        %3542 = vmatpush1.msra.mxu0 0.0
        %3543 = vmatprep.subr.mxu0 0.0
        %3544 = vmatpush1.msra.mxu0 0.0
        %3545 = vmatprep.subr.mxu0 0.0
        %3546 = vmatpush1.msra.mxu0 0.0
        %3547 = vmatprep.subr.mxu0 0.0
        %3548 = vmatpush1.msra.mxu0 0.0
        %3549 = vmatprep.subr.mxu0 0.0
        %3550 = vmatpush1.msra.mxu0 0.0
        %3551 = vmatprep.subr.mxu0 0.0
        %3552 = vmatpush1.msra.mxu0 0.0
        %3553 = vmatprep.subr.mxu0 0.0
        %3554 = vmatpush1.msra.mxu0 0.0
        %3555 = vmatprep.subr.mxu0 0.0
        %3556 = vmatpush1.msra.mxu0 0.0
        %3557 = vmatprep.subr.mxu0 0.0
        %3558 = vmatpush1.msra.mxu0 0.0
        %3559 = vmatprep.subr.mxu0 0.0
        %3560 = vmatpush1.msra.mxu0 0.0
        %3561 = vmatprep.subr.mxu0 0.0
        %3562 = vmatpush1.msra.mxu0 0.0
        %3563 = vmatprep.subr.mxu0 0.0
        %3564 = vmatpush1.msra.mxu0 %v3386
        %3565 = vmatprep.subr.mxu0 0.0
        %3566 = vmatpush1.msra.mxu0 %v3385
        %3567 = vmatprep.subr.mxu0 0.0
        %3568 = vmatpush1.msra.mxu0 %v3384
        %3569 = vmatprep.subr.mxu0 0.0
        %3570 = vmatpush1.msra.mxu0 %v3383
        %3571 = vmatprep.subr.mxu0 0.0
        %3572 = vmatpush2.msra.mxu0 0.0
        %3573 = vmatprep.subr.mxu0 0.0
        %3574 = vmatpush2.msra.mxu0 0.0
        %3575 = vmatprep.subr.mxu0 0.0
        %3576 = vmatpush2.msra.mxu0 0.0
        %3577 = vmatprep.subr.mxu0 0.0
        %3578 = vmatpush2.msra.mxu0 0.0
        %3579 = vmatprep.subr.mxu0 0.0
        %3580 = vmatpush2.msra.mxu0 0.0
        %3581 = vmatprep.subr.mxu0 0.0
        %3582 = vmatpush2.msra.mxu0 0.0
        %3583 = vmatprep.subr.mxu0 0.0
        %3584 = vmatpush2.msra.mxu0 0.0
        %3585 = vmatprep.subr.mxu0 0.0
        %3586 = vmatpush2.msra.mxu0 0.0
        %3587 = vmatprep.subr.mxu0 0.0
        %3588 = vmatpush2.msra.mxu0 0.0
        %3589 = vmatprep.subr.mxu0 0.0
        %3590 = vmatpush2.msra.mxu0 0.0
        %3591 = vmatprep.subr.mxu0 0.0
        %3592 = vmatpush2.msra.mxu0 0.0
        %3593 = vmatprep.subr.mxu0 0.0
        %3594 = vmatpush2.msra.mxu0 0.0
        %3595 = vmatprep.subr.mxu0 0.0
        %3596 = vmatpush2.msra.mxu0 0.0
        %3597 = vmatprep.subr.mxu0 0.0
        %3598 = vmatpush2.msra.mxu0 0.0
        %3599 = vmatprep.subr.mxu0 0.0
        %3600 = vmatpush2.msra.mxu0 0.0
        %3601 = vmatprep.subr.mxu0 0.0
        %3602 = vmatpush2.msra.mxu0 0.0
        %3603 = vmatprep.mubr.f32.mxu0 0.0
        %3604 = vmatmul.mubr.f32.gmra.mxu0 %v3537
        %v3605 = vpop.f32.mrf.mxu0
        %v3606 = vadd.f32 1e-06, %v3605
        %v3607 = vpop.f32.mrf.mxu0
        %3608 = vdwg.mxu0
        %v3609 = vrsqrt.pop %v3606
        %v3610 = vmul.f32 %v3461, %v3609
        %v3611 = vld [vmem:[#allocation11] sm:$0x1]
        %v3612 = vmul.f32 %v3610, %v3611
        %v3613 = vld [vmem:[#allocation13] sm:$0x1]
        %v3614 = vadd.f32 %v3612, %v3613
        %v3615 = vmax.f32 %v3614, 0.0
        %v3616 = vld [vmem:[%s12] sm:$0xff]
        %v3617 = vld [vmem:[%s12 + $0x8] sm:$0xff]
        %v3618 = vld [vmem:[%s12 + $0x10] sm:$0xff]
        %v3619 = vld [vmem:[%s12 + $0x18] sm:$0xff]
        %v3620 = vld [vmem:[%s12 + $0x20] sm:$0xff]
        %v3621 = vld [vmem:[%s12 + $0x28] sm:$0xff]
        %v3622 = vld [vmem:[%s12 + $0x30] sm:$0xff]
        %v3623 = vld [vmem:[%s12 + $0x38] sm:$0xff]
        %v3624 = vld [vmem:[#allocation17] sm:$0x1]
        %v3626 = vsel %vm3309, %v3615, 0
        %3628 = vmatprep.subr.mxu0 0.0
        %3629 = vmatpush1.msra.mxu0 0.0
        %3630 = vmatprep.subr.mxu0 0.0
        %3631 = vmatpush1.msra.mxu0 0.0
        %3632 = vmatprep.subr.mxu0 0.0
        %3633 = vmatpush1.msra.mxu0 0.0
        %3634 = vmatprep.subr.mxu0 0.0
        %3635 = vmatpush1.msra.mxu0 0.0
        %3636 = vmatprep.subr.mxu0 0.0
        %3637 = vmatpush1.msra.mxu0 0.0
        %3638 = vmatprep.subr.mxu0 0.0
        %3639 = vmatpush1.msra.mxu0 0.0
        %3640 = vmatprep.subr.mxu0 0.0
        %3641 = vmatpush1.msra.mxu0 0.0
        %3642 = vmatprep.subr.mxu0 0.0
        %3643 = vmatpush1.msra.mxu0 0.0
        %3644 = vmatprep.subr.mxu0 0.0
        %3645 = vmatpush1.msra.mxu0 %v3623
        %3646 = vmatprep.subr.mxu0 0.0
        %3647 = vmatpush1.msra.mxu0 %v3622
        %3648 = vmatprep.subr.mxu0 0.0
        %3649 = vmatpush1.msra.mxu0 %v3621
        %3650 = vmatprep.subr.mxu0 0.0
        %3651 = vmatpush1.msra.mxu0 %v3620
        %3652 = vmatprep.subr.mxu0 0.0
        %3653 = vmatpush1.msra.mxu0 %v3619
        %3654 = vmatprep.subr.mxu0 0.0
        %3655 = vmatpush1.msra.mxu0 %v3618
        %3656 = vmatprep.subr.mxu0 0.0
        %3657 = vmatpush1.msra.mxu0 %v3617
        %3658 = vmatprep.subr.mxu0 0.0
        %3659 = vmatpush1.msra.mxu0 %v3616
        %3660 = vmatprep.subr.mxu0 0.0
        %3661 = vmatpush2.msra.mxu0 0.0
        %3662 = vmatprep.subr.mxu0 0.0
        %3663 = vmatpush2.msra.mxu0 0.0
        %3664 = vmatprep.subr.mxu0 0.0
        %3665 = vmatpush2.msra.mxu0 0.0
        %3666 = vmatprep.subr.mxu0 0.0
        %3667 = vmatpush2.msra.mxu0 0.0
        %3668 = vmatprep.subr.mxu0 0.0
        %3669 = vmatpush2.msra.mxu0 0.0
        %3670 = vmatprep.subr.mxu0 0.0
        %3671 = vmatpush2.msra.mxu0 0.0
        %3672 = vmatprep.subr.mxu0 0.0
        %3673 = vmatpush2.msra.mxu0 0.0
        %3674 = vmatprep.subr.mxu0 0.0
        %3675 = vmatpush2.msra.mxu0 0.0
        %3676 = vmatprep.subr.mxu0 0.0
        %3677 = vmatpush2.msra.mxu0 0.0
        %3678 = vmatprep.subr.mxu0 0.0
        %3679 = vmatpush2.msra.mxu0 0.0
        %3680 = vmatprep.subr.mxu0 0.0
        %3681 = vmatpush2.msra.mxu0 0.0
        %3682 = vmatprep.subr.mxu0 0.0
        %3683 = vmatpush2.msra.mxu0 0.0
        %3684 = vmatprep.subr.mxu0 0.0
        %3685 = vmatpush2.msra.mxu0 0.0
        %3686 = vmatprep.subr.mxu0 0.0
        %3687 = vmatpush2.msra.mxu0 0.0
        %3688 = vmatprep.subr.mxu0 0.0
        %3689 = vmatpush2.msra.mxu0 0.0
        %3690 = vmatprep.subr.mxu0 0.0
        %3691 = vmatpush2.msra.mxu0 0.0
        %3692 = vmatprep.mubr.f32.mxu0 0.0
        %3693 = vmatmul.mubr.f32.gmra.mxu0 %v3626
        %v3694 = vpop.f32.mrf.mxu0
        %v3695 = vadd.f32 %v3624, %v3694
        %v3696 = vpop.f32.mrf.mxu0
        %3697 = vdwg.mxu0
        %vm3698 = vcmask 32768
        %v3699 = vsel %vm3698, %v3695, -inf
        %3700 = vmax.xlane.f32.xlu0 %v3699
        %v3701 = vpop.xlane.xlu0 %3700
        %v3702 = vsub.f32 %v3695, %v3701
        %v3703 = vmul.f32 %v3702, 1.442695
        %v3704 = vpow.pop %v3703
        %v3705 = vsel %vm3698, %v3704, 0.0
        %3706 = vadd.xlane.f32.xlu0 %v3705
        %v3707 = vpop.xlane.xlu0 %3706
        %v3708 = vrcp.pop %v3707
        %v3709 = vmul.f32 %v3704, %v3708
        %3710 = vst.msk [vmem:[%s645] sm:$0x1] %vm3698, %v3709
        %p3711 = scmp.lt.s32.totalorder %s37, 1
        %s3712 = scalar_select %p3711, %s37, 1
        %s3713 = smul.addr %s3712, 4
        %s3714 = scalar_lea.vmem %s14, %s3713
        %p3715 = scmp.lt.s32.totalorder %s37, 1
        %s3716 = scalar_select %p3715, %s37, 1
        %s3717 = smul.addr %s3716, 16
        %s3718 = scalar_lea.vmem %s15, %s3717
        %s3719 = sand.u32 %s396, 1
        %s3720 = scalar_lea.sflag [#allocation5], %s3719
        %s3721 = sand.u32 %s396, 1
        %s3722 = scalar_lea.vmem [#allocation19], %s3721
        // Predicated region
        $region113: #{socre_net_forward.1} parent=75 // pred_check
          %p3723 = pneg %p354
        $region114: #{socre_net_forward.1} parent=75 // pred_check_branch
          %3725 = sbr.rel (%p3723) target = $region116
        $region115: #{socre_net_forward.1} parent=75 // pred_region
          _
        $region116: #{socre_net_forward.1} parent=75 // pred_fallthru
          _
        // Predicated region
        $region117: #{socre_net_forward.1} parent=75 // pred_check
          %p3726 = pneg %p380
        $region118: #{socre_net_forward.1} parent=75 // pred_check_branch
          %3728 = sbr.rel (%p3726) target = $region120
        $region119: #{socre_net_forward.1} parent=75 // pred_region
          _
        $region120: #{socre_net_forward.1} parent=75 // pred_fallthru
          _
        // Predicated region
        $region121: #{socre_net_forward.1} parent=75 // pred_check
          %p3729 = pneg %p406
        $region122: #{socre_net_forward.1} parent=75 // pred_check_branch
          %3731 = sbr.rel (%p3729) target = $region124
        $region123: #{socre_net_forward.1} parent=75 // pred_region
          %s3733 = ssub.s32 16, 16
          %3734 = vsyncadd %s3720, %s3733
          %s3735 = smul.addr %s37, 16
          %s3736 = scalar_lea.hbm %s16, %s3735
          %s3738 = sshll.u32 %s3722, 4
          %s3739 = int_to_ptr.vmem [resolvable:$true] %s3738
          %3741 = dma.vmem_to_hbm [thread:$0]  %s3739, 16, %s3736, %s3720
        $region124: #{socre_net_forward.1} parent=75 // pred_fallthru
          _
      $region76: #{socre_net_forward.1} parent=5 // pred_fallthru
        _
      %p3742 = scmp.le.s32.totalorder 2, %s32
      // Predicated region
      $region125: #{socre_net_forward.1} parent=5 // pred_check
        %p3743 = pneg %p3742
      $region126: #{socre_net_forward.1} parent=5 // pred_check_branch
        %3745 = sbr.rel (%p3743) target = $region128
      $region127: #{socre_net_forward.1} parent=5 // pred_region
        %s3746 = ssub.s32 %s32, 2
        // Predicated region
        $region129: #{socre_net_forward.1} parent=127 // pred_check
          %p3747 = pneg %p360
        $region130: #{socre_net_forward.1} parent=127 // pred_check_branch
          %3749 = sbr.rel (%p3747) target = $region132
        $region131: #{socre_net_forward.1} parent=127 // pred_region
          %p3750 = scmp.lt.s32.totalorder %s38, 1
          %s3751 = scalar_select %p3750, %s38, 1
          %s3752 = smul.addr %s3751, 4
          %s3753 = scalar_lea.vmem %s14, %s3752
        $region132: #{socre_net_forward.1} parent=127 // pred_fallthru
          _
        // Predicated region
        $region133: #{socre_net_forward.1} parent=127 // pred_check
          %p3754 = pneg %p386
        $region134: #{socre_net_forward.1} parent=127 // pred_check_branch
          %3756 = sbr.rel (%p3754) target = $region136
        $region135: #{socre_net_forward.1} parent=127 // pred_region
          %p3757 = scmp.lt.s32.totalorder %s38, 1
          %s3758 = scalar_select %p3757, %s38, 1
          %s3759 = smul.addr %s3758, 16
          %s3760 = scalar_lea.vmem %s15, %s3759
        $region136: #{socre_net_forward.1} parent=127 // pred_fallthru
          _
        // Predicated region
        $region137: #{socre_net_forward.1} parent=127 // pred_check
          %p3761 = pneg %p412
        $region138: #{socre_net_forward.1} parent=127 // pred_check_branch
          %3763 = sbr.rel (%p3761) target = $region140
        $region139: #{socre_net_forward.1} parent=127 // pred_region
          %s3764 = sand.u32 %s397, 1
          %s3765 = scalar_lea.sflag [#allocation5], %s3764
          %s3766 = sand.u32 %s397, 1
          %s3767 = scalar_lea.vmem [#allocation19], %s3766
          %3768 = dma.done %s3765, 16
        $region140: #{socre_net_forward.1} parent=127 // pred_fallthru
          _
      $region128: #{socre_net_forward.1} parent=5 // pred_fallthru
        _
    $region6: #{socre_net_forward.1} parent=1 // loop_footer
      %s36 = sadd.s32 1, %s32
    $region7: #{socre_net_forward.1} parent=1 // loop_footer_branch
      %31 = sbr.rel target = $region3
    $region8: #{socre_net_forward.1} parent=1 // loop_exit
      _
    %3769 = vsyncpa [#allocation4], 1
    %s3770 = scalar_lea.sflag [#allocation4], 1
    %3771 = vsyncpa %s3770, 1
    %3772 = vsyncpa [#allocation8], 1
    %3773 = vsyncpa [#allocation12], 1
    %3774 = vsyncpa [#allocation15], 1
    %3775 = vsyncpa [#allocation18], 1
    %3776 = vsyncpa [#allocation5], 1
    %s3777 = scalar_lea.sflag [#allocation5], 1
    %3778 = vsyncpa %s3777, 1
    %3779 = vsyncpa [#allocation6], 1
    %s3780 = scalar_lea.sflag [#allocation6], 1
    %3781 = vsyncpa %s3780, 1

</llo_original>
